<compile_context>
chip_gen: v7x
topology: tpu7x:2x2x1
jax: 0.10.0
libtpu: 0.0.40
codegen_flags: <defaults>
</compile_context>

<pallas_src>
import math

import jax
import jax.numpy as jnp
from jax.experimental import pallas as pl
from jax.experimental.pallas import tpu as pltpu

# ----------------------------- configuration -------------------------------
SEQ_LEN = 16
LABEL_LEN = 8
PRED_LEN = 8
ENC_IN = 4
DEC_IN = 4
C_OUT = 4
D_MODEL = 16
N_HEADS = 8            # FourierBlock weights are hard-coded to 8 head groups
HEAD_DIM = D_MODEL // N_HEADS
D_FF = 32
E_LAYERS = 2
D_LAYERS = 1
MOVING_AVG = 5
MODES = 4              # mode_select_method = 'low' -> index = range(MODES)
MARK_DIM = 4           # embed='timeF', freq='h'
DEC_LEN = LABEL_LEN + PRED_LEN

assert E_LAYERS == 2 and D_LAYERS == 1
assert DEC_LEN == SEQ_LEN            # both sequence lengths are 16 here

VMEM = pltpu.MemorySpace.VMEM
_VSPEC = pl.BlockSpec(memory_space=VMEM)
_PK = 2 * MODES * D_MODEL            # 128 packed (re|im) low-mode coefficients


# =========================== Pallas kernels ================================
def _fed_part1_kernel(
    # inputs --------------------------------------------------------------
    u_ref, pe_ref,
    enc_emb_ref, dec_emb_ref, trinit_w_ref,
    dec_w_ref, lnavg_ref, tavg_ref,
    enc_g_ref, enc_b_ref,
    sa_w0_ref, sa_b0_ref, ff1_0_ref, ff2_0_ref,
    sa_w1_ref, sa_b1_ref, ff1_1_ref, ff2_1_ref,
    dsa_w_ref, dsa_b_ref,
    qf_w_ref, qf_b_ref, kf_w_ref, kf_b_ref,
    # outputs -------------------------------------------------------------
    qpk_ref, kpk_ref, x1_ref, trend1_ref, trinit_ref,
):
    """Embeddings + 2 encoder layers + encoder norm + decoder embedding +
    decoder self-attention + decomp1, and the packed Fourier coefficients of the
    cross-attention Q/K.  All activations are [B, 256] (time-major, channel-minor)."""
    f32 = jnp.float32
    dot = lambda a, b: jnp.dot(a, b, preferred_element_type=f32)

    u = u_ref[...]                       # [B, 192] = [x_enc | x_mark_enc | x_mark_dec]
    pe = pe_ref[...]                     # [1, 256]
    dec_w = dec_w_ref[...]               # [256, 256]  moving-average decomposition map
    lnavg = lnavg_ref[...]               # [256, 256]  per-time channel-mean broadcast

    def decomp(h):                       # series_decomp: (seasonal, trend)
        mean = dot(h, dec_w)
        return h - mean, mean

    def enc_layer(h, sa_w, sa_b, ff1, ff2):
        h = h + dot(h, sa_w) + sa_b      # x + FourierBlock self-attention (fully folded)
        h, _ = decomp(h)
        y = dot(jnp.maximum(dot(h, ff1), 0.0), ff2)
        h, _ = decomp(h + y)
        return h

    # ------------------------------ encoder -------------------------------
    enc_h = dot(u, enc_emb_ref[...]) + pe
    enc_h = enc_layer(enc_h, sa_w0_ref[...], sa_b0_ref[...], ff1_0_ref[...], ff2_0_ref[...])
    enc_h = enc_layer(enc_h, sa_w1_ref[...], sa_b1_ref[...], ff1_1_ref[...], ff2_1_ref[...])

    # my_Layernorm (LayerNorm + time-mean subtraction)
    mu = dot(enc_h, lnavg)
    xc = enc_h - mu
    var = dot(xc * xc, lnavg)
    xhat = xc * jax.lax.rsqrt(var + 1e-5) * enc_g_ref[...] + enc_b_ref[...]
    enc_out = xhat - dot(xhat, tavg_ref[...])

    # ------------------------------ decoder front --------------------------
    dec_h = dot(u, dec_emb_ref[...]) + pe            # embedding of (seasonal_init, x_mark_dec)
    x = dec_h + dot(dec_h, dsa_w_ref[...]) + dsa_b_ref[...]   # + Fourier self-attention
    x1, trend1 = decomp(x)

    # packed low-mode rFFT coefficients of Q (from x1) and K (from enc_out)
    qpk_ref[...] = dot(x1, qf_w_ref[...]) + qf_b_ref[...]
    kpk_ref[...] = dot(enc_out, kf_w_ref[...]) + kf_b_ref[...]
    x1_ref[...] = x1
    trend1_ref[...] = trend1
    trinit_ref[...] = dot(u, trinit_w_ref[...])      # trend_init (label trend + mean repeat)


def _fed_part2_kernel(
    # inputs --------------------------------------------------------------
    vpk_ref, x1_ref, trend1_ref, trinit_ref,
    cmix_w_ref, cmix_b_ref,
    dec_w_ref, lnavg_ref, tavg_ref,
    ff1_ref, ff2_ref, trconv_ref,
    dec_g_ref, dec_b_ref,
    proj_w_ref, proj_b_ref,
    # output --------------------------------------------------------------
    out_ref,
):
    """Rest of the decoder layer (cross-attention output path, decomp2/3, FF, trend conv),
    decoder norm, final projection and trend + seasonal combination."""
    f32 = jnp.float32
    dot = lambda a, b: jnp.dot(a, b, preferred_element_type=f32)

    dec_w = dec_w_ref[...]
    lnavg = lnavg_ref[...]

    x1 = x1_ref[...]
    # cross-attention: packed (re|im) mode values -> mode mixing -> irFFT -> view -> out-proj
    x = x1 + dot(vpk_ref[...], cmix_w_ref[...]) + cmix_b_ref[...]
    trend2 = dot(x, dec_w)
    x2 = x - trend2
    y = dot(jnp.maximum(dot(x2, ff1_ref[...]), 0.0), ff2_ref[...])
    xy = x2 + y
    trend3 = dot(xy, dec_w)
    x3 = xy - trend3

    residual_trend = dot(trend1_ref[...] + trend2 + trend3, trconv_ref[...])   # [B, 64]
    trend = trinit_ref[...] + residual_trend

    # my_Layernorm on the seasonal stream
    mu = dot(x3, lnavg)
    xc = x3 - mu
    var = dot(xc * xc, lnavg)
    xhat = xc * jax.lax.rsqrt(var + 1e-5) * dec_g_ref[...] + dec_b_ref[...]
    xn = xhat - dot(xhat, tavg_ref[...])

    seasonal = dot(xn, proj_w_ref[...]) + proj_b_ref[...]                       # [B, 64]
    out_ref[...] = trend + seasonal


# ====================== tiny XLA glue (cross-attention scores) =============
def _cross_frequency_glue(qpk, kpk):
    """FourierCrossAttention score einsum + complex tanh + value application.
    Tensors are tiny ([B, 8, 4, 4]); needs sin/cos/sinh/cosh so it stays in XLA
    between the two Pallas kernels.  Packed layout: j = m*2*D + r*D + h*E + e."""
    B = qpk.shape[0]
    q = qpk.reshape(B, MODES, 2, N_HEADS, HEAD_DIM)
    k = kpk.reshape(B, MODES, 2, N_HEADS, HEAD_DIM)
    qre, qim = q[:, :, 0], q[:, :, 1]
    kre, kim = k[:, :, 0], k[:, :, 1]
    # xqk_ft = einsum("bhex,bhey->bhxy", xq_ft, xk_ft)   (no conjugation)
    sre = jnp.einsum('bxhe,byhe->bhxy', qre, kre) - jnp.einsum('bxhe,byhe->bhxy', qim, kim)
    sim = jnp.einsum('bxhe,byhe->bhxy', qre, kim) + jnp.einsum('bxhe,byhe->bhxy', qim, kre)
    # complex tanh(x+iy) = (sinh 2x + i sin 2y) / (cosh 2x + cos 2y)
    xr = jnp.clip(sre, -40.0, 40.0)
    den = jnp.cosh(2.0 * xr) + jnp.cos(2.0 * sim)
    den = jnp.maximum(den, 1e-20)          # guard the genuine pole of complex tanh
    tre = jnp.sinh(2.0 * xr) / den
    tim = jnp.sin(2.0 * sim) / den
    # xqkv_ft = einsum("bhxy,bhey->bhex", tanh(xqk_ft), xk_ft)   (k_ft reused as values)
    vre = jnp.einsum('bhxy,byhe->bxhe', tre, kre) - jnp.einsum('bhxy,byhe->bxhe', tim, kim)
    vim = jnp.einsum('bhxy,byhe->bxhe', tre, kim) + jnp.einsum('bhxy,byhe->bxhe', tim, kre)
    return jnp.stack([vre, vim], axis=2).reshape(B, _PK)


# =============================== forward ====================================
def fedformer_forward(packed, x_enc, x_mark_enc, x_dec, x_mark_dec):
    del x_dec                              # unused by the reference forward
    B = x_enc.shape[0]
    f32 = jnp.float32
    u = jnp.concatenate(
        [x_enc.reshape(B, -1), x_mark_enc.reshape(B, -1), x_mark_dec.reshape(B, -1)],
        axis=1).astype(f32)                # [B, 192]

    p1_args = (
        u, packed["pe"],
        packed["enc_emb"], packed["dec_emb"], packed["trinit_w"],
        packed["dec_w"], packed["lnavg"], packed["tavg"],
        packed["enc_g"], packed["enc_b"],
        packed["enc0_sa_w"], packed["enc0_sa_b"], packed["enc0_ff1"], packed["enc0_ff2"],
        packed["enc1_sa_w"], packed["enc1_sa_b"], packed["enc1_ff1"], packed["enc1_ff2"],
        packed["dsa_w"], packed["dsa_b"],
        packed["qf_w"], packed["qf_b"], packed["kf_w"], packed["kf_b"],
    )
    qpk, kpk, x1, trend1, trinit = pl.pallas_call(
        _fed_part1_kernel,
        out_shape=(
            jax.ShapeDtypeStruct((B, _PK), f32),
            jax.ShapeDtypeStruct((B, _PK), f32),
            jax.ShapeDtypeStruct((B, DEC_LEN * D_MODEL), f32),
            jax.ShapeDtypeStruct((B, DEC_LEN * D_MODEL), f32),
            jax.ShapeDtypeStruct((B, DEC_LEN * C_OUT), f32),
        ),
        in_specs=[_VSPEC] * len(p1_args),
        out_specs=(_VSPEC,) * 5,
    )(*p1_args)

    vpk = _cross_frequency_glue(qpk, kpk)

    p2_args = (
        vpk, x1, trend1, trinit,
        packed["cmix_w"], packed["cmix_b"],
        packed["dec_w"], packed["lnavg"], packed["tavg"],
        packed["dec_ff1"], packed["dec_ff2"], packed["trconv_w"],
        packed["dec_g"], packed["dec_b"],
        packed["proj_w"], packed["proj_b"],
    )
    out_flat = pl.pallas_call(
        _fed_part2_kernel,
        out_shape=jax.ShapeDtypeStruct((B, DEC_LEN * C_OUT), f32),
        in_specs=[_VSPEC] * len(p2_args),
        out_specs=_VSPEC,
    )(*p2_args)

    dec_out = out_flat.reshape(B, DEC_LEN, C_OUT)
    return dec_out[:, -PRED_LEN:, :]


# =================== parameter folding (prep-time, pure JAX) ================
def positional_embedding(L, d_model):
    pos = jnp.arange(L, dtype=jnp.float32)[:, None]
    div = jnp.exp(jnp.arange(0, d_model, 2, dtype=jnp.float32)
                  * -(math.log(10000.0) / d_model))
    pe = jnp.zeros((L, d_model), jnp.float32)
    pe = pe.at[:, 0::2].set(jnp.sin(pos * div))
    pe = pe.at[:, 1::2].set(jnp.cos(pos * div))
    return pe[None]


def _moving_avg_matrix(L, k):
    """A[t, s]: edge-replicated k-tap moving average (AvgPool1d + replicate pad)."""
    half = (k - 1) // 2
    t = jnp.arange(L)
    A = jnp.zeros((L, L), jnp.float32)
    for d in range(-half, half + 1):
        A = A + jax.nn.one_hot(jnp.clip(t + d, 0, L - 1), L, dtype=jnp.float32)
    return A / float(k)


def _shift_mats(L):
    """P_k[t, s] = 1 iff s == (t + k - 1) mod L  (circular Conv1d, kernel=3, pad=1)."""
    t = jnp.arange(L)
    return [jax.nn.one_hot((t + (k - 1)) % L, L, dtype=jnp.float32) for k in range(3)]


def _fold_value_conv(wc, L):
    """Circular Conv1d(k=3, pad=1, bias=False), torch layout wc=[Cout, Cin, 3], as a
    [(L*Cin), (L*Cout)] matrix on (time, channel)-flattened data."""
    P = _shift_mats(L)
    out = jnp.zeros((L * wc.shape[1], L * wc.shape[0]), jnp.float32)
    for k in range(3):
        out = out + jnp.kron(P[k].T, wc[:, :, k].T)
    return out


def _dft_mats(L, M):
    t = jnp.arange(L, dtype=jnp.float32)[:, None]
    m = jnp.arange(M, dtype=jnp.float32)[None, :]
    ang = 2.0 * math.pi * t * m / L
    return jnp.cos(ang), jnp.sin(ang)        # C[t,m], S[t,m]


def _fold_self_attention(wq, bq, wr, wi, wo, bo, C, S, L):
    """Fold AutoCorrelationLayer(FourierBlock):
    q-projection -> rfft -> low modes -> complex per-head mixing -> irfft ->
    [B,H,E,L].view(B,L,-1) -> out-projection, into ONE affine map on [L*D] vectors."""
    H, E, _, M = wr.shape
    D = H * E
    a = jnp.array([1.0] + [2.0] * (M - 1), jnp.float32)       # irfft mode weights
    Ca, Sa = C * a[None, :], S * a[None, :]
    # q_h[t,h,e] -> (Yre, Yim)[h,o,m]
    KR = jnp.einsum('tm,heom->theom', C, wr) + jnp.einsum('tm,heom->theom', S, wi)
    KI = jnp.einsum('tm,heom->theom', C, wi) - jnp.einsum('tm,heom->theom', S, wr)
    # q_h[t,h,e] -> viewed output o_view[l'=h*E+o, tau]
    T = (jnp.einsum('theom,um->theou', KR, Ca)
         - jnp.einsum('theom,um->theou', KI, Sa)) / float(L)   # [L,H,E,E,L]
    wq_h, bq_h = wq.reshape(D, H, E), bq.reshape(H, E)
    Tx = jnp.einsum('che,theou->tchou', wq_h, T)               # x[t,c] -> o_view
    Tb = jnp.einsum('he,theou->hou', bq_h, T)                  # bq    -> o_view
    SA_W = jnp.einsum('tchou,uj->tchoj', Tx, wo).reshape(L * D, H * E * D)
    SA_b = jnp.einsum('hou,uj->hoj', Tb, wo).reshape(H * E * D) + jnp.tile(bo, L)
    return SA_W, SA_b.reshape(1, -1)


def _fold_cross_qk(w, b, C, S, L):
    """Fold projection + rfft + low-mode selection into a [L*D, M*2*H*E] matrix producing
    the packed (m, re/im, h, e) coefficients."""
    D = w.shape[0]
    H, E, M = N_HEADS, HEAD_DIM, C.shape[1]
    w_h, b_h = w.reshape(D, H, E), b.reshape(H, E)
    Qre = jnp.einsum('che,tm->tcmhe', w_h, C)
    Qim = -jnp.einsum('che,tm->tcmhe', w_h, S)
    QF = jnp.stack([Qre, Qim], axis=3).reshape(L * D, M * 2 * H * E)
    bre = jnp.einsum('he,m->mhe', b_h, jnp.sum(C, axis=0))
    bim = -jnp.einsum('he,m->mhe', b_h, jnp.sum(S, axis=0))
    QF_b = jnp.stack([bre, bim], axis=1).reshape(1, M * 2 * H * E)
    return QF, QF_b


def _fold_cross_out(wr, wi, wo, bo, C, S, L, scale):
    """Fold complex per-head mode mixing + /(in*out) scale + irfft + view + out-projection
    into a [M*2*H*E, L*D] matrix acting on the packed xqkv coefficients."""
    H, E, _, M = wr.shape
    D = H * E
    a = jnp.array([1.0] + [2.0] * (M - 1), jnp.float32)
    Ca, Sa = C * a[None, :], S * a[None, :]
    Mr0 = jnp.einsum('heom,um->mheou', wr, Ca) - jnp.einsum('heom,um->mheou', wi, Sa)
    Mr1 = -jnp.einsum('heom,um->mheou', wi, Ca) - jnp.einsum('heom,um->mheou', wr, Sa)
    Mmix = jnp.stack([Mr0, Mr1], axis=1) * (scale / float(L))   # [M,2,H,E,O,L]
    CM = jnp.einsum('mrheou,uj->mrheoj', Mmix, wo)              # fold out-projection weight
    CM_full = jnp.einsum('mrheoj,hg->mrhegoj', CM, jnp.eye(H, dtype=jnp.float32))
    CMIX_W = CM_full.reshape(M * 2 * H * E, H * E * D)
    CMIX_b = jnp.tile(bo, L).reshape(1, -1)
    return CMIX_W, CMIX_b


def prepare_packed(params):
    L, D, M = SEQ_LEN, D_MODEL, MODES
    f32 = jnp.float32
    C, S = _dft_mats(L, M)
    A = _moving_avg_matrix(L, MOVING_AVG)
    I_L = jnp.eye(L, dtype=f32)
    I_D = jnp.eye(D, dtype=f32)

    p = {}
    p["pe"] = positional_embedding(L, D).reshape(1, L * D)
    p["dec_w"] = jnp.kron(A.T, I_D)                                     # series_decomp mean
    p["lnavg"] = jnp.kron(I_L, jnp.full((D, D), 1.0 / D, f32))          # per-time ch. mean
    p["tavg"] = jnp.kron(jnp.full((L, L), 1.0 / L, f32), I_D)           # per-ch. time mean

    # embeddings act on u = [x_enc | x_mark_enc | x_mark_dec]  ([B, 192])
    zeros_mark = jnp.zeros((L * MARK_DIM, L * D), f32)
    enc_conv = _fold_value_conv(params["enc_emb"]["conv_w"], L)
    enc_temp = jnp.kron(I_L, params["enc_emb"]["temporal_w"])
    p["enc_emb"] = jnp.concatenate([enc_conv, enc_temp, zeros_mark], axis=0)

    # decoder value embedding consumes seasonal_init, itself a linear map of x_enc
    dec_conv = _fold_value_conv(params["dec_emb"]["conv_w"], L)
    dec_temp = jnp.kron(I_L, params["dec_emb"]["temporal_w"])
    season = jnp.concatenate([(I_L - A)[LABEL_LEN:], jnp.zeros((PRED_LEN, L), f32)], axis=0)
    dec_val = jnp.kron(season.T, jnp.eye(DEC_IN, dtype=f32)) @ dec_conv
    p["dec_emb"] = jnp.concatenate([dec_val, zeros_mark, dec_temp], axis=0)

    # trend_init = cat(trend(x_enc)[-label_len:], time-mean(x_enc) repeated pred_len times)
    atrend = jnp.concatenate([A[LABEL_LEN:], jnp.full((PRED_LEN, L), 1.0 / L, f32)], axis=0)
    trinit = jnp.kron(atrend.T, jnp.eye(C_OUT, dtype=f32))
    p["trinit_w"] = jnp.concatenate(
        [trinit, jnp.zeros((2 * L * MARK_DIM, L * C_OUT), f32)], axis=0)

    p["enc_g"] = jnp.tile(params["enc_norm_g"], L).reshape(1, -1)
    p["enc_b"] = jnp.tile(params["enc_norm_b"], L).reshape(1, -1)
    p["dec_g"] = jnp.tile(params["dec_norm_g"], L).reshape(1, -1)
    p["dec_b"] = jnp.tile(params["dec_norm_b"], L).reshape(1, -1)

    for i, lp in enumerate(params["enc_layers"]):
        sa_w, sa_b = _fold_self_attention(
            lp["attn"]["wq"], lp["attn"]["bq"], lp["fb_wr"], lp["fb_wi"],
            lp["attn"]["wo"], lp["attn"]["bo"], C, S, L)
        p[f"enc{i}_sa_w"], p[f"enc{i}_sa_b"] = sa_w, sa_b
        p[f"enc{i}_ff1"] = jnp.kron(I_L, lp["ff_w1"])
        p[f"enc{i}_ff2"] = jnp.kron(I_L, lp["ff_w2"])

    dl = params["dec_layers"][0]
    p["dsa_w"], p["dsa_b"] = _fold_self_attention(
        dl["self_attn"]["wq"], dl["self_attn"]["bq"], dl["self_fb_wr"], dl["self_fb_wi"],
        dl["self_attn"]["wo"], dl["self_attn"]["bo"], C, S, L)
    p["qf_w"], p["qf_b"] = _fold_cross_qk(dl["cross_attn"]["wq"], dl["cross_attn"]["bq"], C, S, L)
    p["kf_w"], p["kf_b"] = _fold_cross_qk(dl["cross_attn"]["wk"], dl["cross_attn"]["bk"], C, S, L)
    p["cmix_w"], p["cmix_b"] = _fold_cross_out(
        dl["cross_wr"], dl["cross_wi"], dl["cross_attn"]["wo"], dl["cross_attn"]["bo"],
        C, S, L, 1.0 / (D_MODEL * D_MODEL))
    p["dec_ff1"] = jnp.kron(I_L, dl["ff_w1"])
    p["dec_ff2"] = jnp.kron(I_L, dl["ff_w2"])
    p["trconv_w"] = _fold_value_conv(dl["trend_conv_w"], L)
    p["proj_w"] = jnp.kron(I_L, params["proj_w"])
    p["proj_b"] = jnp.tile(params["proj_b"], L).reshape(1, -1)
    return p


# ----------------------------- parameter init --------------------------------
def init_params(key):
    kiter = iter(jax.random.split(key, 128))
    nk = lambda: next(kiter)

    def linear(din, dout, bias=True):
        w = 0.02 * jax.random.normal(nk(), (din, dout), jnp.float32)
        b = 0.02 * jax.random.normal(nk(), (dout,), jnp.float32) if bias else None
        return w, b

    def attn_proj():
        wq, bq = linear(D_MODEL, D_MODEL)
        wk, bk = linear(D_MODEL, D_MODEL)
        wv, bv = linear(D_MODEL, D_MODEL)   # value projection exists but FourierBlock /
        wo, bo = linear(D_MODEL, D_MODEL)   # FourierCrossAttention never use it
        return {"wq": wq, "bq": bq, "wk": wk, "bk": bk,
                "wv": wv, "bv": bv, "wo": wo, "bo": bo}

    def fourier_w(n_modes):
        scale = 1.0 / (D_MODEL * D_MODEL)
        wr = scale * jax.random.uniform(nk(), (N_HEADS, HEAD_DIM, HEAD_DIM, n_modes), jnp.float32)
        wi = scale * jax.random.uniform(nk(), (N_HEADS, HEAD_DIM, HEAD_DIM, n_modes), jnp.float32)
        return wr, wi

    def embedding(c_in):
        conv_w = 0.1 * jax.random.normal(nk(), (D_MODEL, c_in, 3), jnp.float32)
        temporal_w, _ = linear(MARK_DIM, D_MODEL, bias=False)
        return {"conv_w": conv_w, "temporal_w": temporal_w}

    params = {"enc_emb": embedding(ENC_IN), "dec_emb": embedding(DEC_IN)}

    enc_layers = []
    for _ in range(E_LAYERS):
        wr, wi = fourier_w(MODES)
        w1, _ = linear(D_MODEL, D_FF, bias=False)
        w2, _ = linear(D_FF, D_MODEL, bias=False)
        enc_layers.append({"attn": attn_proj(), "fb_wr": wr, "fb_wi": wi,
                           "ff_w1": w1, "ff_w2": w2})
    params["enc_layers"] = enc_layers
    params["enc_norm_g"] = jnp.ones((D_MODEL,), jnp.float32)
    params["enc_norm_b"] = jnp.zeros((D_MODEL,), jnp.float32)

    dec_layers = []
    for _ in range(D_LAYERS):
        s_wr, s_wi = fourier_w(MODES)
        c_wr, c_wi = fourier_w(MODES)
        w1, _ = linear(D_MODEL, D_FF, bias=False)
        w2, _ = linear(D_FF, D_MODEL, bias=False)
        trend_conv_w = 0.1 * jax.random.normal(nk(), (C_OUT, D_MODEL, 3), jnp.float32)
        dec_layers.append({"self_attn": attn_proj(),
                           "self_fb_wr": s_wr, "self_fb_wi": s_wi,
                           "cross_attn": attn_proj(),
                           "cross_wr": c_wr, "cross_wi": c_wi,
                           "ff_w1": w1, "ff_w2": w2,
                           "trend_conv_w": trend_conv_w})
    params["dec_layers"] = dec_layers
    params["dec_norm_g"] = jnp.ones((D_MODEL,), jnp.float32)
    params["dec_norm_b"] = jnp.zeros((D_MODEL,), jnp.float32)

    proj_w, proj_b = linear(D_MODEL, C_OUT)
    params["proj_w"] = proj_w
    params["proj_b"] = proj_b
    return params


# ------------------------------------ main ------------------------------------
if __name__ == "__main__":
    key = jax.random.PRNGKey(0)
    kp, k1, k2, k3, k4 = jax.random.split(key, 5)
    params = init_params(kp)
    packed = prepare_packed(params)

    B = 2
    x_enc = jax.random.normal(k1, (B, SEQ_LEN, ENC_IN), jnp.float32)
    x_mark_enc = jax.random.normal(k2, (B, SEQ_LEN, MARK_DIM), jnp.float32)
    x_dec = jax.random.normal(k3, (B, DEC_LEN, DEC_IN), jnp.float32)
    x_mark_dec = jax.random.normal(k4, (B, DEC_LEN, MARK_DIM), jnp.float32)

    fwd = jax.jit(fedformer_forward)
    out = fwd(packed, x_enc, x_mark_enc, x_dec, x_mark_dec)
    out = jax.block_until_ready(out)

    assert out.shape == (B, PRED_LEN, C_OUT), out.shape
    assert bool(jnp.all(jnp.isfinite(out)))
    print("KERNEL_OK")
</pallas_src>

<mosaic_0001>
module attributes {stable_mosaic.version = 11 : i64} {
  func.func @_fed_part1_kernel(%arg0: memref<2x192xf32, #tpu.memory_space<vmem>>, %arg1: memref<1x256xf32, #tpu.memory_space<vmem>>, %arg2: memref<192x256xf32, #tpu.memory_space<vmem>>, %arg3: memref<192x256xf32, #tpu.memory_space<vmem>>, %arg4: memref<192x64xf32, #tpu.memory_space<vmem>>, %arg5: memref<256x256xf32, #tpu.memory_space<vmem>>, %arg6: memref<256x256xf32, #tpu.memory_space<vmem>>, %arg7: memref<256x256xf32, #tpu.memory_space<vmem>>, %arg8: memref<1x256xf32, #tpu.memory_space<vmem>>, %arg9: memref<1x256xf32, #tpu.memory_space<vmem>>, %arg10: memref<256x256xf32, #tpu.memory_space<vmem>>, %arg11: memref<1x256xf32, #tpu.memory_space<vmem>>, %arg12: memref<256x512xf32, #tpu.memory_space<vmem>>, %arg13: memref<512x256xf32, #tpu.memory_space<vmem>>, %arg14: memref<256x256xf32, #tpu.memory_space<vmem>>, %arg15: memref<1x256xf32, #tpu.memory_space<vmem>>, %arg16: memref<256x512xf32, #tpu.memory_space<vmem>>, %arg17: memref<512x256xf32, #tpu.memory_space<vmem>>, %arg18: memref<256x256xf32, #tpu.memory_space<vmem>>, %arg19: memref<1x256xf32, #tpu.memory_space<vmem>>, %arg20: memref<256x128xf32, #tpu.memory_space<vmem>>, %arg21: memref<1x128xf32, #tpu.memory_space<vmem>>, %arg22: memref<256x128xf32, #tpu.memory_space<vmem>>, %arg23: memref<1x128xf32, #tpu.memory_space<vmem>>, %arg24: memref<2x128xf32, #tpu.memory_space<vmem>>, %arg25: memref<2x128xf32, #tpu.memory_space<vmem>>, %arg26: memref<2x256xf32, #tpu.memory_space<vmem>>, %arg27: memref<2x256xf32, #tpu.memory_space<vmem>>, %arg28: memref<2x64xf32, #tpu.memory_space<vmem>>) attributes {dimension_semantics = [], scalar_prefetch = 0 : i64, scratch_operands = 0 : i64, tpu.core_type = #tpu.core_type<tc>} {
    %c0 = arith.constant 0 : index
    %c0_0 = arith.constant 0 : index
    %0 = vector.load %arg0[%c0, %c0_0] : memref<2x192xf32, #tpu.memory_space<vmem>>, vector<2x192xf32>
    %c0_1 = arith.constant 0 : index
    %c0_2 = arith.constant 0 : index
    %1 = vector.load %arg1[%c0_1, %c0_2] : memref<1x256xf32, #tpu.memory_space<vmem>>, vector<1x256xf32>
    %c0_3 = arith.constant 0 : index
    %c0_4 = arith.constant 0 : index
    %2 = vector.load %arg5[%c0_3, %c0_4] : memref<256x256xf32, #tpu.memory_space<vmem>>, vector<256x256xf32>
    %c0_5 = arith.constant 0 : index
    %c0_6 = arith.constant 0 : index
    %3 = vector.load %arg6[%c0_5, %c0_6] : memref<256x256xf32, #tpu.memory_space<vmem>>, vector<256x256xf32>
    %c0_7 = arith.constant 0 : index
    %c0_8 = arith.constant 0 : index
    %4 = vector.load %arg2[%c0_7, %c0_8] : memref<192x256xf32, #tpu.memory_space<vmem>>, vector<192x256xf32>
    %cst = arith.constant dense<0.000000e+00> : vector<2x256xf32>
    %5 = tpu.matmul %0, %4, %cst {dimension_numbers = #tpu.dot_dimension_numbers<[1], [0], [0], [1], [0, 0, 1, 1], [], []>} : vector<2x192xf32>, vector<192x256xf32>, vector<2x256xf32> -> vector<2x256xf32>
    %6 = vector.broadcast %1 : vector<1x256xf32> to vector<2x256xf32>
    %7 = arith.addf %5, %6 : vector<2x256xf32>
    %c0_9 = arith.constant 0 : index
    %c0_10 = arith.constant 0 : index
    %8 = vector.load %arg10[%c0_9, %c0_10] : memref<256x256xf32, #tpu.memory_space<vmem>>, vector<256x256xf32>
    %c0_11 = arith.constant 0 : index
    %c0_12 = arith.constant 0 : index
    %9 = vector.load %arg11[%c0_11, %c0_12] : memref<1x256xf32, #tpu.memory_space<vmem>>, vector<1x256xf32>
    %c0_13 = arith.constant 0 : index
    %c0_14 = arith.constant 0 : index
    %10 = vector.load %arg12[%c0_13, %c0_14] : memref<256x512xf32, #tpu.memory_space<vmem>>, vector<256x512xf32>
    %c0_15 = arith.constant 0 : index
    %c0_16 = arith.constant 0 : index
    %11 = vector.load %arg13[%c0_15, %c0_16] : memref<512x256xf32, #tpu.memory_space<vmem>>, vector<512x256xf32>
    %cst_17 = arith.constant dense<0.000000e+00> : vector<2x256xf32>
    %12 = tpu.matmul %7, %8, %cst_17 {dimension_numbers = #tpu.dot_dimension_numbers<[1], [0], [0], [1], [0, 0, 1, 1], [], []>} : vector<2x256xf32>, vector<256x256xf32>, vector<2x256xf32> -> vector<2x256xf32>
    %13 = arith.addf %7, %12 : vector<2x256xf32>
    %14 = vector.broadcast %9 : vector<1x256xf32> to vector<2x256xf32>
    %15 = arith.addf %13, %14 : vector<2x256xf32>
    %cst_18 = arith.constant dense<0.000000e+00> : vector<2x256xf32>
    %16 = tpu.matmul %15, %2, %cst_18 {dimension_numbers = #tpu.dot_dimension_numbers<[1], [0], [0], [1], [0, 0, 1, 1], [], []>} : vector<2x256xf32>, vector<256x256xf32>, vector<2x256xf32> -> vector<2x256xf32>
    %17 = arith.subf %15, %16 : vector<2x256xf32>
    %cst_19 = arith.constant dense<0.000000e+00> : vector<2x512xf32>
    %18 = tpu.matmul %17, %10, %cst_19 {dimension_numbers = #tpu.dot_dimension_numbers<[1], [0], [0], [1], [0, 0, 1, 1], [], []>} : vector<2x256xf32>, vector<256x512xf32>, vector<2x512xf32> -> vector<2x512xf32>
    %cst_20 = arith.constant 0.000000e+00 : f32
    %19 = vector.broadcast %cst_20 : f32 to vector<2x512xf32>
    %20 = arith.maximumf %18, %19 : vector<2x512xf32>
    %cst_21 = arith.constant dense<0.000000e+00> : vector<2x256xf32>
    %21 = tpu.matmul %20, %11, %cst_21 {dimension_numbers = #tpu.dot_dimension_numbers<[1], [0], [0], [1], [0, 0, 1, 1], [], []>} : vector<2x512xf32>, vector<512x256xf32>, vector<2x256xf32> -> vector<2x256xf32>
    %22 = arith.addf %17, %21 : vector<2x256xf32>
    %cst_22 = arith.constant dense<0.000000e+00> : vector<2x256xf32>
    %23 = tpu.matmul %22, %2, %cst_22 {dimension_numbers = #tpu.dot_dimension_numbers<[1], [0], [0], [1], [0, 0, 1, 1], [], []>} : vector<2x256xf32>, vector<256x256xf32>, vector<2x256xf32> -> vector<2x256xf32>
    %24 = arith.subf %22, %23 : vector<2x256xf32>
    %c0_23 = arith.constant 0 : index
    %c0_24 = arith.constant 0 : index
    %25 = vector.load %arg14[%c0_23, %c0_24] : memref<256x256xf32, #tpu.memory_space<vmem>>, vector<256x256xf32>
    %c0_25 = arith.constant 0 : index
    %c0_26 = arith.constant 0 : index
    %26 = vector.load %arg15[%c0_25, %c0_26] : memref<1x256xf32, #tpu.memory_space<vmem>>, vector<1x256xf32>
    %c0_27 = arith.constant 0 : index
    %c0_28 = arith.constant 0 : index
    %27 = vector.load %arg16[%c0_27, %c0_28] : memref<256x512xf32, #tpu.memory_space<vmem>>, vector<256x512xf32>
    %c0_29 = arith.constant 0 : index
    %c0_30 = arith.constant 0 : index
    %28 = vector.load %arg17[%c0_29, %c0_30] : memref<512x256xf32, #tpu.memory_space<vmem>>, vector<512x256xf32>
    %cst_31 = arith.constant dense<0.000000e+00> : vector<2x256xf32>
    %29 = tpu.matmul %24, %25, %cst_31 {dimension_numbers = #tpu.dot_dimension_numbers<[1], [0], [0], [1], [0, 0, 1, 1], [], []>} : vector<2x256xf32>, vector<256x256xf32>, vector<2x256xf32> -> vector<2x256xf32>
    %30 = arith.addf %24, %29 : vector<2x256xf32>
    %31 = vector.broadcast %26 : vector<1x256xf32> to vector<2x256xf32>
    %32 = arith.addf %30, %31 : vector<2x256xf32>
    %cst_32 = arith.constant dense<0.000000e+00> : vector<2x256xf32>
    %33 = tpu.matmul %32, %2, %cst_32 {dimension_numbers = #tpu.dot_dimension_numbers<[1], [0], [0], [1], [0, 0, 1, 1], [], []>} : vector<2x256xf32>, vector<256x256xf32>, vector<2x256xf32> -> vector<2x256xf32>
    %34 = arith.subf %32, %33 : vector<2x256xf32>
    %cst_33 = arith.constant dense<0.000000e+00> : vector<2x512xf32>
    %35 = tpu.matmul %34, %27, %cst_33 {dimension_numbers = #tpu.dot_dimension_numbers<[1], [0], [0], [1], [0, 0, 1, 1], [], []>} : vector<2x256xf32>, vector<256x512xf32>, vector<2x512xf32> -> vector<2x512xf32>
    %cst_34 = arith.constant 0.000000e+00 : f32
    %36 = vector.broadcast %cst_34 : f32 to vector<2x512xf32>
    %37 = arith.maximumf %35, %36 : vector<2x512xf32>
    %cst_35 = arith.constant dense<0.000000e+00> : vector<2x256xf32>
    %38 = tpu.matmul %37, %28, %cst_35 {dimension_numbers = #tpu.dot_dimension_numbers<[1], [0], [0], [1], [0, 0, 1, 1], [], []>} : vector<2x512xf32>, vector<512x256xf32>, vector<2x256xf32> -> vector<2x256xf32>
    %39 = arith.addf %34, %38 : vector<2x256xf32>
    %cst_36 = arith.constant dense<0.000000e+00> : vector<2x256xf32>
    %40 = tpu.matmul %39, %2, %cst_36 {dimension_numbers = #tpu.dot_dimension_numbers<[1], [0], [0], [1], [0, 0, 1, 1], [], []>} : vector<2x256xf32>, vector<256x256xf32>, vector<2x256xf32> -> vector<2x256xf32>
    %41 = arith.subf %39, %40 : vector<2x256xf32>
    %cst_37 = arith.constant dense<0.000000e+00> : vector<2x256xf32>
    %42 = tpu.matmul %41, %3, %cst_37 {dimension_numbers = #tpu.dot_dimension_numbers<[1], [0], [0], [1], [0, 0, 1, 1], [], []>} : vector<2x256xf32>, vector<256x256xf32>, vector<2x256xf32> -> vector<2x256xf32>
    %43 = arith.subf %41, %42 : vector<2x256xf32>
    %44 = arith.mulf %43, %43 : vector<2x256xf32>
    %cst_38 = arith.constant dense<0.000000e+00> : vector<2x256xf32>
    %45 = tpu.matmul %44, %3, %cst_38 {dimension_numbers = #tpu.dot_dimension_numbers<[1], [0], [0], [1], [0, 0, 1, 1], [], []>} : vector<2x256xf32>, vector<256x256xf32>, vector<2x256xf32> -> vector<2x256xf32>
    %cst_39 = arith.constant 9.99999974E-6 : f32
    %46 = vector.broadcast %cst_39 : f32 to vector<2x256xf32>
    %47 = arith.addf %45, %46 : vector<2x256xf32>
    %48 = math.rsqrt %47 : vector<2x256xf32>
    %49 = arith.mulf %43, %48 : vector<2x256xf32>
    %c0_40 = arith.constant 0 : index
    %c0_41 = arith.constant 0 : index
    %50 = vector.load %arg8[%c0_40, %c0_41] : memref<1x256xf32, #tpu.memory_space<vmem>>, vector<1x256xf32>
    %51 = vector.broadcast %50 : vector<1x256xf32> to vector<2x256xf32>
    %52 = arith.mulf %49, %51 : vector<2x256xf32>
    %c0_42 = arith.constant 0 : index
    %c0_43 = arith.constant 0 : index
    %53 = vector.load %arg9[%c0_42, %c0_43] : memref<1x256xf32, #tpu.memory_space<vmem>>, vector<1x256xf32>
    %54 = vector.broadcast %53 : vector<1x256xf32> to vector<2x256xf32>
    %55 = arith.addf %52, %54 : vector<2x256xf32>
    %c0_44 = arith.constant 0 : index
    %c0_45 = arith.constant 0 : index
    %56 = vector.load %arg7[%c0_44, %c0_45] : memref<256x256xf32, #tpu.memory_space<vmem>>, vector<256x256xf32>
    %cst_46 = arith.constant dense<0.000000e+00> : vector<2x256xf32>
    %57 = tpu.matmul %55, %56, %cst_46 {dimension_numbers = #tpu.dot_dimension_numbers<[1], [0], [0], [1], [0, 0, 1, 1], [], []>} : vector<2x256xf32>, vector<256x256xf32>, vector<2x256xf32> -> vector<2x256xf32>
    %58 = arith.subf %55, %57 : vector<2x256xf32>
    %c0_47 = arith.constant 0 : index
    %c0_48 = arith.constant 0 : index
    %59 = vector.load %arg3[%c0_47, %c0_48] : memref<192x256xf32, #tpu.memory_space<vmem>>, vector<192x256xf32>
    %cst_49 = arith.constant dense<0.000000e+00> : vector<2x256xf32>
    %60 = tpu.matmul %0, %59, %cst_49 {dimension_numbers = #tpu.dot_dimension_numbers<[1], [0], [0], [1], [0, 0, 1, 1], [], []>} : vector<2x192xf32>, vector<192x256xf32>, vector<2x256xf32> -> vector<2x256xf32>
    %61 = vector.broadcast %1 : vector<1x256xf32> to vector<2x256xf32>
    %62 = arith.addf %60, %61 : vector<2x256xf32>
    %c0_50 = arith.constant 0 : index
    %c0_51 = arith.constant 0 : index
    %63 = vector.load %arg18[%c0_50, %c0_51] : memref<256x256xf32, #tpu.memory_space<vmem>>, vector<256x256xf32>
    %cst_52 = arith.constant dense<0.000000e+00> : vector<2x256xf32>
    %64 = tpu.matmul %62, %63, %cst_52 {dimension_numbers = #tpu.dot_dimension_numbers<[1], [0], [0], [1], [0, 0, 1, 1], [], []>} : vector<2x256xf32>, vector<256x256xf32>, vector<2x256xf32> -> vector<2x256xf32>
    %65 = arith.addf %62, %64 : vector<2x256xf32>
    %c0_53 = arith.constant 0 : index
    %c0_54 = arith.constant 0 : index
    %66 = vector.load %arg19[%c0_53, %c0_54] : memref<1x256xf32, #tpu.memory_space<vmem>>, vector<1x256xf32>
    %67 = vector.broadcast %66 : vector<1x256xf32> to vector<2x256xf32>
    %68 = arith.addf %65, %67 : vector<2x256xf32>
    %cst_55 = arith.constant dense<0.000000e+00> : vector<2x256xf32>
    %69 = tpu.matmul %68, %2, %cst_55 {dimension_numbers = #tpu.dot_dimension_numbers<[1], [0], [0], [1], [0, 0, 1, 1], [], []>} : vector<2x256xf32>, vector<256x256xf32>, vector<2x256xf32> -> vector<2x256xf32>
    %70 = arith.subf %68, %69 : vector<2x256xf32>
    %c0_56 = arith.constant 0 : index
    %c0_57 = arith.constant 0 : index
    %71 = vector.load %arg20[%c0_56, %c0_57] : memref<256x128xf32, #tpu.memory_space<vmem>>, vector<256x128xf32>
    %cst_58 = arith.constant dense<0.000000e+00> : vector<2x128xf32>
    %72 = tpu.matmul %70, %71, %cst_58 {dimension_numbers = #tpu.dot_dimension_numbers<[1], [0], [0], [1], [0, 0, 1, 1], [], []>} : vector<2x256xf32>, vector<256x128xf32>, vector<2x128xf32> -> vector<2x128xf32>
    %c0_59 = arith.constant 0 : index
    %c0_60 = arith.constant 0 : index
    %73 = vector.load %arg21[%c0_59, %c0_60] : memref<1x128xf32, #tpu.memory_space<vmem>>, vector<1x128xf32>
    %74 = vector.broadcast %73 : vector<1x128xf32> to vector<2x128xf32>
    %75 = arith.addf %72, %74 : vector<2x128xf32>
    %c0_61 = arith.constant 0 : index
    %c0_62 = arith.constant 0 : index
    %76 = vector.load %arg24[%c0_61, %c0_62] : memref<2x128xf32, #tpu.memory_space<vmem>>, vector<2x128xf32>
    tpu.vector_store %arg24[%c0_61, %c0_62], %75 {strides = array<i32>} : memref<2x128xf32, #tpu.memory_space<vmem>>, vector<2x128xf32>,
    %c0_63 = arith.constant 0 : index
    %c0_64 = arith.constant 0 : index
    %77 = vector.load %arg22[%c0_63, %c0_64] : memref<256x128xf32, #tpu.memory_space<vmem>>, vector<256x128xf32>
    %cst_65 = arith.constant dense<0.000000e+00> : vector<2x128xf32>
    %78 = tpu.matmul %58, %77, %cst_65 {dimension_numbers = #tpu.dot_dimension_numbers<[1], [0], [0], [1], [0, 0, 1, 1], [], []>} : vector<2x256xf32>, vector<256x128xf32>, vector<2x128xf32> -> vector<2x128xf32>
    %c0_66 = arith.constant 0 : index
    %c0_67 = arith.constant 0 : index
    %79 = vector.load %arg23[%c0_66, %c0_67] : memref<1x128xf32, #tpu.memory_space<vmem>>, vector<1x128xf32>
    %80 = vector.broadcast %79 : vector<1x128xf32> to vector<2x128xf32>
    %81 = arith.addf %78, %80 : vector<2x128xf32>
    %c0_68 = arith.constant 0 : index
    %c0_69 = arith.constant 0 : index
    %82 = vector.load %arg25[%c0_68, %c0_69] : memref<2x128xf32, #tpu.memory_space<vmem>>, vector<2x128xf32>
    tpu.vector_store %arg25[%c0_68, %c0_69], %81 {strides = array<i32>} : memref<2x128xf32, #tpu.memory_space<vmem>>, vector<2x128xf32>,
    %c0_70 = arith.constant 0 : index
    %c0_71 = arith.constant 0 : index
    %83 = vector.load %arg26[%c0_70, %c0_71] : memref<2x256xf32, #tpu.memory_space<vmem>>, vector<2x256xf32>
    tpu.vector_store %arg26[%c0_70, %c0_71], %70 {strides = array<i32>} : memref<2x256xf32, #tpu.memory_space<vmem>>, vector<2x256xf32>,
    %c0_72 = arith.constant 0 : index
    %c0_73 = arith.constant 0 : index
    %84 = vector.load %arg27[%c0_72, %c0_73] : memref<2x256xf32, #tpu.memory_space<vmem>>, vector<2x256xf32>
    tpu.vector_store %arg27[%c0_72, %c0_73], %69 {strides = array<i32>} : memref<2x256xf32, #tpu.memory_space<vmem>>, vector<2x256xf32>,
    %c0_74 = arith.constant 0 : index
    %c0_75 = arith.constant 0 : index
    %85 = vector.load %arg4[%c0_74, %c0_75] : memref<192x64xf32, #tpu.memory_space<vmem>>, vector<192x64xf32>
    %cst_76 = arith.constant dense<0.000000e+00> : vector<2x64xf32>
    %86 = tpu.matmul %0, %85, %cst_76 {dimension_numbers = #tpu.dot_dimension_numbers<[1], [0], [0], [1], [0, 0, 1, 1], [], []>} : vector<2x192xf32>, vector<192x64xf32>, vector<2x64xf32> -> vector<2x64xf32>
    %c0_77 = arith.constant 0 : index
    %c0_78 = arith.constant 0 : index
    %87 = vector.load %arg28[%c0_77, %c0_78] : memref<2x64xf32, #tpu.memory_space<vmem>>, vector<2x64xf32>
    tpu.vector_store %arg28[%c0_77, %c0_78], %86 {strides = array<i32>} : memref<2x64xf32, #tpu.memory_space<vmem>>, vector<2x64xf32>,
    return
  }
}

module attributes {stable_mosaic.version = 11 : i64} {
  func.func @_fed_part2_kernel(%arg0: memref<2x128xf32, #tpu.memory_space<vmem>>, %arg1: memref<2x256xf32, #tpu.memory_space<vmem>>, %arg2: memref<2x256xf32, #tpu.memory_space<vmem>>, %arg3: memref<2x64xf32, #tpu.memory_space<vmem>>, %arg4: memref<128x256xf32, #tpu.memory_space<vmem>>, %arg5: memref<1x256xf32, #tpu.memory_space<vmem>>, %arg6: memref<256x256xf32, #tpu.memory_space<vmem>>, %arg7: memref<256x256xf32, #tpu.memory_space<vmem>>, %arg8: memref<256x256xf32, #tpu.memory_space<vmem>>, %arg9: memref<256x512xf32, #tpu.memory_space<vmem>>, %arg10: memref<512x256xf32, #tpu.memory_space<vmem>>, %arg11: memref<256x64xf32, #tpu.memory_space<vmem>>, %arg12: memref<1x256xf32, #tpu.memory_space<vmem>>, %arg13: memref<1x256xf32, #tpu.memory_space<vmem>>, %arg14: memref<256x64xf32, #tpu.memory_space<vmem>>, %arg15: memref<1x64xf32, #tpu.memory_space<vmem>>, %arg16: memref<2x64xf32, #tpu.memory_space<vmem>>) attributes {dimension_semantics = [], scalar_prefetch = 0 : i64, scratch_operands = 0 : i64, tpu.core_type = #tpu.core_type<tc>} {
    %c0 = arith.constant 0 : index
    %c0_0 = arith.constant 0 : index
    %0 = vector.load %arg6[%c0, %c0_0] : memref<256x256xf32, #tpu.memory_space<vmem>>, vector<256x256xf32>
    %c0_1 = arith.constant 0 : index
    %c0_2 = arith.constant 0 : index
    %1 = vector.load %arg7[%c0_1, %c0_2] : memref<256x256xf32, #tpu.memory_space<vmem>>, vector<256x256xf32>
    %c0_3 = arith.constant 0 : index
    %c0_4 = arith.constant 0 : index
    %2 = vector.load %arg1[%c0_3, %c0_4] : memref<2x256xf32, #tpu.memory_space<vmem>>, vector<2x256xf32>
    %c0_5 = arith.constant 0 : index
    %c0_6 = arith.constant 0 : index
    %3 = vector.load %arg0[%c0_5, %c0_6] : memref<2x128xf32, #tpu.memory_space<vmem>>, vector<2x128xf32>
    %c0_7 = arith.constant 0 : index
    %c0_8 = arith.constant 0 : index
    %4 = vector.load %arg4[%c0_7, %c0_8] : memref<128x256xf32, #tpu.memory_space<vmem>>, vector<128x256xf32>
    %cst = arith.constant dense<0.000000e+00> : vector<2x256xf32>
    %5 = tpu.matmul %3, %4, %cst {dimension_numbers = #tpu.dot_dimension_numbers<[1], [0], [0], [1], [0, 0, 1, 1], [], []>} : vector<2x128xf32>, vector<128x256xf32>, vector<2x256xf32> -> vector<2x256xf32>
    %6 = arith.addf %2, %5 : vector<2x256xf32>
    %c0_9 = arith.constant 0 : index
    %c0_10 = arith.constant 0 : index
    %7 = vector.load %arg5[%c0_9, %c0_10] : memref<1x256xf32, #tpu.memory_space<vmem>>, vector<1x256xf32>
    %8 = vector.broadcast %7 : vector<1x256xf32> to vector<2x256xf32>
    %9 = arith.addf %6, %8 : vector<2x256xf32>
    %cst_11 = arith.constant dense<0.000000e+00> : vector<2x256xf32>
    %10 = tpu.matmul %9, %0, %cst_11 {dimension_numbers = #tpu.dot_dimension_numbers<[1], [0], [0], [1], [0, 0, 1, 1], [], []>} : vector<2x256xf32>, vector<256x256xf32>, vector<2x256xf32> -> vector<2x256xf32>
    %11 = arith.subf %9, %10 : vector<2x256xf32>
    %c0_12 = arith.constant 0 : index
    %c0_13 = arith.constant 0 : index
    %12 = vector.load %arg9[%c0_12, %c0_13] : memref<256x512xf32, #tpu.memory_space<vmem>>, vector<256x512xf32>
    %cst_14 = arith.constant dense<0.000000e+00> : vector<2x512xf32>
    %13 = tpu.matmul %11, %12, %cst_14 {dimension_numbers = #tpu.dot_dimension_numbers<[1], [0], [0], [1], [0, 0, 1, 1], [], []>} : vector<2x256xf32>, vector<256x512xf32>, vector<2x512xf32> -> vector<2x512xf32>
    %cst_15 = arith.constant 0.000000e+00 : f32
    %14 = vector.broadcast %cst_15 : f32 to vector<2x512xf32>
    %15 = arith.maximumf %13, %14 : vector<2x512xf32>
    %c0_16 = arith.constant 0 : index
    %c0_17 = arith.constant 0 : index
    %16 = vector.load %arg10[%c0_16, %c0_17] : memref<512x256xf32, #tpu.memory_space<vmem>>, vector<512x256xf32>
    %cst_18 = arith.constant dense<0.000000e+00> : vector<2x256xf32>
    %17 = tpu.matmul %15, %16, %cst_18 {dimension_numbers = #tpu.dot_dimension_numbers<[1], [0], [0], [1], [0, 0, 1, 1], [], []>} : vector<2x512xf32>, vector<512x256xf32>, vector<2x256xf32> -> vector<2x256xf32>
    %18 = arith.addf %11, %17 : vector<2x256xf32>
    %cst_19 = arith.constant dense<0.000000e+00> : vector<2x256xf32>
    %19 = tpu.matmul %18, %0, %cst_19 {dimension_numbers = #tpu.dot_dimension_numbers<[1], [0], [0], [1], [0, 0, 1, 1], [], []>} : vector<2x256xf32>, vector<256x256xf32>, vector<2x256xf32> -> vector<2x256xf32>
    %20 = arith.subf %18, %19 : vector<2x256xf32>
    %c0_20 = arith.constant 0 : index
    %c0_21 = arith.constant 0 : index
    %21 = vector.load %arg2[%c0_20, %c0_21] : memref<2x256xf32, #tpu.memory_space<vmem>>, vector<2x256xf32>
    %22 = arith.addf %21, %10 : vector<2x256xf32>
    %23 = arith.addf %22, %19 : vector<2x256xf32>
    %c0_22 = arith.constant 0 : index
    %c0_23 = arith.constant 0 : index
    %24 = vector.load %arg11[%c0_22, %c0_23] : memref<256x64xf32, #tpu.memory_space<vmem>>, vector<256x64xf32>
    %cst_24 = arith.constant dense<0.000000e+00> : vector<2x64xf32>
    %25 = tpu.matmul %23, %24, %cst_24 {dimension_numbers = #tpu.dot_dimension_numbers<[1], [0], [0], [1], [0, 0, 1, 1], [], []>} : vector<2x256xf32>, vector<256x64xf32>, vector<2x64xf32> -> vector<2x64xf32>
    %c0_25 = arith.constant 0 : index
    %c0_26 = arith.constant 0 : index
    %26 = vector.load %arg3[%c0_25, %c0_26] : memref<2x64xf32, #tpu.memory_space<vmem>>, vector<2x64xf32>
    %27 = arith.addf %26, %25 : vector<2x64xf32>
    %cst_27 = arith.constant dense<0.000000e+00> : vector<2x256xf32>
    %28 = tpu.matmul %20, %1, %cst_27 {dimension_numbers = #tpu.dot_dimension_numbers<[1], [0], [0], [1], [0, 0, 1, 1], [], []>} : vector<2x256xf32>, vector<256x256xf32>, vector<2x256xf32> -> vector<2x256xf32>
    %29 = arith.subf %20, %28 : vector<2x256xf32>
    %30 = arith.mulf %29, %29 : vector<2x256xf32>
    %cst_28 = arith.constant dense<0.000000e+00> : vector<2x256xf32>
    %31 = tpu.matmul %30, %1, %cst_28 {dimension_numbers = #tpu.dot_dimension_numbers<[1], [0], [0], [1], [0, 0, 1, 1], [], []>} : vector<2x256xf32>, vector<256x256xf32>, vector<2x256xf32> -> vector<2x256xf32>
    %cst_29 = arith.constant 9.99999974E-6 : f32
    %32 = vector.broadcast %cst_29 : f32 to vector<2x256xf32>
    %33 = arith.addf %31, %32 : vector<2x256xf32>
    %34 = math.rsqrt %33 : vector<2x256xf32>
    %35 = arith.mulf %29, %34 : vector<2x256xf32>
    %c0_30 = arith.constant 0 : index
    %c0_31 = arith.constant 0 : index
    %36 = vector.load %arg12[%c0_30, %c0_31] : memref<1x256xf32, #tpu.memory_space<vmem>>, vector<1x256xf32>
    %37 = vector.broadcast %36 : vector<1x256xf32> to vector<2x256xf32>
    %38 = arith.mulf %35, %37 : vector<2x256xf32>
    %c0_32 = arith.constant 0 : index
    %c0_33 = arith.constant 0 : index
    %39 = vector.load %arg13[%c0_32, %c0_33] : memref<1x256xf32, #tpu.memory_space<vmem>>, vector<1x256xf32>
    %40 = vector.broadcast %39 : vector<1x256xf32> to vector<2x256xf32>
    %41 = arith.addf %38, %40 : vector<2x256xf32>
    %c0_34 = arith.constant 0 : index
    %c0_35 = arith.constant 0 : index
    %42 = vector.load %arg8[%c0_34, %c0_35] : memref<256x256xf32, #tpu.memory_space<vmem>>, vector<256x256xf32>
    %cst_36 = arith.constant dense<0.000000e+00> : vector<2x256xf32>
    %43 = tpu.matmul %41, %42, %cst_36 {dimension_numbers = #tpu.dot_dimension_numbers<[1], [0], [0], [1], [0, 0, 1, 1], [], []>} : vector<2x256xf32>, vector<256x256xf32>, vector<2x256xf32> -> vector<2x256xf32>
    %44 = arith.subf %41, %43 : vector<2x256xf32>
    %c0_37 = arith.constant 0 : index
    %c0_38 = arith.constant 0 : index
    %45 = vector.load %arg14[%c0_37, %c0_38] : memref<256x64xf32, #tpu.memory_space<vmem>>, vector<256x64xf32>
    %cst_39 = arith.constant dense<0.000000e+00> : vector<2x64xf32>
    %46 = tpu.matmul %44, %45, %cst_39 {dimension_numbers = #tpu.dot_dimension_numbers<[1], [0], [0], [1], [0, 0, 1, 1], [], []>} : vector<2x256xf32>, vector<256x64xf32>, vector<2x64xf32> -> vector<2x64xf32>
    %c0_40 = arith.constant 0 : index
    %c0_41 = arith.constant 0 : index
    %47 = vector.load %arg15[%c0_40, %c0_41] : memref<1x64xf32, #tpu.memory_space<vmem>>, vector<1x64xf32>
    %48 = vector.broadcast %47 : vector<1x64xf32> to vector<2x64xf32>
    %49 = arith.addf %46, %48 : vector<2x64xf32>
    %50 = arith.addf %27, %49 : vector<2x64xf32>
    %c0_42 = arith.constant 0 : index
    %c0_43 = arith.constant 0 : index
    %51 = vector.load %arg16[%c0_42, %c0_43] : memref<2x64xf32, #tpu.memory_space<vmem>>, vector<2x64xf32>
    tpu.vector_store %arg16[%c0_42, %c0_43], %50 {strides = array<i32>} : memref<2x64xf32, #tpu.memory_space<vmem>>, vector<2x64xf32>,
    return
  }
}

</mosaic_0001>

<llo_original>
// kernel: fedformer_forward.3
$region0: #{fedformer_forward.3}
  #allocation0 [shape = 'u32[]', space=smem, size = 0x4, offset = 0x4, fixed_abs, tag = 'smem constant byte address 0x4 - core index']
  #allocation1 [shape = 'u32[144,128]{1,0:T(1,128)}', space=vmem, size = 0x12000, scoped, tag = 'internal scratch']
  %s0 = inlined_call_operand.vmem [shape: f32[2,128], index: 0, kind: input, shape index: {}]
  %s1 = inlined_call_operand.vmem [shape: f32[2,256], index: 1, kind: input, shape index: {}]
  %s2 = inlined_call_operand.vmem [shape: f32[2,256], index: 2, kind: input, shape index: {}]
  %s3 = inlined_call_operand.vmem [shape: f32[2,64], index: 3, kind: input, shape index: {}]
  %s4 = inlined_call_operand.vmem [shape: f32[128,256], index: 4, kind: input, shape index: {}]
  %s5 = inlined_call_operand.vmem [shape: f32[1,256], index: 5, kind: input, shape index: {}]
  %s6 = inlined_call_operand.vmem [shape: f32[256,256], index: 6, kind: input, shape index: {}]
  %s7 = inlined_call_operand.vmem [shape: f32[256,256], index: 7, kind: input, shape index: {}]
  %s8 = inlined_call_operand.vmem [shape: f32[256,256], index: 8, kind: input, shape index: {}]
  %s9 = inlined_call_operand.vmem [shape: f32[256,512], index: 9, kind: input, shape index: {}]
  %s10 = inlined_call_operand.vmem [shape: f32[512,256], index: 10, kind: input, shape index: {}]
  %s11 = inlined_call_operand.vmem [shape: f32[256,64], index: 11, kind: input, shape index: {}]
  %s12 = inlined_call_operand.vmem [shape: f32[1,256], index: 12, kind: input, shape index: {}]
  %s13 = inlined_call_operand.vmem [shape: f32[1,256], index: 13, kind: input, shape index: {}]
  %s14 = inlined_call_operand.vmem [shape: f32[256,64], index: 14, kind: input, shape index: {}]
  %s15 = inlined_call_operand.vmem [shape: f32[1,64], index: 15, kind: input, shape index: {}]
  %s16 = inlined_call_operand.vmem [shape: f32[2,64], index: 16, kind: output, shape index: {}]
  %s17 = sld [smem:[#allocation0]]
  $region74: #{fedformer_forward.3} parent=0
    _
  %s19 = ssub.s32 1, %s17
  %s20 = scalar_select 0, %s19, %s17
  // Predicated region
  $region2: #{fedformer_forward.3} parent=0 // pred_check
    _
  $region3: #{fedformer_forward.3} parent=0 // pred_check_branch
    %22 = sbr.rel (0) target = $region5
  $region4: #{fedformer_forward.3} parent=0 // pred_region
    _
  $region5: #{fedformer_forward.3} parent=0 // pred_fallthru
    _
  // Predicated region
  $region6: #{fedformer_forward.3} parent=0 // pred_check
    _
  $region7: #{fedformer_forward.3} parent=0 // pred_check_branch
    %24 = sbr.rel (0) target = $region9
  $region8: #{fedformer_forward.3} parent=0 // pred_region
    _
  $region9: #{fedformer_forward.3} parent=0 // pred_fallthru
    _
  // Predicated region
  $region10: #{fedformer_forward.3} parent=0 // pred_check
    _
  $region11: #{fedformer_forward.3} parent=0 // pred_check_branch
    %26 = sbr.rel (0) target = $region13
  $region12: #{fedformer_forward.3} parent=0 // pred_region
    _
  $region13: #{fedformer_forward.3} parent=0 // pred_fallthru
    _
  // Predicated region
  $region14: #{fedformer_forward.3} parent=0 // pred_check
    _
  $region15: #{fedformer_forward.3} parent=0 // pred_check_branch
    %28 = sbr.rel (0) target = $region17
  $region16: #{fedformer_forward.3} parent=0 // pred_region
    _
  $region17: #{fedformer_forward.3} parent=0 // pred_fallthru
    _
  // Predicated region
  $region18: #{fedformer_forward.3} parent=0 // pred_check
    _
  $region19: #{fedformer_forward.3} parent=0 // pred_check_branch
    %30 = sbr.rel (0) target = $region21
  $region20: #{fedformer_forward.3} parent=0 // pred_region
    _
  $region21: #{fedformer_forward.3} parent=0 // pred_fallthru
    _
  // Predicated region
  $region22: #{fedformer_forward.3} parent=0 // pred_check
    _
  $region23: #{fedformer_forward.3} parent=0 // pred_check_branch
    %32 = sbr.rel (0) target = $region25
  $region24: #{fedformer_forward.3} parent=0 // pred_region
    _
  $region25: #{fedformer_forward.3} parent=0 // pred_fallthru
    _
  // Predicated region
  $region26: #{fedformer_forward.3} parent=0 // pred_check
    _
  $region27: #{fedformer_forward.3} parent=0 // pred_check_branch
    %34 = sbr.rel (0) target = $region29
  $region28: #{fedformer_forward.3} parent=0 // pred_region
    _
  $region29: #{fedformer_forward.3} parent=0 // pred_fallthru
    _
  // Predicated region
  $region30: #{fedformer_forward.3} parent=0 // pred_check
    _
  $region31: #{fedformer_forward.3} parent=0 // pred_check_branch
    %36 = sbr.rel (0) target = $region33
  $region32: #{fedformer_forward.3} parent=0 // pred_region
    _
  $region33: #{fedformer_forward.3} parent=0 // pred_fallthru
    _
  // Predicated region
  $region34: #{fedformer_forward.3} parent=0 // pred_check
    _
  $region35: #{fedformer_forward.3} parent=0 // pred_check_branch
    %38 = sbr.rel (0) target = $region37
  $region36: #{fedformer_forward.3} parent=0 // pred_region
    _
  $region37: #{fedformer_forward.3} parent=0 // pred_fallthru
    _
  // Predicated region
  $region38: #{fedformer_forward.3} parent=0 // pred_check
    _
  $region39: #{fedformer_forward.3} parent=0 // pred_check_branch
    %40 = sbr.rel (0) target = $region41
  $region40: #{fedformer_forward.3} parent=0 // pred_region
    _
  $region41: #{fedformer_forward.3} parent=0 // pred_fallthru
    _
  // Predicated region
  $region42: #{fedformer_forward.3} parent=0 // pred_check
    _
  $region43: #{fedformer_forward.3} parent=0 // pred_check_branch
    %42 = sbr.rel (0) target = $region45
  $region44: #{fedformer_forward.3} parent=0 // pred_region
    _
  $region45: #{fedformer_forward.3} parent=0 // pred_fallthru
    _
  // Predicated region
  $region46: #{fedformer_forward.3} parent=0 // pred_check
    _
  $region47: #{fedformer_forward.3} parent=0 // pred_check_branch
    %44 = sbr.rel (0) target = $region49
  $region48: #{fedformer_forward.3} parent=0 // pred_region
    _
  $region49: #{fedformer_forward.3} parent=0 // pred_fallthru
    _
  // Predicated region
  $region50: #{fedformer_forward.3} parent=0 // pred_check
    _
  $region51: #{fedformer_forward.3} parent=0 // pred_check_branch
    %46 = sbr.rel (0) target = $region53
  $region52: #{fedformer_forward.3} parent=0 // pred_region
    _
  $region53: #{fedformer_forward.3} parent=0 // pred_fallthru
    _
  // Predicated region
  $region54: #{fedformer_forward.3} parent=0 // pred_check
    _
  $region55: #{fedformer_forward.3} parent=0 // pred_check_branch
    %48 = sbr.rel (0) target = $region57
  $region56: #{fedformer_forward.3} parent=0 // pred_region
    _
  $region57: #{fedformer_forward.3} parent=0 // pred_fallthru
    _
  // Predicated region
  $region58: #{fedformer_forward.3} parent=0 // pred_check
    _
  $region59: #{fedformer_forward.3} parent=0 // pred_check_branch
    %50 = sbr.rel (0) target = $region61
  $region60: #{fedformer_forward.3} parent=0 // pred_region
    _
  $region61: #{fedformer_forward.3} parent=0 // pred_fallthru
    _
  // Predicated region
  $region62: #{fedformer_forward.3} parent=0 // pred_check
    _
  $region63: #{fedformer_forward.3} parent=0 // pred_check_branch
    %52 = sbr.rel (0) target = $region65
  $region64: #{fedformer_forward.3} parent=0 // pred_region
    _
  $region65: #{fedformer_forward.3} parent=0 // pred_fallthru
    _
  %v53 = vld [vmem:[%s6] sm:$0xff]
  %v54 = vld [vmem:[%s6 + $0x8] sm:$0xff]
  %v55 = vld [vmem:[%s6 + $0x10] sm:$0xff]
  %v56 = vld [vmem:[%s6 + $0x18] sm:$0xff]
  %v57 = vld [vmem:[%s6 + $0x20] sm:$0xff]
  %v58 = vld [vmem:[%s6 + $0x28] sm:$0xff]
  %v59 = vld [vmem:[%s6 + $0x30] sm:$0xff]
  %v60 = vld [vmem:[%s6 + $0x38] sm:$0xff]
  %v61 = vld [vmem:[%s6 + $0x40] sm:$0xff]
  %v62 = vld [vmem:[%s6 + $0x48] sm:$0xff]
  %v63 = vld [vmem:[%s6 + $0x50] sm:$0xff]
  %v64 = vld [vmem:[%s6 + $0x58] sm:$0xff]
  %v65 = vld [vmem:[%s6 + $0x60] sm:$0xff]
  %v66 = vld [vmem:[%s6 + $0x68] sm:$0xff]
  %v67 = vld [vmem:[%s6 + $0x70] sm:$0xff]
  %v68 = vld [vmem:[%s6 + $0x78] sm:$0xff]
  %v69 = vld [vmem:[%s6 + $0x80] sm:$0xff]
  %v70 = vld [vmem:[%s6 + $0x88] sm:$0xff]
  %v71 = vld [vmem:[%s6 + $0x90] sm:$0xff]
  %v72 = vld [vmem:[%s6 + $0x98] sm:$0xff]
  %v73 = vld [vmem:[%s6 + $0xa0] sm:$0xff]
  %v74 = vld [vmem:[%s6 + $0xa8] sm:$0xff]
  %v75 = vld [vmem:[%s6 + $0xb0] sm:$0xff]
  %v76 = vld [vmem:[%s6 + $0xb8] sm:$0xff]
  %v77 = vld [vmem:[%s6 + $0xc0] sm:$0xff]
  %v78 = vld [vmem:[%s6 + $0xc8] sm:$0xff]
  %v79 = vld [vmem:[%s6 + $0xd0] sm:$0xff]
  %v80 = vld [vmem:[%s6 + $0xd8] sm:$0xff]
  %v81 = vld [vmem:[%s6 + $0xe0] sm:$0xff]
  %v82 = vld [vmem:[%s6 + $0xe8] sm:$0xff]
  %v83 = vld [vmem:[%s6 + $0xf0] sm:$0xff]
  %v84 = vld [vmem:[%s6 + $0xf8] sm:$0xff]
  %v85 = vld [vmem:[%s6 + $0x100] sm:$0xff]
  %v86 = vld [vmem:[%s6 + $0x108] sm:$0xff]
  %v87 = vld [vmem:[%s6 + $0x110] sm:$0xff]
  %v88 = vld [vmem:[%s6 + $0x118] sm:$0xff]
  %v89 = vld [vmem:[%s6 + $0x120] sm:$0xff]
  %v90 = vld [vmem:[%s6 + $0x128] sm:$0xff]
  %v91 = vld [vmem:[%s6 + $0x130] sm:$0xff]
  %v92 = vld [vmem:[%s6 + $0x138] sm:$0xff]
  %v93 = vld [vmem:[%s6 + $0x140] sm:$0xff]
  %v94 = vld [vmem:[%s6 + $0x148] sm:$0xff]
  %v95 = vld [vmem:[%s6 + $0x150] sm:$0xff]
  %v96 = vld [vmem:[%s6 + $0x158] sm:$0xff]
  %v97 = vld [vmem:[%s6 + $0x160] sm:$0xff]
  %v98 = vld [vmem:[%s6 + $0x168] sm:$0xff]
  %v99 = vld [vmem:[%s6 + $0x170] sm:$0xff]
  %v100 = vld [vmem:[%s6 + $0x178] sm:$0xff]
  %v101 = vld [vmem:[%s6 + $0x180] sm:$0xff]
  %v102 = vld [vmem:[%s6 + $0x188] sm:$0xff]
  %v103 = vld [vmem:[%s6 + $0x190] sm:$0xff]
  %v104 = vld [vmem:[%s6 + $0x198] sm:$0xff]
  %v105 = vld [vmem:[%s6 + $0x1a0] sm:$0xff]
  %v106 = vld [vmem:[%s6 + $0x1a8] sm:$0xff]
  %v107 = vld [vmem:[%s6 + $0x1b0] sm:$0xff]
  %v108 = vld [vmem:[%s6 + $0x1b8] sm:$0xff]
  %v109 = vld [vmem:[%s6 + $0x1c0] sm:$0xff]
  %v110 = vld [vmem:[%s6 + $0x1c8] sm:$0xff]
  %v111 = vld [vmem:[%s6 + $0x1d0] sm:$0xff]
  %v112 = vld [vmem:[%s6 + $0x1d8] sm:$0xff]
  %v113 = vld [vmem:[%s6 + $0x1e0] sm:$0xff]
  %v114 = vld [vmem:[%s6 + $0x1e8] sm:$0xff]
  %v115 = vld [vmem:[%s6 + $0x1f0] sm:$0xff]
  %v116 = vld [vmem:[%s6 + $0x1f8] sm:$0xff]
  %v117 = vld [vmem:[%s7] sm:$0xff]
  %v118 = vld [vmem:[%s7 + $0x8] sm:$0xff]
  %v119 = vld [vmem:[%s7 + $0x10] sm:$0xff]
  %v120 = vld [vmem:[%s7 + $0x18] sm:$0xff]
  %v121 = vld [vmem:[%s7 + $0x20] sm:$0xff]
  %v122 = vld [vmem:[%s7 + $0x28] sm:$0xff]
  %v123 = vld [vmem:[%s7 + $0x30] sm:$0xff]
  %v124 = vld [vmem:[%s7 + $0x38] sm:$0xff]
  %v125 = vld [vmem:[%s7 + $0x40] sm:$0xff]
  %v126 = vld [vmem:[%s7 + $0x48] sm:$0xff]
  %v127 = vld [vmem:[%s7 + $0x50] sm:$0xff]
  %v128 = vld [vmem:[%s7 + $0x58] sm:$0xff]
  %v129 = vld [vmem:[%s7 + $0x60] sm:$0xff]
  %v130 = vld [vmem:[%s7 + $0x68] sm:$0xff]
  %v131 = vld [vmem:[%s7 + $0x70] sm:$0xff]
  %v132 = vld [vmem:[%s7 + $0x78] sm:$0xff]
  %v133 = vld [vmem:[%s7 + $0x80] sm:$0xff]
  %v134 = vld [vmem:[%s7 + $0x88] sm:$0xff]
  %v135 = vld [vmem:[%s7 + $0x90] sm:$0xff]
  %v136 = vld [vmem:[%s7 + $0x98] sm:$0xff]
  %v137 = vld [vmem:[%s7 + $0xa0] sm:$0xff]
  %v138 = vld [vmem:[%s7 + $0xa8] sm:$0xff]
  %v139 = vld [vmem:[%s7 + $0xb0] sm:$0xff]
  %v140 = vld [vmem:[%s7 + $0xb8] sm:$0xff]
  %v141 = vld [vmem:[%s7 + $0xc0] sm:$0xff]
  %v142 = vld [vmem:[%s7 + $0xc8] sm:$0xff]
  %v143 = vld [vmem:[%s7 + $0xd0] sm:$0xff]
  %v144 = vld [vmem:[%s7 + $0xd8] sm:$0xff]
  %v145 = vld [vmem:[%s7 + $0xe0] sm:$0xff]
  %v146 = vld [vmem:[%s7 + $0xe8] sm:$0xff]
  %v147 = vld [vmem:[%s7 + $0xf0] sm:$0xff]
  %v148 = vld [vmem:[%s7 + $0xf8] sm:$0xff]
  %v149 = vld [vmem:[%s7 + $0x100] sm:$0xff]
  %v150 = vld [vmem:[%s7 + $0x108] sm:$0xff]
  %v151 = vld [vmem:[%s7 + $0x110] sm:$0xff]
  %v152 = vld [vmem:[%s7 + $0x118] sm:$0xff]
  %v153 = vld [vmem:[%s7 + $0x120] sm:$0xff]
  %v154 = vld [vmem:[%s7 + $0x128] sm:$0xff]
  %v155 = vld [vmem:[%s7 + $0x130] sm:$0xff]
  %v156 = vld [vmem:[%s7 + $0x138] sm:$0xff]
  %v157 = vld [vmem:[%s7 + $0x140] sm:$0xff]
  %v158 = vld [vmem:[%s7 + $0x148] sm:$0xff]
  %v159 = vld [vmem:[%s7 + $0x150] sm:$0xff]
  %v160 = vld [vmem:[%s7 + $0x158] sm:$0xff]
  %v161 = vld [vmem:[%s7 + $0x160] sm:$0xff]
  %v162 = vld [vmem:[%s7 + $0x168] sm:$0xff]
  %v163 = vld [vmem:[%s7 + $0x170] sm:$0xff]
  %v164 = vld [vmem:[%s7 + $0x178] sm:$0xff]
  %v165 = vld [vmem:[%s7 + $0x180] sm:$0xff]
  %v166 = vld [vmem:[%s7 + $0x188] sm:$0xff]
  %v167 = vld [vmem:[%s7 + $0x190] sm:$0xff]
  %v168 = vld [vmem:[%s7 + $0x198] sm:$0xff]
  %v169 = vld [vmem:[%s7 + $0x1a0] sm:$0xff]
  %v170 = vld [vmem:[%s7 + $0x1a8] sm:$0xff]
  %v171 = vld [vmem:[%s7 + $0x1b0] sm:$0xff]
  %v172 = vld [vmem:[%s7 + $0x1b8] sm:$0xff]
  %v173 = vld [vmem:[%s7 + $0x1c0] sm:$0xff]
  %v174 = vld [vmem:[%s7 + $0x1c8] sm:$0xff]
  %v175 = vld [vmem:[%s7 + $0x1d0] sm:$0xff]
  %v176 = vld [vmem:[%s7 + $0x1d8] sm:$0xff]
  %v177 = vld [vmem:[%s7 + $0x1e0] sm:$0xff]
  %v178 = vld [vmem:[%s7 + $0x1e8] sm:$0xff]
  %v179 = vld [vmem:[%s7 + $0x1f0] sm:$0xff]
  %v180 = vld [vmem:[%s7 + $0x1f8] sm:$0xff]
  %v181 = vld [vmem:[%s1] sm:$0xf]
  %v182 = vld [vmem:[%s0] sm:$0x3]
  %v183 = vld [vmem:[%s4] sm:$0xff]
  %v184 = vld [vmem:[%s4 + $0x8] sm:$0xff]
  %v185 = vld [vmem:[%s4 + $0x10] sm:$0xff]
  %v186 = vld [vmem:[%s4 + $0x18] sm:$0xff]
  %v187 = vld [vmem:[%s4 + $0x20] sm:$0xff]
  %v188 = vld [vmem:[%s4 + $0x28] sm:$0xff]
  %v189 = vld [vmem:[%s4 + $0x30] sm:$0xff]
  %v190 = vld [vmem:[%s4 + $0x38] sm:$0xff]
  %v191 = vld [vmem:[%s4 + $0x40] sm:$0xff]
  %v192 = vld [vmem:[%s4 + $0x48] sm:$0xff]
  %v193 = vld [vmem:[%s4 + $0x50] sm:$0xff]
  %v194 = vld [vmem:[%s4 + $0x58] sm:$0xff]
  %v195 = vld [vmem:[%s4 + $0x60] sm:$0xff]
  %v196 = vld [vmem:[%s4 + $0x68] sm:$0xff]
  %v197 = vld [vmem:[%s4 + $0x70] sm:$0xff]
  %v198 = vld [vmem:[%s4 + $0x78] sm:$0xff]
  %v199 = vld [vmem:[%s4 + $0x80] sm:$0xff]
  %v200 = vld [vmem:[%s4 + $0x88] sm:$0xff]
  %v201 = vld [vmem:[%s4 + $0x90] sm:$0xff]
  %v202 = vld [vmem:[%s4 + $0x98] sm:$0xff]
  %v203 = vld [vmem:[%s4 + $0xa0] sm:$0xff]
  %v204 = vld [vmem:[%s4 + $0xa8] sm:$0xff]
  %v205 = vld [vmem:[%s4 + $0xb0] sm:$0xff]
  %v206 = vld [vmem:[%s4 + $0xb8] sm:$0xff]
  %v207 = vld [vmem:[%s4 + $0xc0] sm:$0xff]
  %v208 = vld [vmem:[%s4 + $0xc8] sm:$0xff]
  %v209 = vld [vmem:[%s4 + $0xd0] sm:$0xff]
  %v210 = vld [vmem:[%s4 + $0xd8] sm:$0xff]
  %v211 = vld [vmem:[%s4 + $0xe0] sm:$0xff]
  %v212 = vld [vmem:[%s4 + $0xe8] sm:$0xff]
  %v213 = vld [vmem:[%s4 + $0xf0] sm:$0xff]
  %v214 = vld [vmem:[%s4 + $0xf8] sm:$0xff]
  %215 = vmatprep.subr.mxu0 %v184
  %216 = vmatpush1.msra.mxu0 %v183
  %217 = vmatprep.subr.mxu0 %v186
  %218 = vmatpush1.msra.mxu0 %v185
  %219 = vmatprep.subr.mxu0 %v188
  %220 = vmatpush1.msra.mxu0 %v187
  %221 = vmatprep.subr.mxu0 %v190
  %222 = vmatpush1.msra.mxu0 %v189
  %223 = vmatprep.subr.mxu0 %v192
  %224 = vmatpush1.msra.mxu0 %v191
  %225 = vmatprep.subr.mxu0 %v194
  %226 = vmatpush1.msra.mxu0 %v193
  %227 = vmatprep.subr.mxu0 %v196
  %228 = vmatpush1.msra.mxu0 %v195
  %229 = vmatprep.subr.mxu0 %v198
  %230 = vmatpush1.msra.mxu0 %v197
  %231 = vmatprep.subr.mxu0 %v200
  %232 = vmatpush1.msra.mxu0 %v199
  %233 = vmatprep.subr.mxu0 %v202
  %234 = vmatpush1.msra.mxu0 %v201
  %235 = vmatprep.subr.mxu0 %v204
  %236 = vmatpush1.msra.mxu0 %v203
  %237 = vmatprep.subr.mxu0 %v206
  %238 = vmatpush1.msra.mxu0 %v205
  %239 = vmatprep.subr.mxu0 %v208
  %240 = vmatpush1.msra.mxu0 %v207
  %241 = vmatprep.subr.mxu0 %v210
  %242 = vmatpush1.msra.mxu0 %v209
  %243 = vmatprep.subr.mxu0 %v212
  %244 = vmatpush1.msra.mxu0 %v211
  %245 = vmatprep.subr.mxu0 %v214
  %246 = vmatpush1.msra.mxu0 %v213
  %247 = vmatprep.subr.mxu0 0.0
  %248 = vmatpush1.msra.mxu0 0.0
  %249 = vmatprep.subr.mxu0 0.0
  %250 = vmatpush1.msra.mxu0 0.0
  %251 = vmatprep.subr.mxu0 0.0
  %252 = vmatpush1.msra.mxu0 0.0
  %253 = vmatprep.subr.mxu0 0.0
  %254 = vmatpush1.msra.mxu0 0.0
  %255 = vmatprep.subr.mxu0 0.0
  %256 = vmatpush1.msra.mxu0 0.0
  %257 = vmatprep.subr.mxu0 0.0
  %258 = vmatpush1.msra.mxu0 0.0
  %259 = vmatprep.subr.mxu0 0.0
  %260 = vmatpush1.msra.mxu0 0.0
  %261 = vmatprep.subr.mxu0 0.0
  %262 = vmatpush1.msra.mxu0 0.0
  %263 = vmatprep.subr.mxu0 0.0
  %264 = vmatpush1.msra.mxu0 0.0
  %265 = vmatprep.subr.mxu0 0.0
  %266 = vmatpush1.msra.mxu0 0.0
  %267 = vmatprep.subr.mxu0 0.0
  %268 = vmatpush1.msra.mxu0 0.0
  %269 = vmatprep.subr.mxu0 0.0
  %270 = vmatpush1.msra.mxu0 0.0
  %271 = vmatprep.subr.mxu0 0.0
  %272 = vmatpush1.msra.mxu0 0.0
  %273 = vmatprep.subr.mxu0 0.0
  %274 = vmatpush1.msra.mxu0 0.0
  %275 = vmatprep.subr.mxu0 0.0
  %276 = vmatpush1.msra.mxu0 0.0
  %277 = vmatprep.subr.mxu0 0.0
  %278 = vmatpush1.msra.mxu0 0.0
  %279 = vmatprep.mubr.f32.mxu0 0.0
  %280 = vmatmul.mubr.f32.gmra.mrb[0].mxu0 %v182
  %v281 = vpop.f32.mrb[0].mxu0
  %v282 = vadd.f32 0.0, %v281
  %v283 = vpop.f32.mrb[0].mxu0
  %v284 = vadd.f32 0.0, %v283
  %285 = vdwg.mxu0
  %v288 = vcombine.low %v282, %v284
  %v290 = vunpack.c.l.s4 1983009808
  %v291 = vunpack.c.0.s8 %v290
  %v292 = vlaneseq
  %v293 = vshrl.u32 %v292, 7
  %v294 = vsub.s32 %v291, %v293
  %v295 = vrot.slane %v288, %v294
  %v297 = vadd.f32 %v181, %v295
  %v298 = vld [vmem:[%s5] sm:$0x3]
  %v300 = vlaneseq
  %v301 = vshrl.u32 %v300, 7
  %v302 = vsub.s32 0, %v301
  %v303 = vrot.slane %v298, %v302
  %v304 = vlaneseq
  %v305 = vshrl.u32 %v304, 7
  %v306 = vsub.s32 1, %v305
  %v307 = vrot.slane %v298, %v306
  %v308 = vcombine.low %v303, %v307
  %v310 = vunpack.c.l.s4 1983009808
  %v311 = vunpack.c.0.s8 %v310
  %v312 = vlaneseq
  %v313 = vshrl.u32 %v312, 7
  %v314 = vsub.s32 %v311, %v313
  %v315 = vrot.slane %v308, %v314
  %v317 = vadd.f32 %v297, %v315
  %v320 = vunpack.c.l.s4 1983009808
  %v321 = vunpack.c.0.s8 %v320
  %v322 = vlaneseq
  %v323 = vshrl.u32 %v322, 7
  %v324 = vsub.s32 %v321, %v323
  %v325 = vrot.slane %v317, %v324
  %v326 = vcombine.high %v325, %v325
  %329 = vmatprep.subr.mxu0 %v54
  %330 = vmatpush1.msra.mxu0 %v53
  %331 = vmatprep.subr.mxu0 %v56
  %332 = vmatpush1.msra.mxu0 %v55
  %333 = vmatprep.subr.mxu0 %v58
  %334 = vmatpush1.msra.mxu0 %v57
  %335 = vmatprep.subr.mxu0 %v60
  %336 = vmatpush1.msra.mxu0 %v59
  %337 = vmatprep.subr.mxu0 %v62
  %338 = vmatpush1.msra.mxu0 %v61
  %339 = vmatprep.subr.mxu0 %v64
  %340 = vmatpush1.msra.mxu0 %v63
  %341 = vmatprep.subr.mxu0 %v66
  %342 = vmatpush1.msra.mxu0 %v65
  %343 = vmatprep.subr.mxu0 %v68
  %344 = vmatpush1.msra.mxu0 %v67
  %345 = vmatprep.subr.mxu0 %v70
  %346 = vmatpush1.msra.mxu0 %v69
  %347 = vmatprep.subr.mxu0 %v72
  %348 = vmatpush1.msra.mxu0 %v71
  %349 = vmatprep.subr.mxu0 %v74
  %350 = vmatpush1.msra.mxu0 %v73
  %351 = vmatprep.subr.mxu0 %v76
  %352 = vmatpush1.msra.mxu0 %v75
  %353 = vmatprep.subr.mxu0 %v78
  %354 = vmatpush1.msra.mxu0 %v77
  %355 = vmatprep.subr.mxu0 %v80
  %356 = vmatpush1.msra.mxu0 %v79
  %357 = vmatprep.subr.mxu0 %v82
  %358 = vmatpush1.msra.mxu0 %v81
  %359 = vmatprep.subr.mxu0 %v84
  %360 = vmatpush1.msra.mxu0 %v83
  %361 = vmatprep.subr.mxu0 %v86
  %362 = vmatpush1.msra.mxu0 %v85
  %363 = vmatprep.subr.mxu0 %v88
  %364 = vmatpush1.msra.mxu0 %v87
  %365 = vmatprep.subr.mxu0 %v90
  %366 = vmatpush1.msra.mxu0 %v89
  %367 = vmatprep.subr.mxu0 %v92
  %368 = vmatpush1.msra.mxu0 %v91
  %369 = vmatprep.subr.mxu0 %v94
  %370 = vmatpush1.msra.mxu0 %v93
  %371 = vmatprep.subr.mxu0 %v96
  %372 = vmatpush1.msra.mxu0 %v95
  %373 = vmatprep.subr.mxu0 %v98
  %374 = vmatpush1.msra.mxu0 %v97
  %375 = vmatprep.subr.mxu0 %v100
  %376 = vmatpush1.msra.mxu0 %v99
  %377 = vmatprep.subr.mxu0 %v102
  %378 = vmatpush1.msra.mxu0 %v101
  %379 = vmatprep.subr.mxu0 %v104
  %380 = vmatpush1.msra.mxu0 %v103
  %381 = vmatprep.subr.mxu0 %v106
  %382 = vmatpush1.msra.mxu0 %v105
  %383 = vmatprep.subr.mxu0 %v108
  %384 = vmatpush1.msra.mxu0 %v107
  %385 = vmatprep.subr.mxu0 %v110
  %386 = vmatpush1.msra.mxu0 %v109
  %387 = vmatprep.subr.mxu0 %v112
  %388 = vmatpush1.msra.mxu0 %v111
  %389 = vmatprep.subr.mxu0 %v114
  %390 = vmatpush1.msra.mxu0 %v113
  %391 = vmatprep.subr.mxu0 %v116
  %392 = vmatpush1.msra.mxu0 %v115
  %393 = vmatprep.mubr.f32.mxu0 %v326
  %394 = vmatmul.mubr.f32.gmra.mrb[0].mxu0 %v325
  %v395 = vpop.f32.mrb[0].mxu0
  %v396 = vadd.f32 0.0, %v395
  %v397 = vpop.f32.mrb[0].mxu0
  %v398 = vadd.f32 0.0, %v397
  %399 = vdwg.mxu0
  %v402 = vcombine.low %v396, %v398
  %v404 = vunpack.c.l.s4 1983009808
  %v405 = vunpack.c.0.s8 %v404
  %v406 = vlaneseq
  %v407 = vshrl.u32 %v406, 7
  %v408 = vsub.s32 %v405, %v407
  %v409 = vrot.slane %v402, %v408
  %v411 = vsub.f32 %v317, %v409
  %v412 = vld [vmem:[%s9] sm:$0xff]
  %v413 = vld [vmem:[%s9 + $0x8] sm:$0xff]
  %v414 = vld [vmem:[%s9 + $0x10] sm:$0xff]
  %v415 = vld [vmem:[%s9 + $0x18] sm:$0xff]
  %v416 = vld [vmem:[%s9 + $0x20] sm:$0xff]
  %v417 = vld [vmem:[%s9 + $0x28] sm:$0xff]
  %v418 = vld [vmem:[%s9 + $0x30] sm:$0xff]
  %v419 = vld [vmem:[%s9 + $0x38] sm:$0xff]
  %v420 = vld [vmem:[%s9 + $0x40] sm:$0xff]
  %v421 = vld [vmem:[%s9 + $0x48] sm:$0xff]
  %v422 = vld [vmem:[%s9 + $0x50] sm:$0xff]
  %v423 = vld [vmem:[%s9 + $0x58] sm:$0xff]
  %v424 = vld [vmem:[%s9 + $0x60] sm:$0xff]
  %v425 = vld [vmem:[%s9 + $0x68] sm:$0xff]
  %v426 = vld [vmem:[%s9 + $0x70] sm:$0xff]
  %v427 = vld [vmem:[%s9 + $0x78] sm:$0xff]
  %v428 = vld [vmem:[%s9 + $0x80] sm:$0xff]
  %v429 = vld [vmem:[%s9 + $0x88] sm:$0xff]
  %v430 = vld [vmem:[%s9 + $0x90] sm:$0xff]
  %v431 = vld [vmem:[%s9 + $0x98] sm:$0xff]
  %v432 = vld [vmem:[%s9 + $0xa0] sm:$0xff]
  %v433 = vld [vmem:[%s9 + $0xa8] sm:$0xff]
  %v434 = vld [vmem:[%s9 + $0xb0] sm:$0xff]
  %v435 = vld [vmem:[%s9 + $0xb8] sm:$0xff]
  %v436 = vld [vmem:[%s9 + $0xc0] sm:$0xff]
  %v437 = vld [vmem:[%s9 + $0xc8] sm:$0xff]
  %v438 = vld [vmem:[%s9 + $0xd0] sm:$0xff]
  %v439 = vld [vmem:[%s9 + $0xd8] sm:$0xff]
  %v440 = vld [vmem:[%s9 + $0xe0] sm:$0xff]
  %v441 = vld [vmem:[%s9 + $0xe8] sm:$0xff]
  %v442 = vld [vmem:[%s9 + $0xf0] sm:$0xff]
  %v443 = vld [vmem:[%s9 + $0xf8] sm:$0xff]
  %v444 = vld [vmem:[%s9 + $0x100] sm:$0xff]
  %v445 = vld [vmem:[%s9 + $0x108] sm:$0xff]
  %v446 = vld [vmem:[%s9 + $0x110] sm:$0xff]
  %v447 = vld [vmem:[%s9 + $0x118] sm:$0xff]
  %v448 = vld [vmem:[%s9 + $0x120] sm:$0xff]
  %v449 = vld [vmem:[%s9 + $0x128] sm:$0xff]
  %v450 = vld [vmem:[%s9 + $0x130] sm:$0xff]
  %v451 = vld [vmem:[%s9 + $0x138] sm:$0xff]
  %v452 = vld [vmem:[%s9 + $0x140] sm:$0xff]
  %v453 = vld [vmem:[%s9 + $0x148] sm:$0xff]
  %v454 = vld [vmem:[%s9 + $0x150] sm:$0xff]
  %v455 = vld [vmem:[%s9 + $0x158] sm:$0xff]
  %v456 = vld [vmem:[%s9 + $0x160] sm:$0xff]
  %v457 = vld [vmem:[%s9 + $0x168] sm:$0xff]
  %v458 = vld [vmem:[%s9 + $0x170] sm:$0xff]
  %v459 = vld [vmem:[%s9 + $0x178] sm:$0xff]
  %v460 = vld [vmem:[%s9 + $0x180] sm:$0xff]
  %v461 = vld [vmem:[%s9 + $0x188] sm:$0xff]
  %v462 = vld [vmem:[%s9 + $0x190] sm:$0xff]
  %v463 = vld [vmem:[%s9 + $0x198] sm:$0xff]
  %v464 = vld [vmem:[%s9 + $0x1a0] sm:$0xff]
  %v465 = vld [vmem:[%s9 + $0x1a8] sm:$0xff]
  %v466 = vld [vmem:[%s9 + $0x1b0] sm:$0xff]
  %v467 = vld [vmem:[%s9 + $0x1b8] sm:$0xff]
  %v468 = vld [vmem:[%s9 + $0x1c0] sm:$0xff]
  %v469 = vld [vmem:[%s9 + $0x1c8] sm:$0xff]
  %v470 = vld [vmem:[%s9 + $0x1d0] sm:$0xff]
  %v471 = vld [vmem:[%s9 + $0x1d8] sm:$0xff]
  %v472 = vld [vmem:[%s9 + $0x1e0] sm:$0xff]
  %v473 = vld [vmem:[%s9 + $0x1e8] sm:$0xff]
  %v474 = vld [vmem:[%s9 + $0x1f0] sm:$0xff]
  %v475 = vld [vmem:[%s9 + $0x1f8] sm:$0xff]
  %v476 = vld [vmem:[%s9 + $0x200] sm:$0xff]
  %v477 = vld [vmem:[%s9 + $0x208] sm:$0xff]
  %v478 = vld [vmem:[%s9 + $0x210] sm:$0xff]
  %v479 = vld [vmem:[%s9 + $0x218] sm:$0xff]
  %v480 = vld [vmem:[%s9 + $0x220] sm:$0xff]
  %v481 = vld [vmem:[%s9 + $0x228] sm:$0xff]
  %v482 = vld [vmem:[%s9 + $0x230] sm:$0xff]
  %v483 = vld [vmem:[%s9 + $0x238] sm:$0xff]
  %v484 = vld [vmem:[%s9 + $0x240] sm:$0xff]
  %v485 = vld [vmem:[%s9 + $0x248] sm:$0xff]
  %v486 = vld [vmem:[%s9 + $0x250] sm:$0xff]
  %v487 = vld [vmem:[%s9 + $0x258] sm:$0xff]
  %v488 = vld [vmem:[%s9 + $0x260] sm:$0xff]
  %v489 = vld [vmem:[%s9 + $0x268] sm:$0xff]
  %v490 = vld [vmem:[%s9 + $0x270] sm:$0xff]
  %v491 = vld [vmem:[%s9 + $0x278] sm:$0xff]
  %v492 = vld [vmem:[%s9 + $0x280] sm:$0xff]
  %v493 = vld [vmem:[%s9 + $0x288] sm:$0xff]
  %v494 = vld [vmem:[%s9 + $0x290] sm:$0xff]
  %v495 = vld [vmem:[%s9 + $0x298] sm:$0xff]
  %v496 = vld [vmem:[%s9 + $0x2a0] sm:$0xff]
  %v497 = vld [vmem:[%s9 + $0x2a8] sm:$0xff]
  %v498 = vld [vmem:[%s9 + $0x2b0] sm:$0xff]
  %v499 = vld [vmem:[%s9 + $0x2b8] sm:$0xff]
  %v500 = vld [vmem:[%s9 + $0x2c0] sm:$0xff]
  %v501 = vld [vmem:[%s9 + $0x2c8] sm:$0xff]
  %v502 = vld [vmem:[%s9 + $0x2d0] sm:$0xff]
  %v503 = vld [vmem:[%s9 + $0x2d8] sm:$0xff]
  %v504 = vld [vmem:[%s9 + $0x2e0] sm:$0xff]
  %v505 = vld [vmem:[%s9 + $0x2e8] sm:$0xff]
  %v506 = vld [vmem:[%s9 + $0x2f0] sm:$0xff]
  %v507 = vld [vmem:[%s9 + $0x2f8] sm:$0xff]
  %v508 = vld [vmem:[%s9 + $0x300] sm:$0xff]
  %v509 = vld [vmem:[%s9 + $0x308] sm:$0xff]
  %v510 = vld [vmem:[%s9 + $0x310] sm:$0xff]
  %v511 = vld [vmem:[%s9 + $0x318] sm:$0xff]
  %v512 = vld [vmem:[%s9 + $0x320] sm:$0xff]
  %v513 = vld [vmem:[%s9 + $0x328] sm:$0xff]
  %v514 = vld [vmem:[%s9 + $0x330] sm:$0xff]
  %v515 = vld [vmem:[%s9 + $0x338] sm:$0xff]
  %v516 = vld [vmem:[%s9 + $0x340] sm:$0xff]
  %v517 = vld [vmem:[%s9 + $0x348] sm:$0xff]
  %v518 = vld [vmem:[%s9 + $0x350] sm:$0xff]
  %v519 = vld [vmem:[%s9 + $0x358] sm:$0xff]
  %v520 = vld [vmem:[%s9 + $0x360] sm:$0xff]
  %v521 = vld [vmem:[%s9 + $0x368] sm:$0xff]
  %v522 = vld [vmem:[%s9 + $0x370] sm:$0xff]
  %v523 = vld [vmem:[%s9 + $0x378] sm:$0xff]
  %v524 = vld [vmem:[%s9 + $0x380] sm:$0xff]
  %v525 = vld [vmem:[%s9 + $0x388] sm:$0xff]
  %v526 = vld [vmem:[%s9 + $0x390] sm:$0xff]
  %v527 = vld [vmem:[%s9 + $0x398] sm:$0xff]
  %v528 = vld [vmem:[%s9 + $0x3a0] sm:$0xff]
  %v529 = vld [vmem:[%s9 + $0x3a8] sm:$0xff]
  %v530 = vld [vmem:[%s9 + $0x3b0] sm:$0xff]
  %v531 = vld [vmem:[%s9 + $0x3b8] sm:$0xff]
  %v532 = vld [vmem:[%s9 + $0x3c0] sm:$0xff]
  %v533 = vld [vmem:[%s9 + $0x3c8] sm:$0xff]
  %v534 = vld [vmem:[%s9 + $0x3d0] sm:$0xff]
  %v535 = vld [vmem:[%s9 + $0x3d8] sm:$0xff]
  %v536 = vld [vmem:[%s9 + $0x3e0] sm:$0xff]
  %v537 = vld [vmem:[%s9 + $0x3e8] sm:$0xff]
  %v538 = vld [vmem:[%s9 + $0x3f0] sm:$0xff]
  %v539 = vld [vmem:[%s9 + $0x3f8] sm:$0xff]
  %v542 = vunpack.c.l.s4 1983009808
  %v543 = vunpack.c.0.s8 %v542
  %v544 = vlaneseq
  %v545 = vshrl.u32 %v544, 7
  %v546 = vsub.s32 %v543, %v545
  %v547 = vrot.slane %v411, %v546
  %v548 = vcombine.high %v547, %v547
  %551 = vmatprep.subr.mxu0 %v413
  %552 = vmatpush1.msra.mxu0 %v412
  %553 = vmatprep.subr.mxu0 %v417
  %554 = vmatpush1.msra.mxu0 %v416
  %555 = vmatprep.subr.mxu0 %v421
  %556 = vmatpush1.msra.mxu0 %v420
  %557 = vmatprep.subr.mxu0 %v425
  %558 = vmatpush1.msra.mxu0 %v424
  %559 = vmatprep.subr.mxu0 %v429
  %560 = vmatpush1.msra.mxu0 %v428
  %561 = vmatprep.subr.mxu0 %v433
  %562 = vmatpush1.msra.mxu0 %v432
  %563 = vmatprep.subr.mxu0 %v437
  %564 = vmatpush1.msra.mxu0 %v436
  %565 = vmatprep.subr.mxu0 %v441
  %566 = vmatpush1.msra.mxu0 %v440
  %567 = vmatprep.subr.mxu0 %v445
  %568 = vmatpush1.msra.mxu0 %v444
  %569 = vmatprep.subr.mxu0 %v449
  %570 = vmatpush1.msra.mxu0 %v448
  %571 = vmatprep.subr.mxu0 %v453
  %572 = vmatpush1.msra.mxu0 %v452
  %573 = vmatprep.subr.mxu0 %v457
  %574 = vmatpush1.msra.mxu0 %v456
  %575 = vmatprep.subr.mxu0 %v461
  %576 = vmatpush1.msra.mxu0 %v460
  %577 = vmatprep.subr.mxu0 %v465
  %578 = vmatpush1.msra.mxu0 %v464
  %579 = vmatprep.subr.mxu0 %v469
  %580 = vmatpush1.msra.mxu0 %v468
  %581 = vmatprep.subr.mxu0 %v473
  %582 = vmatpush1.msra.mxu0 %v472
  %583 = vmatprep.subr.mxu0 %v477
  %584 = vmatpush1.msra.mxu0 %v476
  %585 = vmatprep.subr.mxu0 %v481
  %586 = vmatpush1.msra.mxu0 %v480
  %587 = vmatprep.subr.mxu0 %v485
  %588 = vmatpush1.msra.mxu0 %v484
  %589 = vmatprep.subr.mxu0 %v489
  %590 = vmatpush1.msra.mxu0 %v488
  %591 = vmatprep.subr.mxu0 %v493
  %592 = vmatpush1.msra.mxu0 %v492
  %593 = vmatprep.subr.mxu0 %v497
  %594 = vmatpush1.msra.mxu0 %v496
  %595 = vmatprep.subr.mxu0 %v501
  %596 = vmatpush1.msra.mxu0 %v500
  %597 = vmatprep.subr.mxu0 %v505
  %598 = vmatpush1.msra.mxu0 %v504
  %599 = vmatprep.subr.mxu0 %v509
  %600 = vmatpush1.msra.mxu0 %v508
  %601 = vmatprep.subr.mxu0 %v513
  %602 = vmatpush1.msra.mxu0 %v512
  %603 = vmatprep.subr.mxu0 %v517
  %604 = vmatpush1.msra.mxu0 %v516
  %605 = vmatprep.subr.mxu0 %v521
  %606 = vmatpush1.msra.mxu0 %v520
  %607 = vmatprep.subr.mxu0 %v525
  %608 = vmatpush1.msra.mxu0 %v524
  %609 = vmatprep.subr.mxu0 %v529
  %610 = vmatpush1.msra.mxu0 %v528
  %611 = vmatprep.subr.mxu0 %v533
  %612 = vmatpush1.msra.mxu0 %v532
  %613 = vmatprep.subr.mxu0 %v537
  %614 = vmatpush1.msra.mxu0 %v536
  %615 = vmatprep.mubr.f32.mxu0 %v548
  %616 = vmatmul.mubr.f32.gmra.mrb[0].mxu0 %v547
  %v617 = vpop.f32.mrb[0].mxu0
  %v618 = vadd.f32 0.0, %v617
  %v619 = vpop.f32.mrb[0].mxu0
  %v620 = vadd.f32 0.0, %v619
  %621 = vdwg.mxu0
  %622 = vmatprep.subr.mxu0 %v415
  %623 = vmatpush1.msra.mxu0 %v414
  %624 = vmatprep.subr.mxu0 %v419
  %625 = vmatpush1.msra.mxu0 %v418
  %626 = vmatprep.subr.mxu0 %v423
  %627 = vmatpush1.msra.mxu0 %v422
  %628 = vmatprep.subr.mxu0 %v427
  %629 = vmatpush1.msra.mxu0 %v426
  %630 = vmatprep.subr.mxu0 %v431
  %631 = vmatpush1.msra.mxu0 %v430
  %632 = vmatprep.subr.mxu0 %v435
  %633 = vmatpush1.msra.mxu0 %v434
  %634 = vmatprep.subr.mxu0 %v439
  %635 = vmatpush1.msra.mxu0 %v438
  %636 = vmatprep.subr.mxu0 %v443
  %637 = vmatpush1.msra.mxu0 %v442
  %638 = vmatprep.subr.mxu0 %v447
  %639 = vmatpush1.msra.mxu0 %v446
  %640 = vmatprep.subr.mxu0 %v451
  %641 = vmatpush1.msra.mxu0 %v450
  %642 = vmatprep.subr.mxu0 %v455
  %643 = vmatpush1.msra.mxu0 %v454
  %644 = vmatprep.subr.mxu0 %v459
  %645 = vmatpush1.msra.mxu0 %v458
  %646 = vmatprep.subr.mxu0 %v463
  %647 = vmatpush1.msra.mxu0 %v462
  %648 = vmatprep.subr.mxu0 %v467
  %649 = vmatpush1.msra.mxu0 %v466
  %650 = vmatprep.subr.mxu0 %v471
  %651 = vmatpush1.msra.mxu0 %v470
  %652 = vmatprep.subr.mxu0 %v475
  %653 = vmatpush1.msra.mxu0 %v474
  %654 = vmatprep.subr.mxu0 %v479
  %655 = vmatpush1.msra.mxu0 %v478
  %656 = vmatprep.subr.mxu0 %v483
  %657 = vmatpush1.msra.mxu0 %v482
  %658 = vmatprep.subr.mxu0 %v487
  %659 = vmatpush1.msra.mxu0 %v486
  %660 = vmatprep.subr.mxu0 %v491
  %661 = vmatpush1.msra.mxu0 %v490
  %662 = vmatprep.subr.mxu0 %v495
  %663 = vmatpush1.msra.mxu0 %v494
  %664 = vmatprep.subr.mxu0 %v499
  %665 = vmatpush1.msra.mxu0 %v498
  %666 = vmatprep.subr.mxu0 %v503
  %667 = vmatpush1.msra.mxu0 %v502
  %668 = vmatprep.subr.mxu0 %v507
  %669 = vmatpush1.msra.mxu0 %v506
  %670 = vmatprep.subr.mxu0 %v511
  %671 = vmatpush1.msra.mxu0 %v510
  %672 = vmatprep.subr.mxu0 %v515
  %673 = vmatpush1.msra.mxu0 %v514
  %674 = vmatprep.subr.mxu0 %v519
  %675 = vmatpush1.msra.mxu0 %v518
  %676 = vmatprep.subr.mxu0 %v523
  %677 = vmatpush1.msra.mxu0 %v522
  %678 = vmatprep.subr.mxu0 %v527
  %679 = vmatpush1.msra.mxu0 %v526
  %680 = vmatprep.subr.mxu0 %v531
  %681 = vmatpush1.msra.mxu0 %v530
  %682 = vmatprep.subr.mxu0 %v535
  %683 = vmatpush1.msra.mxu0 %v534
  %684 = vmatprep.subr.mxu0 %v539
  %685 = vmatpush1.msra.mxu0 %v538
  %686 = vmatprep.mubr.f32.mxu0 %v548
  %687 = vmatmul.mubr.f32.gmra.mrb[0].mxu0 %v547
  %v688 = vpop.f32.mrb[0].mxu0
  %v689 = vadd.f32 0.0, %v688
  %v690 = vpop.f32.mrb[0].mxu0
  %v691 = vadd.f32 0.0, %v690
  %692 = vdwg.mxu0
  %v693 = vmax.f32 %v618, 0.0
  %v694 = vmax.f32 %v620, 0.0
  %v695 = vmax.f32 %v689, 0.0
  %v696 = vmax.f32 %v691, 0.0
  %v697 = vld [vmem:[%s10] sm:$0xff]
  %v698 = vld [vmem:[%s10 + $0x8] sm:$0xff]
  %v699 = vld [vmem:[%s10 + $0x10] sm:$0xff]
  %v700 = vld [vmem:[%s10 + $0x18] sm:$0xff]
  %v701 = vld [vmem:[%s10 + $0x20] sm:$0xff]
  %v702 = vld [vmem:[%s10 + $0x28] sm:$0xff]
  %v703 = vld [vmem:[%s10 + $0x30] sm:$0xff]
  %v704 = vld [vmem:[%s10 + $0x38] sm:$0xff]
  %v705 = vld [vmem:[%s10 + $0x40] sm:$0xff]
  %v706 = vld [vmem:[%s10 + $0x48] sm:$0xff]
  %v707 = vld [vmem:[%s10 + $0x50] sm:$0xff]
  %v708 = vld [vmem:[%s10 + $0x58] sm:$0xff]
  %v709 = vld [vmem:[%s10 + $0x60] sm:$0xff]
  %v710 = vld [vmem:[%s10 + $0x68] sm:$0xff]
  %v711 = vld [vmem:[%s10 + $0x70] sm:$0xff]
  %v712 = vld [vmem:[%s10 + $0x78] sm:$0xff]
  %v713 = vld [vmem:[%s10 + $0x80] sm:$0xff]
  %v714 = vld [vmem:[%s10 + $0x88] sm:$0xff]
  %v715 = vld [vmem:[%s10 + $0x90] sm:$0xff]
  %v716 = vld [vmem:[%s10 + $0x98] sm:$0xff]
  %v717 = vld [vmem:[%s10 + $0xa0] sm:$0xff]
  %v718 = vld [vmem:[%s10 + $0xa8] sm:$0xff]
  %v719 = vld [vmem:[%s10 + $0xb0] sm:$0xff]
  %v720 = vld [vmem:[%s10 + $0xb8] sm:$0xff]
  %v721 = vld [vmem:[%s10 + $0xc0] sm:$0xff]
  %v722 = vld [vmem:[%s10 + $0xc8] sm:$0xff]
  %v723 = vld [vmem:[%s10 + $0xd0] sm:$0xff]
  %v724 = vld [vmem:[%s10 + $0xd8] sm:$0xff]
  %v725 = vld [vmem:[%s10 + $0xe0] sm:$0xff]
  %v726 = vld [vmem:[%s10 + $0xe8] sm:$0xff]
  %v727 = vld [vmem:[%s10 + $0xf0] sm:$0xff]
  %v728 = vld [vmem:[%s10 + $0xf8] sm:$0xff]
  %v729 = vld [vmem:[%s10 + $0x100] sm:$0xff]
  %v730 = vld [vmem:[%s10 + $0x108] sm:$0xff]
  %v731 = vld [vmem:[%s10 + $0x110] sm:$0xff]
  %v732 = vld [vmem:[%s10 + $0x118] sm:$0xff]
  %v733 = vld [vmem:[%s10 + $0x120] sm:$0xff]
  %v734 = vld [vmem:[%s10 + $0x128] sm:$0xff]
  %v735 = vld [vmem:[%s10 + $0x130] sm:$0xff]
  %v736 = vld [vmem:[%s10 + $0x138] sm:$0xff]
  %v737 = vld [vmem:[%s10 + $0x140] sm:$0xff]
  %v738 = vld [vmem:[%s10 + $0x148] sm:$0xff]
  %v739 = vld [vmem:[%s10 + $0x150] sm:$0xff]
  %v740 = vld [vmem:[%s10 + $0x158] sm:$0xff]
  %v741 = vld [vmem:[%s10 + $0x160] sm:$0xff]
  %v742 = vld [vmem:[%s10 + $0x168] sm:$0xff]
  %v743 = vld [vmem:[%s10 + $0x170] sm:$0xff]
  %v744 = vld [vmem:[%s10 + $0x178] sm:$0xff]
  %v745 = vld [vmem:[%s10 + $0x180] sm:$0xff]
  %v746 = vld [vmem:[%s10 + $0x188] sm:$0xff]
  %v747 = vld [vmem:[%s10 + $0x190] sm:$0xff]
  %v748 = vld [vmem:[%s10 + $0x198] sm:$0xff]
  %v749 = vld [vmem:[%s10 + $0x1a0] sm:$0xff]
  %v750 = vld [vmem:[%s10 + $0x1a8] sm:$0xff]
  %v751 = vld [vmem:[%s10 + $0x1b0] sm:$0xff]
  %v752 = vld [vmem:[%s10 + $0x1b8] sm:$0xff]
  %v753 = vld [vmem:[%s10 + $0x1c0] sm:$0xff]
  %v754 = vld [vmem:[%s10 + $0x1c8] sm:$0xff]
  %v755 = vld [vmem:[%s10 + $0x1d0] sm:$0xff]
  %v756 = vld [vmem:[%s10 + $0x1d8] sm:$0xff]
  %v757 = vld [vmem:[%s10 + $0x1e0] sm:$0xff]
  %v758 = vld [vmem:[%s10 + $0x1e8] sm:$0xff]
  %v759 = vld [vmem:[%s10 + $0x1f0] sm:$0xff]
  %v760 = vld [vmem:[%s10 + $0x1f8] sm:$0xff]
  %v761 = vld [vmem:[%s10 + $0x200] sm:$0xff]
  %v762 = vld [vmem:[%s10 + $0x208] sm:$0xff]
  %v763 = vld [vmem:[%s10 + $0x210] sm:$0xff]
  %v764 = vld [vmem:[%s10 + $0x218] sm:$0xff]
  %v765 = vld [vmem:[%s10 + $0x220] sm:$0xff]
  %v766 = vld [vmem:[%s10 + $0x228] sm:$0xff]
  %v767 = vld [vmem:[%s10 + $0x230] sm:$0xff]
  %v768 = vld [vmem:[%s10 + $0x238] sm:$0xff]
  %v769 = vld [vmem:[%s10 + $0x240] sm:$0xff]
  %v770 = vld [vmem:[%s10 + $0x248] sm:$0xff]
  %v771 = vld [vmem:[%s10 + $0x250] sm:$0xff]
  %v772 = vld [vmem:[%s10 + $0x258] sm:$0xff]
  %v773 = vld [vmem:[%s10 + $0x260] sm:$0xff]
  %v774 = vld [vmem:[%s10 + $0x268] sm:$0xff]
  %v775 = vld [vmem:[%s10 + $0x270] sm:$0xff]
  %v776 = vld [vmem:[%s10 + $0x278] sm:$0xff]
  %v777 = vld [vmem:[%s10 + $0x280] sm:$0xff]
  %v778 = vld [vmem:[%s10 + $0x288] sm:$0xff]
  %v779 = vld [vmem:[%s10 + $0x290] sm:$0xff]
  %v780 = vld [vmem:[%s10 + $0x298] sm:$0xff]
  %v781 = vld [vmem:[%s10 + $0x2a0] sm:$0xff]
  %v782 = vld [vmem:[%s10 + $0x2a8] sm:$0xff]
  %v783 = vld [vmem:[%s10 + $0x2b0] sm:$0xff]
  %v784 = vld [vmem:[%s10 + $0x2b8] sm:$0xff]
  %v785 = vld [vmem:[%s10 + $0x2c0] sm:$0xff]
  %v786 = vld [vmem:[%s10 + $0x2c8] sm:$0xff]
  %v787 = vld [vmem:[%s10 + $0x2d0] sm:$0xff]
  %v788 = vld [vmem:[%s10 + $0x2d8] sm:$0xff]
  %v789 = vld [vmem:[%s10 + $0x2e0] sm:$0xff]
  %v790 = vld [vmem:[%s10 + $0x2e8] sm:$0xff]
  %v791 = vld [vmem:[%s10 + $0x2f0] sm:$0xff]
  %v792 = vld [vmem:[%s10 + $0x2f8] sm:$0xff]
  %v793 = vld [vmem:[%s10 + $0x300] sm:$0xff]
  %v794 = vld [vmem:[%s10 + $0x308] sm:$0xff]
  %v795 = vld [vmem:[%s10 + $0x310] sm:$0xff]
  %v796 = vld [vmem:[%s10 + $0x318] sm:$0xff]
  %v797 = vld [vmem:[%s10 + $0x320] sm:$0xff]
  %v798 = vld [vmem:[%s10 + $0x328] sm:$0xff]
  %v799 = vld [vmem:[%s10 + $0x330] sm:$0xff]
  %v800 = vld [vmem:[%s10 + $0x338] sm:$0xff]
  %v801 = vld [vmem:[%s10 + $0x340] sm:$0xff]
  %v802 = vld [vmem:[%s10 + $0x348] sm:$0xff]
  %v803 = vld [vmem:[%s10 + $0x350] sm:$0xff]
  %v804 = vld [vmem:[%s10 + $0x358] sm:$0xff]
  %v805 = vld [vmem:[%s10 + $0x360] sm:$0xff]
  %v806 = vld [vmem:[%s10 + $0x368] sm:$0xff]
  %v807 = vld [vmem:[%s10 + $0x370] sm:$0xff]
  %v808 = vld [vmem:[%s10 + $0x378] sm:$0xff]
  %v809 = vld [vmem:[%s10 + $0x380] sm:$0xff]
  %v810 = vld [vmem:[%s10 + $0x388] sm:$0xff]
  %v811 = vld [vmem:[%s10 + $0x390] sm:$0xff]
  %v812 = vld [vmem:[%s10 + $0x398] sm:$0xff]
  %v813 = vld [vmem:[%s10 + $0x3a0] sm:$0xff]
  %v814 = vld [vmem:[%s10 + $0x3a8] sm:$0xff]
  %v815 = vld [vmem:[%s10 + $0x3b0] sm:$0xff]
  %v816 = vld [vmem:[%s10 + $0x3b8] sm:$0xff]
  %v817 = vld [vmem:[%s10 + $0x3c0] sm:$0xff]
  %v818 = vld [vmem:[%s10 + $0x3c8] sm:$0xff]
  %v819 = vld [vmem:[%s10 + $0x3d0] sm:$0xff]
  %v820 = vld [vmem:[%s10 + $0x3d8] sm:$0xff]
  %v821 = vld [vmem:[%s10 + $0x3e0] sm:$0xff]
  %v822 = vld [vmem:[%s10 + $0x3e8] sm:$0xff]
  %v823 = vld [vmem:[%s10 + $0x3f0] sm:$0xff]
  %v824 = vld [vmem:[%s10 + $0x3f8] sm:$0xff]
  %825 = vmatprep.subr.mxu0 %v698
  %826 = vmatpush1.msra.mxu0 %v697
  %827 = vmatprep.subr.mxu0 %v700
  %828 = vmatpush1.msra.mxu0 %v699
  %829 = vmatprep.subr.mxu0 %v702
  %830 = vmatpush1.msra.mxu0 %v701
  %831 = vmatprep.subr.mxu0 %v704
  %832 = vmatpush1.msra.mxu0 %v703
  %833 = vmatprep.subr.mxu0 %v706
  %834 = vmatpush1.msra.mxu0 %v705
  %835 = vmatprep.subr.mxu0 %v708
  %836 = vmatpush1.msra.mxu0 %v707
  %837 = vmatprep.subr.mxu0 %v710
  %838 = vmatpush1.msra.mxu0 %v709
  %839 = vmatprep.subr.mxu0 %v712
  %840 = vmatpush1.msra.mxu0 %v711
  %841 = vmatprep.subr.mxu0 %v714
  %842 = vmatpush1.msra.mxu0 %v713
  %843 = vmatprep.subr.mxu0 %v716
  %844 = vmatpush1.msra.mxu0 %v715
  %845 = vmatprep.subr.mxu0 %v718
  %846 = vmatpush1.msra.mxu0 %v717
  %847 = vmatprep.subr.mxu0 %v720
  %848 = vmatpush1.msra.mxu0 %v719
  %849 = vmatprep.subr.mxu0 %v722
  %850 = vmatpush1.msra.mxu0 %v721
  %851 = vmatprep.subr.mxu0 %v724
  %852 = vmatpush1.msra.mxu0 %v723
  %853 = vmatprep.subr.mxu0 %v726
  %854 = vmatpush1.msra.mxu0 %v725
  %855 = vmatprep.subr.mxu0 %v728
  %856 = vmatpush1.msra.mxu0 %v727
  %857 = vmatprep.subr.mxu0 %v730
  %858 = vmatpush1.msra.mxu0 %v729
  %859 = vmatprep.subr.mxu0 %v732
  %860 = vmatpush1.msra.mxu0 %v731
  %861 = vmatprep.subr.mxu0 %v734
  %862 = vmatpush1.msra.mxu0 %v733
  %863 = vmatprep.subr.mxu0 %v736
  %864 = vmatpush1.msra.mxu0 %v735
  %865 = vmatprep.subr.mxu0 %v738
  %866 = vmatpush1.msra.mxu0 %v737
  %867 = vmatprep.subr.mxu0 %v740
  %868 = vmatpush1.msra.mxu0 %v739
  %869 = vmatprep.subr.mxu0 %v742
  %870 = vmatpush1.msra.mxu0 %v741
  %871 = vmatprep.subr.mxu0 %v744
  %872 = vmatpush1.msra.mxu0 %v743
  %873 = vmatprep.subr.mxu0 %v746
  %874 = vmatpush1.msra.mxu0 %v745
  %875 = vmatprep.subr.mxu0 %v748
  %876 = vmatpush1.msra.mxu0 %v747
  %877 = vmatprep.subr.mxu0 %v750
  %878 = vmatpush1.msra.mxu0 %v749
  %879 = vmatprep.subr.mxu0 %v752
  %880 = vmatpush1.msra.mxu0 %v751
  %881 = vmatprep.subr.mxu0 %v754
  %882 = vmatpush1.msra.mxu0 %v753
  %883 = vmatprep.subr.mxu0 %v756
  %884 = vmatpush1.msra.mxu0 %v755
  %885 = vmatprep.subr.mxu0 %v758
  %886 = vmatpush1.msra.mxu0 %v757
  %887 = vmatprep.subr.mxu0 %v760
  %888 = vmatpush1.msra.mxu0 %v759
  %889 = vmatprep.mubr.f32.mxu0 %v694
  %890 = vmatmul.mubr.f32.gmra.mrb[0].mxu0 %v693
  %v891 = vpop.f32.mrb[0].mxu0
  %v892 = vadd.f32 0.0, %v891
  %v893 = vpop.f32.mrb[0].mxu0
  %v894 = vadd.f32 0.0, %v893
  %895 = vdwg.mxu0
  %896 = vmatprep.subr.mxu0 %v762
  %897 = vmatpush1.msra.mxu0 %v761
  %898 = vmatprep.subr.mxu0 %v764
  %899 = vmatpush1.msra.mxu0 %v763
  %900 = vmatprep.subr.mxu0 %v766
  %901 = vmatpush1.msra.mxu0 %v765
  %902 = vmatprep.subr.mxu0 %v768
  %903 = vmatpush1.msra.mxu0 %v767
  %904 = vmatprep.subr.mxu0 %v770
  %905 = vmatpush1.msra.mxu0 %v769
  %906 = vmatprep.subr.mxu0 %v772
  %907 = vmatpush1.msra.mxu0 %v771
  %908 = vmatprep.subr.mxu0 %v774
  %909 = vmatpush1.msra.mxu0 %v773
  %910 = vmatprep.subr.mxu0 %v776
  %911 = vmatpush1.msra.mxu0 %v775
  %912 = vmatprep.subr.mxu0 %v778
  %913 = vmatpush1.msra.mxu0 %v777
  %914 = vmatprep.subr.mxu0 %v780
  %915 = vmatpush1.msra.mxu0 %v779
  %916 = vmatprep.subr.mxu0 %v782
  %917 = vmatpush1.msra.mxu0 %v781
  %918 = vmatprep.subr.mxu0 %v784
  %919 = vmatpush1.msra.mxu0 %v783
  %920 = vmatprep.subr.mxu0 %v786
  %921 = vmatpush1.msra.mxu0 %v785
  %922 = vmatprep.subr.mxu0 %v788
  %923 = vmatpush1.msra.mxu0 %v787
  %924 = vmatprep.subr.mxu0 %v790
  %925 = vmatpush1.msra.mxu0 %v789
  %926 = vmatprep.subr.mxu0 %v792
  %927 = vmatpush1.msra.mxu0 %v791
  %928 = vmatprep.subr.mxu0 %v794
  %929 = vmatpush1.msra.mxu0 %v793
  %930 = vmatprep.subr.mxu0 %v796
  %931 = vmatpush1.msra.mxu0 %v795
  %932 = vmatprep.subr.mxu0 %v798
  %933 = vmatpush1.msra.mxu0 %v797
  %934 = vmatprep.subr.mxu0 %v800
  %935 = vmatpush1.msra.mxu0 %v799
  %936 = vmatprep.subr.mxu0 %v802
  %937 = vmatpush1.msra.mxu0 %v801
  %938 = vmatprep.subr.mxu0 %v804
  %939 = vmatpush1.msra.mxu0 %v803
  %940 = vmatprep.subr.mxu0 %v806
  %941 = vmatpush1.msra.mxu0 %v805
  %942 = vmatprep.subr.mxu0 %v808
  %943 = vmatpush1.msra.mxu0 %v807
  %944 = vmatprep.subr.mxu0 %v810
  %945 = vmatpush1.msra.mxu0 %v809
  %946 = vmatprep.subr.mxu0 %v812
  %947 = vmatpush1.msra.mxu0 %v811
  %948 = vmatprep.subr.mxu0 %v814
  %949 = vmatpush1.msra.mxu0 %v813
  %950 = vmatprep.subr.mxu0 %v816
  %951 = vmatpush1.msra.mxu0 %v815
  %952 = vmatprep.subr.mxu0 %v818
  %953 = vmatpush1.msra.mxu0 %v817
  %954 = vmatprep.subr.mxu0 %v820
  %955 = vmatpush1.msra.mxu0 %v819
  %956 = vmatprep.subr.mxu0 %v822
  %957 = vmatpush1.msra.mxu0 %v821
  %958 = vmatprep.subr.mxu0 %v824
  %959 = vmatpush1.msra.mxu0 %v823
  %960 = vmatprep.mubr.f32.mxu0 %v696
  %961 = vmatmul.mubr.f32.gmra.mrb[0].mxu0 %v695
  %v962 = vpop.f32.mrb[0].mxu0
  %v963 = vadd.f32 %v892, %v962
  %v964 = vpop.f32.mrb[0].mxu0
  %v965 = vadd.f32 %v894, %v964
  %966 = vdwg.mxu0
  %v969 = vcombine.low %v963, %v965
  %v971 = vunpack.c.l.s4 1983009808
  %v972 = vunpack.c.0.s8 %v971
  %v973 = vlaneseq
  %v974 = vshrl.u32 %v973, 7
  %v975 = vsub.s32 %v972, %v974
  %v976 = vrot.slane %v969, %v975
  %v978 = vadd.f32 %v411, %v976
  %v981 = vunpack.c.l.s4 1983009808
  %v982 = vunpack.c.0.s8 %v981
  %v983 = vlaneseq
  %v984 = vshrl.u32 %v983, 7
  %v985 = vsub.s32 %v982, %v984
  %v986 = vrot.slane %v978, %v985
  %v987 = vcombine.high %v986, %v986
  %990 = vmatprep.subr.mxu0 %v54
  %991 = vmatpush1.msra.mxu0 %v53
  %992 = vmatprep.subr.mxu0 %v56
  %993 = vmatpush1.msra.mxu0 %v55
  %994 = vmatprep.subr.mxu0 %v58
  %995 = vmatpush1.msra.mxu0 %v57
  %996 = vmatprep.subr.mxu0 %v60
  %997 = vmatpush1.msra.mxu0 %v59
  %998 = vmatprep.subr.mxu0 %v62
  %999 = vmatpush1.msra.mxu0 %v61
  %1000 = vmatprep.subr.mxu0 %v64
  %1001 = vmatpush1.msra.mxu0 %v63
  %1002 = vmatprep.subr.mxu0 %v66
  %1003 = vmatpush1.msra.mxu0 %v65
  %1004 = vmatprep.subr.mxu0 %v68
  %1005 = vmatpush1.msra.mxu0 %v67
  %1006 = vmatprep.subr.mxu0 %v70
  %1007 = vmatpush1.msra.mxu0 %v69
  %1008 = vmatprep.subr.mxu0 %v72
  %1009 = vmatpush1.msra.mxu0 %v71
  %1010 = vmatprep.subr.mxu0 %v74
  %1011 = vmatpush1.msra.mxu0 %v73
  %1012 = vmatprep.subr.mxu0 %v76
  %1013 = vmatpush1.msra.mxu0 %v75
  %1014 = vmatprep.subr.mxu0 %v78
  %1015 = vmatpush1.msra.mxu0 %v77
  %1016 = vmatprep.subr.mxu0 %v80
  %1017 = vmatpush1.msra.mxu0 %v79
  %1018 = vmatprep.subr.mxu0 %v82
  %1019 = vmatpush1.msra.mxu0 %v81
  %1020 = vmatprep.subr.mxu0 %v84
  %1021 = vmatpush1.msra.mxu0 %v83
  %1022 = vmatprep.subr.mxu0 %v86
  %1023 = vmatpush1.msra.mxu0 %v85
  %1024 = vmatprep.subr.mxu0 %v88
  %1025 = vmatpush1.msra.mxu0 %v87
  %1026 = vmatprep.subr.mxu0 %v90
  %1027 = vmatpush1.msra.mxu0 %v89
  %1028 = vmatprep.subr.mxu0 %v92
  %1029 = vmatpush1.msra.mxu0 %v91
  %1030 = vmatprep.subr.mxu0 %v94
  %1031 = vmatpush1.msra.mxu0 %v93
  %1032 = vmatprep.subr.mxu0 %v96
  %1033 = vmatpush1.msra.mxu0 %v95
  %1034 = vmatprep.subr.mxu0 %v98
  %1035 = vmatpush1.msra.mxu0 %v97
  %1036 = vmatprep.subr.mxu0 %v100
  %1037 = vmatpush1.msra.mxu0 %v99
  %1038 = vmatprep.subr.mxu0 %v102
  %1039 = vmatpush1.msra.mxu0 %v101
  %1040 = vmatprep.subr.mxu0 %v104
  %1041 = vmatpush1.msra.mxu0 %v103
  %1042 = vmatprep.subr.mxu0 %v106
  %1043 = vmatpush1.msra.mxu0 %v105
  %1044 = vmatprep.subr.mxu0 %v108
  %1045 = vmatpush1.msra.mxu0 %v107
  %1046 = vmatprep.subr.mxu0 %v110
  %1047 = vmatpush1.msra.mxu0 %v109
  %1048 = vmatprep.subr.mxu0 %v112
  %1049 = vmatpush1.msra.mxu0 %v111
  %1050 = vmatprep.subr.mxu0 %v114
  %1051 = vmatpush1.msra.mxu0 %v113
  %1052 = vmatprep.subr.mxu0 %v116
  %1053 = vmatpush1.msra.mxu0 %v115
  %1054 = vmatprep.mubr.f32.mxu0 %v987
  %1055 = vmatmul.mubr.f32.gmra.mrb[0].mxu0 %v986
  %v1056 = vpop.f32.mrb[0].mxu0
  %v1057 = vadd.f32 0.0, %v1056
  %v1058 = vpop.f32.mrb[0].mxu0
  %v1059 = vadd.f32 0.0, %v1058
  %1060 = vdwg.mxu0
  %v1063 = vcombine.low %v1057, %v1059
  %v1065 = vunpack.c.l.s4 1983009808
  %v1066 = vunpack.c.0.s8 %v1065
  %v1067 = vlaneseq
  %v1068 = vshrl.u32 %v1067, 7
  %v1069 = vsub.s32 %v1066, %v1068
  %v1070 = vrot.slane %v1063, %v1069
  %v1072 = vsub.f32 %v978, %v1070
  %v1073 = vld [vmem:[%s2] sm:$0xf]
  %v1074 = vadd.f32 %v1073, %v409
  %v1075 = vadd.f32 %v1074, %v1070
  %v1076 = vld [vmem:[%s11] sm:$0xff]
  %v1077 = vld [vmem:[%s11 + $0x8] sm:$0xff]
  %v1078 = vld [vmem:[%s11 + $0x10] sm:$0xff]
  %v1079 = vld [vmem:[%s11 + $0x18] sm:$0xff]
  %v1080 = vld [vmem:[%s11 + $0x20] sm:$0xff]
  %v1081 = vld [vmem:[%s11 + $0x28] sm:$0xff]
  %v1082 = vld [vmem:[%s11 + $0x30] sm:$0xff]
  %v1083 = vld [vmem:[%s11 + $0x38] sm:$0xff]
  %v1084 = vld [vmem:[%s11 + $0x40] sm:$0xff]
  %v1085 = vld [vmem:[%s11 + $0x48] sm:$0xff]
  %v1086 = vld [vmem:[%s11 + $0x50] sm:$0xff]
  %v1087 = vld [vmem:[%s11 + $0x58] sm:$0xff]
  %v1088 = vld [vmem:[%s11 + $0x60] sm:$0xff]
  %v1089 = vld [vmem:[%s11 + $0x68] sm:$0xff]
  %v1090 = vld [vmem:[%s11 + $0x70] sm:$0xff]
  %v1091 = vld [vmem:[%s11 + $0x78] sm:$0xff]
  %v1092 = vld [vmem:[%s11 + $0x80] sm:$0xff]
  %v1093 = vld [vmem:[%s11 + $0x88] sm:$0xff]
  %v1094 = vld [vmem:[%s11 + $0x90] sm:$0xff]
  %v1095 = vld [vmem:[%s11 + $0x98] sm:$0xff]
  %v1096 = vld [vmem:[%s11 + $0xa0] sm:$0xff]
  %v1097 = vld [vmem:[%s11 + $0xa8] sm:$0xff]
  %v1098 = vld [vmem:[%s11 + $0xb0] sm:$0xff]
  %v1099 = vld [vmem:[%s11 + $0xb8] sm:$0xff]
  %v1100 = vld [vmem:[%s11 + $0xc0] sm:$0xff]
  %v1101 = vld [vmem:[%s11 + $0xc8] sm:$0xff]
  %v1102 = vld [vmem:[%s11 + $0xd0] sm:$0xff]
  %v1103 = vld [vmem:[%s11 + $0xd8] sm:$0xff]
  %v1104 = vld [vmem:[%s11 + $0xe0] sm:$0xff]
  %v1105 = vld [vmem:[%s11 + $0xe8] sm:$0xff]
  %v1106 = vld [vmem:[%s11 + $0xf0] sm:$0xff]
  %v1107 = vld [vmem:[%s11 + $0xf8] sm:$0xff]
  %v1110 = vunpack.c.l.s4 1983009808
  %v1111 = vunpack.c.0.s8 %v1110
  %v1112 = vlaneseq
  %v1113 = vshrl.u32 %v1112, 7
  %v1114 = vsub.s32 %v1111, %v1113
  %v1115 = vrot.slane %v1075, %v1114
  %v1116 = vcombine.high %v1115, %v1115
  %1119 = vmatprep.subr.mxu0 0.0
  %1120 = vmatpush1.msra.mxu0 %v1076
  %1121 = vmatprep.subr.mxu0 0.0
  %1122 = vmatpush1.msra.mxu0 %v1077
  %1123 = vmatprep.subr.mxu0 0.0
  %1124 = vmatpush1.msra.mxu0 %v1078
  %1125 = vmatprep.subr.mxu0 0.0
  %1126 = vmatpush1.msra.mxu0 %v1079
  %1127 = vmatprep.subr.mxu0 0.0
  %1128 = vmatpush1.msra.mxu0 %v1080
  %1129 = vmatprep.subr.mxu0 0.0
  %1130 = vmatpush1.msra.mxu0 %v1081
  %1131 = vmatprep.subr.mxu0 0.0
  %1132 = vmatpush1.msra.mxu0 %v1082
  %1133 = vmatprep.subr.mxu0 0.0
  %1134 = vmatpush1.msra.mxu0 %v1083
  %1135 = vmatprep.subr.mxu0 0.0
  %1136 = vmatpush1.msra.mxu0 %v1084
  %1137 = vmatprep.subr.mxu0 0.0
  %1138 = vmatpush1.msra.mxu0 %v1085
  %1139 = vmatprep.subr.mxu0 0.0
  %1140 = vmatpush1.msra.mxu0 %v1086
  %1141 = vmatprep.subr.mxu0 0.0
  %1142 = vmatpush1.msra.mxu0 %v1087
  %1143 = vmatprep.subr.mxu0 0.0
  %1144 = vmatpush1.msra.mxu0 %v1088
  %1145 = vmatprep.subr.mxu0 0.0
  %1146 = vmatpush1.msra.mxu0 %v1089
  %1147 = vmatprep.subr.mxu0 0.0
  %1148 = vmatpush1.msra.mxu0 %v1090
  %1149 = vmatprep.subr.mxu0 0.0
  %1150 = vmatpush1.msra.mxu0 %v1091
  %1151 = vmatprep.subr.mxu0 0.0
  %1152 = vmatpush1.msra.mxu0 %v1092
  %1153 = vmatprep.subr.mxu0 0.0
  %1154 = vmatpush1.msra.mxu0 %v1093
  %1155 = vmatprep.subr.mxu0 0.0
  %1156 = vmatpush1.msra.mxu0 %v1094
  %1157 = vmatprep.subr.mxu0 0.0
  %1158 = vmatpush1.msra.mxu0 %v1095
  %1159 = vmatprep.subr.mxu0 0.0
  %1160 = vmatpush1.msra.mxu0 %v1096
  %1161 = vmatprep.subr.mxu0 0.0
  %1162 = vmatpush1.msra.mxu0 %v1097
  %1163 = vmatprep.subr.mxu0 0.0
  %1164 = vmatpush1.msra.mxu0 %v1098
  %1165 = vmatprep.subr.mxu0 0.0
  %1166 = vmatpush1.msra.mxu0 %v1099
  %1167 = vmatprep.subr.mxu0 0.0
  %1168 = vmatpush1.msra.mxu0 %v1100
  %1169 = vmatprep.subr.mxu0 0.0
  %1170 = vmatpush1.msra.mxu0 %v1101
  %1171 = vmatprep.subr.mxu0 0.0
  %1172 = vmatpush1.msra.mxu0 %v1102
  %1173 = vmatprep.subr.mxu0 0.0
  %1174 = vmatpush1.msra.mxu0 %v1103
  %1175 = vmatprep.subr.mxu0 0.0
  %1176 = vmatpush1.msra.mxu0 %v1104
  %1177 = vmatprep.subr.mxu0 0.0
  %1178 = vmatpush1.msra.mxu0 %v1105
  %1179 = vmatprep.subr.mxu0 0.0
  %1180 = vmatpush1.msra.mxu0 %v1106
  %1181 = vmatprep.subr.mxu0 0.0
  %1182 = vmatpush1.msra.mxu0 %v1107
  %1183 = vmatprep.mubr.f32.mxu0 %v1116
  %1184 = vmatmul.mubr.f32.gmra.mrb[0].mxu0 %v1115
  %v1185 = vpop.f32.mrb[0].mxu0
  %v1186 = vadd.f32 0.0, %v1185
  %v1187 = vpop.f32.mrb[0].mxu0
  %1188 = vdwg.mxu0
  %v1189 = vld [vmem:[%s3] sm:$0x3]
  %v1190 = vadd.f32 %v1189, %v1186
  %v1193 = vunpack.c.l.s4 1983009808
  %v1194 = vunpack.c.0.s8 %v1193
  %v1195 = vlaneseq
  %v1196 = vshrl.u32 %v1195, 7
  %v1197 = vsub.s32 %v1194, %v1196
  %v1198 = vrot.slane %v1072, %v1197
  %v1199 = vcombine.high %v1198, %v1198
  %1202 = vmatprep.subr.mxu0 %v118
  %1203 = vmatpush1.msra.mxu0 %v117
  %1204 = vmatprep.subr.mxu0 %v120
  %1205 = vmatpush1.msra.mxu0 %v119
  %1206 = vmatprep.subr.mxu0 %v122
  %1207 = vmatpush1.msra.mxu0 %v121
  %1208 = vmatprep.subr.mxu0 %v124
  %1209 = vmatpush1.msra.mxu0 %v123
  %1210 = vmatprep.subr.mxu0 %v126
  %1211 = vmatpush1.msra.mxu0 %v125
  %1212 = vmatprep.subr.mxu0 %v128
  %1213 = vmatpush1.msra.mxu0 %v127
  %1214 = vmatprep.subr.mxu0 %v130
  %1215 = vmatpush1.msra.mxu0 %v129
  %1216 = vmatprep.subr.mxu0 %v132
  %1217 = vmatpush1.msra.mxu0 %v131
  %1218 = vmatprep.subr.mxu0 %v134
  %1219 = vmatpush1.msra.mxu0 %v133
  %1220 = vmatprep.subr.mxu0 %v136
  %1221 = vmatpush1.msra.mxu0 %v135
  %1222 = vmatprep.subr.mxu0 %v138
  %1223 = vmatpush1.msra.mxu0 %v137
  %1224 = vmatprep.subr.mxu0 %v140
  %1225 = vmatpush1.msra.mxu0 %v139
  %1226 = vmatprep.subr.mxu0 %v142
  %1227 = vmatpush1.msra.mxu0 %v141
  %1228 = vmatprep.subr.mxu0 %v144
  %1229 = vmatpush1.msra.mxu0 %v143
  %1230 = vmatprep.subr.mxu0 %v146
  %1231 = vmatpush1.msra.mxu0 %v145
  %1232 = vmatprep.subr.mxu0 %v148
  %1233 = vmatpush1.msra.mxu0 %v147
  %1234 = vmatprep.subr.mxu0 %v150
  %1235 = vmatpush1.msra.mxu0 %v149
  %1236 = vmatprep.subr.mxu0 %v152
  %1237 = vmatpush1.msra.mxu0 %v151
  %1238 = vmatprep.subr.mxu0 %v154
  %1239 = vmatpush1.msra.mxu0 %v153
  %1240 = vmatprep.subr.mxu0 %v156
  %1241 = vmatpush1.msra.mxu0 %v155
  %1242 = vmatprep.subr.mxu0 %v158
  %1243 = vmatpush1.msra.mxu0 %v157
  %1244 = vmatprep.subr.mxu0 %v160
  %1245 = vmatpush1.msra.mxu0 %v159
  %1246 = vmatprep.subr.mxu0 %v162
  %1247 = vmatpush1.msra.mxu0 %v161
  %1248 = vmatprep.subr.mxu0 %v164
  %1249 = vmatpush1.msra.mxu0 %v163
  %1250 = vmatprep.subr.mxu0 %v166
  %1251 = vmatpush1.msra.mxu0 %v165
  %1252 = vmatprep.subr.mxu0 %v168
  %1253 = vmatpush1.msra.mxu0 %v167
  %1254 = vmatprep.subr.mxu0 %v170
  %1255 = vmatpush1.msra.mxu0 %v169
  %1256 = vmatprep.subr.mxu0 %v172
  %1257 = vmatpush1.msra.mxu0 %v171
  %1258 = vmatprep.subr.mxu0 %v174
  %1259 = vmatpush1.msra.mxu0 %v173
  %1260 = vmatprep.subr.mxu0 %v176
  %1261 = vmatpush1.msra.mxu0 %v175
  %1262 = vmatprep.subr.mxu0 %v178
  %1263 = vmatpush1.msra.mxu0 %v177
  %1264 = vmatprep.subr.mxu0 %v180
  %1265 = vmatpush1.msra.mxu0 %v179
  %1266 = vmatprep.mubr.f32.mxu0 %v1199
  %1267 = vmatmul.mubr.f32.gmra.mrb[0].mxu0 %v1198
  %v1268 = vpop.f32.mrb[0].mxu0
  %v1269 = vadd.f32 0.0, %v1268
  %v1270 = vpop.f32.mrb[0].mxu0
  %v1271 = vadd.f32 0.0, %v1270
  %1272 = vdwg.mxu0
  %v1275 = vcombine.low %v1269, %v1271
  %v1277 = vunpack.c.l.s4 1983009808
  %v1278 = vunpack.c.0.s8 %v1277
  %v1279 = vlaneseq
  %v1280 = vshrl.u32 %v1279, 7
  %v1281 = vsub.s32 %v1278, %v1280
  %v1282 = vrot.slane %v1275, %v1281
  %v1284 = vsub.f32 %v1072, %v1282
  %v1285 = vmul.f32 %v1284, %v1284
  %v1288 = vunpack.c.l.s4 1983009808
  %v1289 = vunpack.c.0.s8 %v1288
  %v1290 = vlaneseq
  %v1291 = vshrl.u32 %v1290, 7
  %v1292 = vsub.s32 %v1289, %v1291
  %v1293 = vrot.slane %v1285, %v1292
  %v1294 = vcombine.high %v1293, %v1293
  %1297 = vmatprep.subr.mxu0 %v118
  %1298 = vmatpush1.msra.mxu0 %v117
  %1299 = vmatprep.subr.mxu0 %v120
  %1300 = vmatpush1.msra.mxu0 %v119
  %1301 = vmatprep.subr.mxu0 %v122
  %1302 = vmatpush1.msra.mxu0 %v121
  %1303 = vmatprep.subr.mxu0 %v124
  %1304 = vmatpush1.msra.mxu0 %v123
  %1305 = vmatprep.subr.mxu0 %v126
  %1306 = vmatpush1.msra.mxu0 %v125
  %1307 = vmatprep.subr.mxu0 %v128
  %1308 = vmatpush1.msra.mxu0 %v127
  %1309 = vmatprep.subr.mxu0 %v130
  %1310 = vmatpush1.msra.mxu0 %v129
  %1311 = vmatprep.subr.mxu0 %v132
  %1312 = vmatpush1.msra.mxu0 %v131
  %1313 = vmatprep.subr.mxu0 %v134
  %1314 = vmatpush1.msra.mxu0 %v133
  %1315 = vmatprep.subr.mxu0 %v136
  %1316 = vmatpush1.msra.mxu0 %v135
  %1317 = vmatprep.subr.mxu0 %v138
  %1318 = vmatpush1.msra.mxu0 %v137
  %1319 = vmatprep.subr.mxu0 %v140
  %1320 = vmatpush1.msra.mxu0 %v139
  %1321 = vmatprep.subr.mxu0 %v142
  %1322 = vmatpush1.msra.mxu0 %v141
  %1323 = vmatprep.subr.mxu0 %v144
  %1324 = vmatpush1.msra.mxu0 %v143
  %1325 = vmatprep.subr.mxu0 %v146
  %1326 = vmatpush1.msra.mxu0 %v145
  %1327 = vmatprep.subr.mxu0 %v148
  %1328 = vmatpush1.msra.mxu0 %v147
  %1329 = vmatprep.subr.mxu0 %v150
  %1330 = vmatpush1.msra.mxu0 %v149
  %1331 = vmatprep.subr.mxu0 %v152
  %1332 = vmatpush1.msra.mxu0 %v151
  %1333 = vmatprep.subr.mxu0 %v154
  %1334 = vmatpush1.msra.mxu0 %v153
  %1335 = vmatprep.subr.mxu0 %v156
  %1336 = vmatpush1.msra.mxu0 %v155
  %1337 = vmatprep.subr.mxu0 %v158
  %1338 = vmatpush1.msra.mxu0 %v157
  %1339 = vmatprep.subr.mxu0 %v160
  %1340 = vmatpush1.msra.mxu0 %v159
  %1341 = vmatprep.subr.mxu0 %v162
  %1342 = vmatpush1.msra.mxu0 %v161
  %1343 = vmatprep.subr.mxu0 %v164
  %1344 = vmatpush1.msra.mxu0 %v163
  %1345 = vmatprep.subr.mxu0 %v166
  %1346 = vmatpush1.msra.mxu0 %v165
  %1347 = vmatprep.subr.mxu0 %v168
  %1348 = vmatpush1.msra.mxu0 %v167
  %1349 = vmatprep.subr.mxu0 %v170
  %1350 = vmatpush1.msra.mxu0 %v169
  %1351 = vmatprep.subr.mxu0 %v172
  %1352 = vmatpush1.msra.mxu0 %v171
  %1353 = vmatprep.subr.mxu0 %v174
  %1354 = vmatpush1.msra.mxu0 %v173
  %1355 = vmatprep.subr.mxu0 %v176
  %1356 = vmatpush1.msra.mxu0 %v175
  %1357 = vmatprep.subr.mxu0 %v178
  %1358 = vmatpush1.msra.mxu0 %v177
  %1359 = vmatprep.subr.mxu0 %v180
  %1360 = vmatpush1.msra.mxu0 %v179
  %1361 = vmatprep.mubr.f32.mxu0 %v1294
  %1362 = vmatmul.mubr.f32.gmra.mrb[0].mxu0 %v1293
  %v1363 = vpop.f32.mrb[0].mxu0
  %v1364 = vadd.f32 1e-05, %v1363
  %v1365 = vpop.f32.mrb[0].mxu0
  %v1366 = vadd.f32 1e-05, %v1365
  %1367 = vdwg.mxu0
  %v1368 = vrsqrt.pop %v1364
  %v1369 = vrsqrt.pop %v1366
  %v1372 = vcombine.low %v1368, %v1369
  %v1374 = vunpack.c.l.s4 1983009808
  %v1375 = vunpack.c.0.s8 %v1374
  %v1376 = vlaneseq
  %v1377 = vshrl.u32 %v1376, 7
  %v1378 = vsub.s32 %v1375, %v1377
  %v1379 = vrot.slane %v1372, %v1378
  %v1381 = vmul.f32 %v1284, %v1379
  %v1382 = vld [vmem:[%s12] sm:$0x3]
  %v1384 = vlaneseq
  %v1385 = vshrl.u32 %v1384, 7
  %v1386 = vsub.s32 0, %v1385
  %v1387 = vrot.slane %v1382, %v1386
  %v1388 = vlaneseq
  %v1389 = vshrl.u32 %v1388, 7
  %v1390 = vsub.s32 1, %v1389
  %v1391 = vrot.slane %v1382, %v1390
  %v1392 = vcombine.low %v1387, %v1391
  %v1394 = vunpack.c.l.s4 1983009808
  %v1395 = vunpack.c.0.s8 %v1394
  %v1396 = vlaneseq
  %v1397 = vshrl.u32 %v1396, 7
  %v1398 = vsub.s32 %v1395, %v1397
  %v1399 = vrot.slane %v1392, %v1398
  %v1401 = vmul.f32 %v1381, %v1399
  %v1402 = vld [vmem:[%s13] sm:$0x3]
  %v1404 = vlaneseq
  %v1405 = vshrl.u32 %v1404, 7
  %v1406 = vsub.s32 0, %v1405
  %v1407 = vrot.slane %v1402, %v1406
  %v1408 = vlaneseq
  %v1409 = vshrl.u32 %v1408, 7
  %v1410 = vsub.s32 1, %v1409
  %v1411 = vrot.slane %v1402, %v1410
  %v1412 = vcombine.low %v1407, %v1411
  %v1414 = vunpack.c.l.s4 1983009808
  %v1415 = vunpack.c.0.s8 %v1414
  %v1416 = vlaneseq
  %v1417 = vshrl.u32 %v1416, 7
  %v1418 = vsub.s32 %v1415, %v1417
  %v1419 = vrot.slane %v1412, %v1418
  %v1421 = vadd.f32 %v1401, %v1419
  %v1422 = vld [vmem:[%s8] sm:$0xff]
  %v1423 = vld [vmem:[%s8 + $0x8] sm:$0xff]
  %v1424 = vld [vmem:[%s8 + $0x10] sm:$0xff]
  %v1425 = vld [vmem:[%s8 + $0x18] sm:$0xff]
  %v1426 = vld [vmem:[%s8 + $0x20] sm:$0xff]
  %v1427 = vld [vmem:[%s8 + $0x28] sm:$0xff]
  %v1428 = vld [vmem:[%s8 + $0x30] sm:$0xff]
  %v1429 = vld [vmem:[%s8 + $0x38] sm:$0xff]
  %v1430 = vld [vmem:[%s8 + $0x40] sm:$0xff]
  %v1431 = vld [vmem:[%s8 + $0x48] sm:$0xff]
  %v1432 = vld [vmem:[%s8 + $0x50] sm:$0xff]
  %v1433 = vld [vmem:[%s8 + $0x58] sm:$0xff]
  %v1434 = vld [vmem:[%s8 + $0x60] sm:$0xff]
  %v1435 = vld [vmem:[%s8 + $0x68] sm:$0xff]
  %v1436 = vld [vmem:[%s8 + $0x70] sm:$0xff]
  %v1437 = vld [vmem:[%s8 + $0x78] sm:$0xff]
  %v1438 = vld [vmem:[%s8 + $0x80] sm:$0xff]
  %v1439 = vld [vmem:[%s8 + $0x88] sm:$0xff]
  %v1440 = vld [vmem:[%s8 + $0x90] sm:$0xff]
  %v1441 = vld [vmem:[%s8 + $0x98] sm:$0xff]
  %v1442 = vld [vmem:[%s8 + $0xa0] sm:$0xff]
  %v1443 = vld [vmem:[%s8 + $0xa8] sm:$0xff]
  %v1444 = vld [vmem:[%s8 + $0xb0] sm:$0xff]
  %v1445 = vld [vmem:[%s8 + $0xb8] sm:$0xff]
  %v1446 = vld [vmem:[%s8 + $0xc0] sm:$0xff]
  %v1447 = vld [vmem:[%s8 + $0xc8] sm:$0xff]
  %v1448 = vld [vmem:[%s8 + $0xd0] sm:$0xff]
  %v1449 = vld [vmem:[%s8 + $0xd8] sm:$0xff]
  %v1450 = vld [vmem:[%s8 + $0xe0] sm:$0xff]
  %v1451 = vld [vmem:[%s8 + $0xe8] sm:$0xff]
  %v1452 = vld [vmem:[%s8 + $0xf0] sm:$0xff]
  %v1453 = vld [vmem:[%s8 + $0xf8] sm:$0xff]
  %v1454 = vld [vmem:[%s8 + $0x100] sm:$0xff]
  %v1455 = vld [vmem:[%s8 + $0x108] sm:$0xff]
  %v1456 = vld [vmem:[%s8 + $0x110] sm:$0xff]
  %v1457 = vld [vmem:[%s8 + $0x118] sm:$0xff]
  %v1458 = vld [vmem:[%s8 + $0x120] sm:$0xff]
  %v1459 = vld [vmem:[%s8 + $0x128] sm:$0xff]
  %v1460 = vld [vmem:[%s8 + $0x130] sm:$0xff]
  %v1461 = vld [vmem:[%s8 + $0x138] sm:$0xff]
  %v1462 = vld [vmem:[%s8 + $0x140] sm:$0xff]
  %v1463 = vld [vmem:[%s8 + $0x148] sm:$0xff]
  %v1464 = vld [vmem:[%s8 + $0x150] sm:$0xff]
  %v1465 = vld [vmem:[%s8 + $0x158] sm:$0xff]
  %v1466 = vld [vmem:[%s8 + $0x160] sm:$0xff]
  %v1467 = vld [vmem:[%s8 + $0x168] sm:$0xff]
  %v1468 = vld [vmem:[%s8 + $0x170] sm:$0xff]
  %v1469 = vld [vmem:[%s8 + $0x178] sm:$0xff]
  %v1470 = vld [vmem:[%s8 + $0x180] sm:$0xff]
  %v1471 = vld [vmem:[%s8 + $0x188] sm:$0xff]
  %v1472 = vld [vmem:[%s8 + $0x190] sm:$0xff]
  %v1473 = vld [vmem:[%s8 + $0x198] sm:$0xff]
  %v1474 = vld [vmem:[%s8 + $0x1a0] sm:$0xff]
  %v1475 = vld [vmem:[%s8 + $0x1a8] sm:$0xff]
  %v1476 = vld [vmem:[%s8 + $0x1b0] sm:$0xff]
  %v1477 = vld [vmem:[%s8 + $0x1b8] sm:$0xff]
  %v1478 = vld [vmem:[%s8 + $0x1c0] sm:$0xff]
  %v1479 = vld [vmem:[%s8 + $0x1c8] sm:$0xff]
  %v1480 = vld [vmem:[%s8 + $0x1d0] sm:$0xff]
  %v1481 = vld [vmem:[%s8 + $0x1d8] sm:$0xff]
  %v1482 = vld [vmem:[%s8 + $0x1e0] sm:$0xff]
  %v1483 = vld [vmem:[%s8 + $0x1e8] sm:$0xff]
  %v1484 = vld [vmem:[%s8 + $0x1f0] sm:$0xff]
  %v1485 = vld [vmem:[%s8 + $0x1f8] sm:$0xff]
  %v1488 = vunpack.c.l.s4 1983009808
  %v1489 = vunpack.c.0.s8 %v1488
  %v1490 = vlaneseq
  %v1491 = vshrl.u32 %v1490, 7
  %v1492 = vsub.s32 %v1489, %v1491
  %v1493 = vrot.slane %v1421, %v1492
  %v1494 = vcombine.high %v1493, %v1493
  %1497 = vmatprep.subr.mxu0 %v1423
  %1498 = vmatpush1.msra.mxu0 %v1422
  %1499 = vmatprep.subr.mxu0 %v1425
  %1500 = vmatpush1.msra.mxu0 %v1424
  %1501 = vmatprep.subr.mxu0 %v1427
  %1502 = vmatpush1.msra.mxu0 %v1426
  %1503 = vmatprep.subr.mxu0 %v1429
  %1504 = vmatpush1.msra.mxu0 %v1428
  %1505 = vmatprep.subr.mxu0 %v1431
  %1506 = vmatpush1.msra.mxu0 %v1430
  %1507 = vmatprep.subr.mxu0 %v1433
  %1508 = vmatpush1.msra.mxu0 %v1432
  %1509 = vmatprep.subr.mxu0 %v1435
  %1510 = vmatpush1.msra.mxu0 %v1434
  %1511 = vmatprep.subr.mxu0 %v1437
  %1512 = vmatpush1.msra.mxu0 %v1436
  %1513 = vmatprep.subr.mxu0 %v1439
  %1514 = vmatpush1.msra.mxu0 %v1438
  %1515 = vmatprep.subr.mxu0 %v1441
  %1516 = vmatpush1.msra.mxu0 %v1440
  %1517 = vmatprep.subr.mxu0 %v1443
  %1518 = vmatpush1.msra.mxu0 %v1442
  %1519 = vmatprep.subr.mxu0 %v1445
  %1520 = vmatpush1.msra.mxu0 %v1444
  %1521 = vmatprep.subr.mxu0 %v1447
  %1522 = vmatpush1.msra.mxu0 %v1446
  %1523 = vmatprep.subr.mxu0 %v1449
  %1524 = vmatpush1.msra.mxu0 %v1448
  %1525 = vmatprep.subr.mxu0 %v1451
  %1526 = vmatpush1.msra.mxu0 %v1450
  %1527 = vmatprep.subr.mxu0 %v1453
  %1528 = vmatpush1.msra.mxu0 %v1452
  %1529 = vmatprep.subr.mxu0 %v1455
  %1530 = vmatpush1.msra.mxu0 %v1454
  %1531 = vmatprep.subr.mxu0 %v1457
  %1532 = vmatpush1.msra.mxu0 %v1456
  %1533 = vmatprep.subr.mxu0 %v1459
  %1534 = vmatpush1.msra.mxu0 %v1458
  %1535 = vmatprep.subr.mxu0 %v1461
  %1536 = vmatpush1.msra.mxu0 %v1460
  %1537 = vmatprep.subr.mxu0 %v1463
  %1538 = vmatpush1.msra.mxu0 %v1462
  %1539 = vmatprep.subr.mxu0 %v1465
  %1540 = vmatpush1.msra.mxu0 %v1464
  %1541 = vmatprep.subr.mxu0 %v1467
  %1542 = vmatpush1.msra.mxu0 %v1466
  %1543 = vmatprep.subr.mxu0 %v1469
  %1544 = vmatpush1.msra.mxu0 %v1468
  %1545 = vmatprep.subr.mxu0 %v1471
  %1546 = vmatpush1.msra.mxu0 %v1470
  %1547 = vmatprep.subr.mxu0 %v1473
  %1548 = vmatpush1.msra.mxu0 %v1472
  %1549 = vmatprep.subr.mxu0 %v1475
  %1550 = vmatpush1.msra.mxu0 %v1474
  %1551 = vmatprep.subr.mxu0 %v1477
  %1552 = vmatpush1.msra.mxu0 %v1476
  %1553 = vmatprep.subr.mxu0 %v1479
  %1554 = vmatpush1.msra.mxu0 %v1478
  %1555 = vmatprep.subr.mxu0 %v1481
  %1556 = vmatpush1.msra.mxu0 %v1480
  %1557 = vmatprep.subr.mxu0 %v1483
  %1558 = vmatpush1.msra.mxu0 %v1482
  %1559 = vmatprep.subr.mxu0 %v1485
  %1560 = vmatpush1.msra.mxu0 %v1484
  %1561 = vmatprep.mubr.f32.mxu0 %v1494
  %1562 = vmatmul.mubr.f32.gmra.mrb[0].mxu0 %v1493
  %v1563 = vpop.f32.mrb[0].mxu0
  %v1564 = vadd.f32 0.0, %v1563
  %v1565 = vpop.f32.mrb[0].mxu0
  %v1566 = vadd.f32 0.0, %v1565
  %1567 = vdwg.mxu0
  %v1570 = vcombine.low %v1564, %v1566
  %v1572 = vunpack.c.l.s4 1983009808
  %v1573 = vunpack.c.0.s8 %v1572
  %v1574 = vlaneseq
  %v1575 = vshrl.u32 %v1574, 7
  %v1576 = vsub.s32 %v1573, %v1575
  %v1577 = vrot.slane %v1570, %v1576
  %v1579 = vsub.f32 %v1421, %v1577
  %v1580 = vld [vmem:[%s14] sm:$0xff]
  %v1581 = vld [vmem:[%s14 + $0x8] sm:$0xff]
  %v1582 = vld [vmem:[%s14 + $0x10] sm:$0xff]
  %v1583 = vld [vmem:[%s14 + $0x18] sm:$0xff]
  %v1584 = vld [vmem:[%s14 + $0x20] sm:$0xff]
  %v1585 = vld [vmem:[%s14 + $0x28] sm:$0xff]
  %v1586 = vld [vmem:[%s14 + $0x30] sm:$0xff]
  %v1587 = vld [vmem:[%s14 + $0x38] sm:$0xff]
  %v1588 = vld [vmem:[%s14 + $0x40] sm:$0xff]
  %v1589 = vld [vmem:[%s14 + $0x48] sm:$0xff]
  %v1590 = vld [vmem:[%s14 + $0x50] sm:$0xff]
  %v1591 = vld [vmem:[%s14 + $0x58] sm:$0xff]
  %v1592 = vld [vmem:[%s14 + $0x60] sm:$0xff]
  %v1593 = vld [vmem:[%s14 + $0x68] sm:$0xff]
  %v1594 = vld [vmem:[%s14 + $0x70] sm:$0xff]
  %v1595 = vld [vmem:[%s14 + $0x78] sm:$0xff]
  %v1596 = vld [vmem:[%s14 + $0x80] sm:$0xff]
  %v1597 = vld [vmem:[%s14 + $0x88] sm:$0xff]
  %v1598 = vld [vmem:[%s14 + $0x90] sm:$0xff]
  %v1599 = vld [vmem:[%s14 + $0x98] sm:$0xff]
  %v1600 = vld [vmem:[%s14 + $0xa0] sm:$0xff]
  %v1601 = vld [vmem:[%s14 + $0xa8] sm:$0xff]
  %v1602 = vld [vmem:[%s14 + $0xb0] sm:$0xff]
  %v1603 = vld [vmem:[%s14 + $0xb8] sm:$0xff]
  %v1604 = vld [vmem:[%s14 + $0xc0] sm:$0xff]
  %v1605 = vld [vmem:[%s14 + $0xc8] sm:$0xff]
  %v1606 = vld [vmem:[%s14 + $0xd0] sm:$0xff]
  %v1607 = vld [vmem:[%s14 + $0xd8] sm:$0xff]
  %v1608 = vld [vmem:[%s14 + $0xe0] sm:$0xff]
  %v1609 = vld [vmem:[%s14 + $0xe8] sm:$0xff]
  %v1610 = vld [vmem:[%s14 + $0xf0] sm:$0xff]
  %v1611 = vld [vmem:[%s14 + $0xf8] sm:$0xff]
  %v1612 = vld [vmem:[%s15] sm:$0x1]
  %v1614 = vlaneseq
  %v1615 = vshrl.u32 %v1614, 7
  %v1616 = vsub.s32 0, %v1615
  %v1617 = vrot.slane %v1612, %v1616
  %v1621 = vunpack.c.l.s4 1983009808
  %v1622 = vunpack.c.0.s8 %v1621
  %v1623 = vlaneseq
  %v1624 = vshrl.u32 %v1623, 7
  %v1625 = vsub.s32 %v1622, %v1624
  %v1626 = vrot.slane %v1579, %v1625
  %v1627 = vcombine.high %v1626, %v1626
  %1630 = vmatprep.subr.mxu0 0.0
  %1631 = vmatpush1.msra.mxu0 %v1580
  %1632 = vmatprep.subr.mxu0 0.0
  %1633 = vmatpush1.msra.mxu0 %v1581
  %1634 = vmatprep.subr.mxu0 0.0
  %1635 = vmatpush1.msra.mxu0 %v1582
  %1636 = vmatprep.subr.mxu0 0.0
  %1637 = vmatpush1.msra.mxu0 %v1583
  %1638 = vmatprep.subr.mxu0 0.0
  %1639 = vmatpush1.msra.mxu0 %v1584
  %1640 = vmatprep.subr.mxu0 0.0
  %1641 = vmatpush1.msra.mxu0 %v1585
  %1642 = vmatprep.subr.mxu0 0.0
  %1643 = vmatpush1.msra.mxu0 %v1586
  %1644 = vmatprep.subr.mxu0 0.0
  %1645 = vmatpush1.msra.mxu0 %v1587
  %1646 = vmatprep.subr.mxu0 0.0
  %1647 = vmatpush1.msra.mxu0 %v1588
  %1648 = vmatprep.subr.mxu0 0.0
  %1649 = vmatpush1.msra.mxu0 %v1589
  %1650 = vmatprep.subr.mxu0 0.0
  %1651 = vmatpush1.msra.mxu0 %v1590
  %1652 = vmatprep.subr.mxu0 0.0
  %1653 = vmatpush1.msra.mxu0 %v1591
  %1654 = vmatprep.subr.mxu0 0.0
  %1655 = vmatpush1.msra.mxu0 %v1592
  %1656 = vmatprep.subr.mxu0 0.0
  %1657 = vmatpush1.msra.mxu0 %v1593
  %1658 = vmatprep.subr.mxu0 0.0
  %1659 = vmatpush1.msra.mxu0 %v1594
  %1660 = vmatprep.subr.mxu0 0.0
  %1661 = vmatpush1.msra.mxu0 %v1595
  %1662 = vmatprep.subr.mxu0 0.0
  %1663 = vmatpush1.msra.mxu0 %v1596
  %1664 = vmatprep.subr.mxu0 0.0
  %1665 = vmatpush1.msra.mxu0 %v1597
  %1666 = vmatprep.subr.mxu0 0.0
  %1667 = vmatpush1.msra.mxu0 %v1598
  %1668 = vmatprep.subr.mxu0 0.0
  %1669 = vmatpush1.msra.mxu0 %v1599
  %1670 = vmatprep.subr.mxu0 0.0
  %1671 = vmatpush1.msra.mxu0 %v1600
  %1672 = vmatprep.subr.mxu0 0.0
  %1673 = vmatpush1.msra.mxu0 %v1601
  %1674 = vmatprep.subr.mxu0 0.0
  %1675 = vmatpush1.msra.mxu0 %v1602
  %1676 = vmatprep.subr.mxu0 0.0
  %1677 = vmatpush1.msra.mxu0 %v1603
  %1678 = vmatprep.subr.mxu0 0.0
  %1679 = vmatpush1.msra.mxu0 %v1604
  %1680 = vmatprep.subr.mxu0 0.0
  %1681 = vmatpush1.msra.mxu0 %v1605
  %1682 = vmatprep.subr.mxu0 0.0
  %1683 = vmatpush1.msra.mxu0 %v1606
  %1684 = vmatprep.subr.mxu0 0.0
  %1685 = vmatpush1.msra.mxu0 %v1607
  %1686 = vmatprep.subr.mxu0 0.0
  %1687 = vmatpush1.msra.mxu0 %v1608
  %1688 = vmatprep.subr.mxu0 0.0
  %1689 = vmatpush1.msra.mxu0 %v1609
  %1690 = vmatprep.subr.mxu0 0.0
  %1691 = vmatpush1.msra.mxu0 %v1610
  %1692 = vmatprep.subr.mxu0 0.0
  %1693 = vmatpush1.msra.mxu0 %v1611
  %1694 = vmatprep.mubr.f32.mxu0 %v1627
  %1695 = vmatmul.mubr.f32.gmra.mrb[0].mxu0 %v1626
  %v1696 = vpop.f32.mrb[0].mxu0
  %v1697 = vadd.f32 %v1617, %v1696
  %v1698 = vpop.f32.mrb[0].mxu0
  %1699 = vdwg.mxu0
  %v1700 = vadd.f32 %v1190, %v1697
  %vm1701 = vcmask 517120
  %1702 = vst.msk [vmem:[%s16] sm:$0x3] %vm1701, %v1700
  // Predicated region
  $region66: #{fedformer_forward.3} parent=0 // pred_check
    _
  $region67: #{fedformer_forward.3} parent=0 // pred_check_branch
    %1704 = sbr.rel (0) target = $region69
  $region68: #{fedformer_forward.3} parent=0 // pred_region
    _
  $region69: #{fedformer_forward.3} parent=0 // pred_fallthru
    _
  // Predicated region
  $region70: #{fedformer_forward.3} parent=0 // pred_check
    _
  $region71: #{fedformer_forward.3} parent=0 // pred_check_branch
    %1706 = sbr.rel (0) target = $region73
  $region72: #{fedformer_forward.3} parent=0 // pred_region
    _
  $region73: #{fedformer_forward.3} parent=0 // pred_fallthru
    _

// kernel: fedformer_forward.2
$region0: #{fedformer_forward.2}
  #allocation0 [shape = 'u32[]', space=smem, size = 0x4, offset = 0x4, fixed_abs, tag = 'smem constant byte address 0x4 - core index']
  #allocation1 [shape = 'u32[144,128]{1,0:T(1,128)}', space=vmem, size = 0x12000, scoped, tag = 'internal scratch']
  %s0 = inlined_call_operand.vmem [shape: f32[2,192], index: 0, kind: input, shape index: {}]
  %s1 = inlined_call_operand.vmem [shape: f32[1,256], index: 1, kind: input, shape index: {}]
  %s2 = inlined_call_operand.hbm [shape: f32[192,256], index: 2, kind: input, shape index: {}]
  %s3 = inlined_call_operand.hbm [shape: f32[192,256], index: 3, kind: input, shape index: {}]
  %s4 = inlined_call_operand.vmem [shape: f32[192,64], index: 4, kind: input, shape index: {}]
  %s5 = inlined_call_operand.vmem [shape: f32[256,256], index: 5, kind: input, shape index: {}]
  %s6 = inlined_call_operand.hbm [shape: f32[256,256], index: 6, kind: input, shape index: {}]
  %s7 = inlined_call_operand.hbm [shape: f32[256,256], index: 7, kind: input, shape index: {}]
  %s8 = inlined_call_operand.vmem [shape: f32[1,256], index: 8, kind: input, shape index: {}]
  %s9 = inlined_call_operand.vmem [shape: f32[1,256], index: 9, kind: input, shape index: {}]
  %s10 = inlined_call_operand.hbm [shape: f32[256,256], index: 10, kind: input, shape index: {}]
  %s11 = inlined_call_operand.vmem [shape: f32[1,256], index: 11, kind: input, shape index: {}]
  %s12 = inlined_call_operand.hbm [shape: f32[256,512], index: 12, kind: input, shape index: {}]
  %s13 = inlined_call_operand.hbm [shape: f32[512,256], index: 13, kind: input, shape index: {}]
  %s14 = inlined_call_operand.hbm [shape: f32[256,256], index: 14, kind: input, shape index: {}]
  %s15 = inlined_call_operand.vmem [shape: f32[1,256], index: 15, kind: input, shape index: {}]
  %s16 = inlined_call_operand.hbm [shape: f32[256,512], index: 16, kind: input, shape index: {}]
  %s17 = inlined_call_operand.hbm [shape: f32[512,256], index: 17, kind: input, shape index: {}]
  %s18 = inlined_call_operand.hbm [shape: f32[256,256], index: 18, kind: input, shape index: {}]
  %s19 = inlined_call_operand.vmem [shape: f32[1,256], index: 19, kind: input, shape index: {}]
  %s20 = inlined_call_operand.hbm [shape: f32[256,128], index: 20, kind: input, shape index: {}]
  %s21 = inlined_call_operand.vmem [shape: f32[1,128], index: 21, kind: input, shape index: {}]
  %s22 = inlined_call_operand.hbm [shape: f32[256,128], index: 22, kind: input, shape index: {}]
  %s23 = inlined_call_operand.vmem [shape: f32[1,128], index: 23, kind: input, shape index: {}]
  %s24 = inlined_call_operand.vmem [shape: f32[2,128], index: 24, kind: output, shape index: {0}]
  %s25 = inlined_call_operand.vmem [shape: f32[2,128], index: 25, kind: output, shape index: {1}]
  %s26 = inlined_call_operand.vmem [shape: f32[2,256], index: 26, kind: output, shape index: {2}]
  %s27 = inlined_call_operand.vmem [shape: f32[2,256], index: 27, kind: output, shape index: {3}]
  %s28 = inlined_call_operand.vmem [shape: f32[2,64], index: 28, kind: output, shape index: {4}]
  %29 = xla_tuple %s24, %s25, %s26, %s27, %s28
  %s30 = sld [smem:[#allocation0]]
  $region190: #{fedformer_forward.2} parent=0
    _
  %s32 = ssub.s32 1, %s30
  %s33 = scalar_select 0, %s32, %s30
  $region1: #{fedformer_forward.2} parent=0
    #allocation2 [shape = 'u8[196608]{0}', space=vmem, size = 0x30000, scoped, tag = 'input window, operand 2, single buffered']
    #allocation3 [shape = 's32[1]{0}', space=sflag, size = 0x4, scoped, tag = 'scoped memory for fedformer_forward.2']
    #allocation4 [shape = 'u8[196608]{0}', space=vmem, size = 0x30000, scoped, tag = 'input window, operand 3, single buffered']
    #allocation5 [shape = 's32[1]{0}', space=sflag, size = 0x4, scoped, tag = 'scoped memory for fedformer_forward.2']
    #allocation6 [shape = 'u8[262144]{0}', space=vmem, size = 0x40000, scoped, tag = 'input window, operand 6, single buffered']
    #allocation7 [shape = 'u8[262144]{0}', space=vmem, size = 0x40000, scoped, tag = 'input window, operand 7, single buffered']
    #allocation8 [shape = 's32[1]{0}', space=sflag, size = 0x4, scoped, tag = 'scoped memory for fedformer_forward.2']
    #allocation9 [shape = 'u8[262144]{0}', space=vmem, size = 0x40000, scoped, tag = 'input window, operand 10, single buffered']
    #allocation10 [shape = 'u8[524288]{0}', space=vmem, size = 0x80000, scoped, tag = 'input window, operand 12, single buffered']
    #allocation11 [shape = 's32[1]{0}', space=sflag, size = 0x4, scoped, tag = 'scoped memory for fedformer_forward.2']
    #allocation12 [shape = 'u8[524288]{0}', space=vmem, size = 0x80000, scoped, tag = 'input window, operand 13, single buffered']
    #allocation13 [shape = 'u8[262144]{0}', space=vmem, size = 0x40000, scoped, tag = 'input window, operand 14, single buffered']
    #allocation14 [shape = 's32[1]{0}', space=sflag, size = 0x4, scoped, tag = 'scoped memory for fedformer_forward.2']
    #allocation15 [shape = 'u8[524288]{0}', space=vmem, size = 0x80000, scoped, tag = 'input window, operand 16, single buffered']
    #allocation16 [shape = 'u8[524288]{0}', space=vmem, size = 0x80000, scoped, tag = 'input window, operand 17, single buffered']
    #allocation17 [shape = 's32[1]{0}', space=sflag, size = 0x4, scoped, tag = 'scoped memory for fedformer_forward.2']
    #allocation18 [shape = 'u8[262144]{0}', space=vmem, size = 0x40000, scoped, tag = 'input window, operand 18, single buffered']
    #allocation19 [shape = 'u8[131072]{0}', space=vmem, size = 0x20000, scoped, tag = 'input window, operand 20, single buffered']
    #allocation20 [shape = 's32[1]{0}', space=sflag, size = 0x4, scoped, tag = 'scoped memory for fedformer_forward.2']
    #allocation21 [shape = 'u8[131072]{0}', space=vmem, size = 0x20000, scoped, tag = 'input window, operand 22, single buffered']
    %34 = vsyncpa [#allocation3], 0
    %35 = vsyncpa [#allocation5], 0
    %36 = vsyncpa [#allocation8], 0
    %37 = vsyncpa [#allocation11], 0
    %38 = vsyncpa [#allocation14], 0
    %39 = vsyncpa [#allocation17], 0
    %40 = vsyncpa [#allocation20], 0
    // Predicated region
    $region2: #{fedformer_forward.2} parent=1 // pred_check
      _
    $region3: #{fedformer_forward.2} parent=1 // pred_check_branch
      %42 = sbr.rel (0) target = $region5
    $region4: #{fedformer_forward.2} parent=1 // pred_region
      _
    $region5: #{fedformer_forward.2} parent=1 // pred_fallthru
      _
    // Predicated region
    $region6: #{fedformer_forward.2} parent=1 // pred_check
      _
    $region7: #{fedformer_forward.2} parent=1 // pred_check_branch
      %44 = sbr.rel (0) target = $region9
    $region8: #{fedformer_forward.2} parent=1 // pred_region
      _
    $region9: #{fedformer_forward.2} parent=1 // pred_fallthru
      _
    // Predicated region
    $region10: #{fedformer_forward.2} parent=1 // pred_check
      _
    $region11: #{fedformer_forward.2} parent=1 // pred_check_branch
      %46 = sbr.rel (0) target = $region13
    $region12: #{fedformer_forward.2} parent=1 // pred_region
      %s48 = ssub.s32 6144, 6144
      %49 = vsyncadd [#allocation3], %s48
      %s50 = sshll.u32 [#allocation2], 4
      %s51 = int_to_ptr.vmem [resolvable:$true] %s50
      %56 = dma.hbm_to_vmem [thread:$0]  %s2, 6144, %s51, [#allocation3], 256, 256, 16
    $region13: #{fedformer_forward.2} parent=1 // pred_fallthru
      _
    // Predicated region
    $region14: #{fedformer_forward.2} parent=1 // pred_check
      _
    $region15: #{fedformer_forward.2} parent=1 // pred_check_branch
      %58 = sbr.rel (0) target = $region17
    $region16: #{fedformer_forward.2} parent=1 // pred_region
      %s60 = ssub.s32 6144, 6144
      %61 = vsyncadd [#allocation5], %s60
      %s62 = sshll.u32 [#allocation4], 4
      %s63 = int_to_ptr.vmem [resolvable:$true] %s62
      %68 = dma.hbm_to_vmem [thread:$0]  %s3, 6144, %s63, [#allocation5], 256, 256, 16
    $region17: #{fedformer_forward.2} parent=1 // pred_fallthru
      _
    // Predicated region
    $region18: #{fedformer_forward.2} parent=1 // pred_check
      _
    $region19: #{fedformer_forward.2} parent=1 // pred_check_branch
      %70 = sbr.rel (0) target = $region21
    $region20: #{fedformer_forward.2} parent=1 // pred_region
      _
    $region21: #{fedformer_forward.2} parent=1 // pred_fallthru
      _
    // Predicated region
    $region22: #{fedformer_forward.2} parent=1 // pred_check
      _
    $region23: #{fedformer_forward.2} parent=1 // pred_check_branch
      %72 = sbr.rel (0) target = $region25
    $region24: #{fedformer_forward.2} parent=1 // pred_region
      _
    $region25: #{fedformer_forward.2} parent=1 // pred_fallthru
      _
    // Predicated region
    $region26: #{fedformer_forward.2} parent=1 // pred_check
      _
    $region27: #{fedformer_forward.2} parent=1 // pred_check_branch
      %74 = sbr.rel (0) target = $region29
    $region28: #{fedformer_forward.2} parent=1 // pred_region
      %s76 = ssub.s32 8192, 8192
      %77 = vsyncadd [#allocation5], %s76
      %s78 = sshll.u32 [#allocation6], 4
      %s79 = int_to_ptr.vmem [resolvable:$true] %s78
      %84 = dma.hbm_to_vmem [thread:$0]  %s6, 8192, %s79, [#allocation5], 256, 256, 16
    $region29: #{fedformer_forward.2} parent=1 // pred_fallthru
      _
    // Predicated region
    $region30: #{fedformer_forward.2} parent=1 // pred_check
      _
    $region31: #{fedformer_forward.2} parent=1 // pred_check_branch
      %86 = sbr.rel (0) target = $region33
    $region32: #{fedformer_forward.2} parent=1 // pred_region
      %s88 = ssub.s32 8192, 8192
      %89 = vsyncadd [#allocation8], %s88
      %s90 = sshll.u32 [#allocation7], 4
      %s91 = int_to_ptr.vmem [resolvable:$true] %s90
      %96 = dma.hbm_to_vmem [thread:$0]  %s7, 8192, %s91, [#allocation8], 256, 256, 16
    $region33: #{fedformer_forward.2} parent=1 // pred_fallthru
      _
    // Predicated region
    $region34: #{fedformer_forward.2} parent=1 // pred_check
      _
    $region35: #{fedformer_forward.2} parent=1 // pred_check_branch
      %98 = sbr.rel (0) target = $region37
    $region36: #{fedformer_forward.2} parent=1 // pred_region
      _
    $region37: #{fedformer_forward.2} parent=1 // pred_fallthru
      _
    // Predicated region
    $region38: #{fedformer_forward.2} parent=1 // pred_check
      _
    $region39: #{fedformer_forward.2} parent=1 // pred_check_branch
      %100 = sbr.rel (0) target = $region41
    $region40: #{fedformer_forward.2} parent=1 // pred_region
      _
    $region41: #{fedformer_forward.2} parent=1 // pred_fallthru
      _
    // Predicated region
    $region42: #{fedformer_forward.2} parent=1 // pred_check
      _
    $region43: #{fedformer_forward.2} parent=1 // pred_check_branch
      %102 = sbr.rel (0) target = $region45
    $region44: #{fedformer_forward.2} parent=1 // pred_region
      %s104 = ssub.s32 8192, 8192
      %105 = vsyncadd [#allocation8], %s104
      %s106 = sshll.u32 [#allocation9], 4
      %s107 = int_to_ptr.vmem [resolvable:$true] %s106
      %112 = dma.hbm_to_vmem [thread:$0]  %s10, 8192, %s107, [#allocation8], 256, 256, 16
    $region45: #{fedformer_forward.2} parent=1 // pred_fallthru
      _
    // Predicated region
    $region46: #{fedformer_forward.2} parent=1 // pred_check
      _
    $region47: #{fedformer_forward.2} parent=1 // pred_check_branch
      %114 = sbr.rel (0) target = $region49
    $region48: #{fedformer_forward.2} parent=1 // pred_region
      _
    $region49: #{fedformer_forward.2} parent=1 // pred_fallthru
      _
    // Predicated region
    $region50: #{fedformer_forward.2} parent=1 // pred_check
      _
    $region51: #{fedformer_forward.2} parent=1 // pred_check_branch
      %116 = sbr.rel (0) target = $region53
    $region52: #{fedformer_forward.2} parent=1 // pred_region
      %s118 = ssub.s32 16384, 16384
      %119 = vsyncadd [#allocation11], %s118
      %s120 = sshll.u32 [#allocation10], 4
      %s121 = int_to_ptr.vmem [resolvable:$true] %s120
      %126 = dma.hbm_to_vmem [thread:$0]  %s12, 16384, %s121, [#allocation11], 512, 512, 32
    $region53: #{fedformer_forward.2} parent=1 // pred_fallthru
      _
    // Predicated region
    $region54: #{fedformer_forward.2} parent=1 // pred_check
      _
    $region55: #{fedformer_forward.2} parent=1 // pred_check_branch
      %128 = sbr.rel (0) target = $region57
    $region56: #{fedformer_forward.2} parent=1 // pred_region
      %s130 = ssub.s32 16384, 16384
      %131 = vsyncadd [#allocation11], %s130
      %s132 = sshll.u32 [#allocation12], 4
      %s133 = int_to_ptr.vmem [resolvable:$true] %s132
      %138 = dma.hbm_to_vmem [thread:$0]  %s13, 16384, %s133, [#allocation11], 256, 256, 16
    $region57: #{fedformer_forward.2} parent=1 // pred_fallthru
      _
    // Predicated region
    $region58: #{fedformer_forward.2} parent=1 // pred_check
      _
    $region59: #{fedformer_forward.2} parent=1 // pred_check_branch
      %140 = sbr.rel (0) target = $region61
    $region60: #{fedformer_forward.2} parent=1 // pred_region
      %s142 = ssub.s32 8192, 8192
      %143 = vsyncadd [#allocation14], %s142
      %s144 = sshll.u32 [#allocation13], 4
      %s145 = int_to_ptr.vmem [resolvable:$true] %s144
      %150 = dma.hbm_to_vmem [thread:$0]  %s14, 8192, %s145, [#allocation14], 256, 256, 16
    $region61: #{fedformer_forward.2} parent=1 // pred_fallthru
      _
    // Predicated region
    $region62: #{fedformer_forward.2} parent=1 // pred_check
      _
    $region63: #{fedformer_forward.2} parent=1 // pred_check_branch
      %152 = sbr.rel (0) target = $region65
    $region64: #{fedformer_forward.2} parent=1 // pred_region
      _
    $region65: #{fedformer_forward.2} parent=1 // pred_fallthru
      _
    // Predicated region
    $region66: #{fedformer_forward.2} parent=1 // pred_check
      _
    $region67: #{fedformer_forward.2} parent=1 // pred_check_branch
      %154 = sbr.rel (0) target = $region69
    $region68: #{fedformer_forward.2} parent=1 // pred_region
      %s156 = ssub.s32 16384, 16384
      %157 = vsyncadd [#allocation14], %s156
      %s158 = sshll.u32 [#allocation15], 4
      %s159 = int_to_ptr.vmem [resolvable:$true] %s158
      %164 = dma.hbm_to_vmem [thread:$0]  %s16, 16384, %s159, [#allocation14], 512, 512, 32
    $region69: #{fedformer_forward.2} parent=1 // pred_fallthru
      _
    // Predicated region
    $region70: #{fedformer_forward.2} parent=1 // pred_check
      _
    $region71: #{fedformer_forward.2} parent=1 // pred_check_branch
      %166 = sbr.rel (0) target = $region73
    $region72: #{fedformer_forward.2} parent=1 // pred_region
      %s168 = ssub.s32 16384, 16384
      %169 = vsyncadd [#allocation17], %s168
      %s170 = sshll.u32 [#allocation16], 4
      %s171 = int_to_ptr.vmem [resolvable:$true] %s170
      %176 = dma.hbm_to_vmem [thread:$0]  %s17, 16384, %s171, [#allocation17], 256, 256, 16
    $region73: #{fedformer_forward.2} parent=1 // pred_fallthru
      _
    // Predicated region
    $region74: #{fedformer_forward.2} parent=1 // pred_check
      _
    $region75: #{fedformer_forward.2} parent=1 // pred_check_branch
      %178 = sbr.rel (0) target = $region77
    $region76: #{fedformer_forward.2} parent=1 // pred_region
      %s180 = ssub.s32 8192, 8192
      %181 = vsyncadd [#allocation17], %s180
      %s182 = sshll.u32 [#allocation18], 4
      %s183 = int_to_ptr.vmem [resolvable:$true] %s182
      %188 = dma.hbm_to_vmem [thread:$0]  %s18, 8192, %s183, [#allocation17], 256, 256, 16
    $region77: #{fedformer_forward.2} parent=1 // pred_fallthru
      _
    // Predicated region
    $region78: #{fedformer_forward.2} parent=1 // pred_check
      _
    $region79: #{fedformer_forward.2} parent=1 // pred_check_branch
      %190 = sbr.rel (0) target = $region81
    $region80: #{fedformer_forward.2} parent=1 // pred_region
      _
    $region81: #{fedformer_forward.2} parent=1 // pred_fallthru
      _
    // Predicated region
    $region82: #{fedformer_forward.2} parent=1 // pred_check
      _
    $region83: #{fedformer_forward.2} parent=1 // pred_check_branch
      %192 = sbr.rel (0) target = $region85
    $region84: #{fedformer_forward.2} parent=1 // pred_region
      %s194 = ssub.s32 4096, 4096
      %195 = vsyncadd [#allocation20], %s194
      %s196 = sshll.u32 [#allocation19], 4
      %s197 = int_to_ptr.vmem [resolvable:$true] %s196
      %202 = dma.hbm_to_vmem [thread:$0]  %s20, 4096, %s197, [#allocation20], 128, 128, 8
    $region85: #{fedformer_forward.2} parent=1 // pred_fallthru
      _
    // Predicated region
    $region86: #{fedformer_forward.2} parent=1 // pred_check
      _
    $region87: #{fedformer_forward.2} parent=1 // pred_check_branch
      %204 = sbr.rel (0) target = $region89
    $region88: #{fedformer_forward.2} parent=1 // pred_region
      _
    $region89: #{fedformer_forward.2} parent=1 // pred_fallthru
      _
    // Predicated region
    $region90: #{fedformer_forward.2} parent=1 // pred_check
      _
    $region91: #{fedformer_forward.2} parent=1 // pred_check_branch
      %206 = sbr.rel (0) target = $region93
    $region92: #{fedformer_forward.2} parent=1 // pred_region
      %s208 = ssub.s32 4096, 4096
      %209 = vsyncadd [#allocation20], %s208
      %s210 = sshll.u32 [#allocation21], 4
      %s211 = int_to_ptr.vmem [resolvable:$true] %s210
      %216 = dma.hbm_to_vmem [thread:$0]  %s22, 4096, %s211, [#allocation20], 128, 128, 8
    $region93: #{fedformer_forward.2} parent=1 // pred_fallthru
      _
    // Predicated region
    $region94: #{fedformer_forward.2} parent=1 // pred_check
      _
    $region95: #{fedformer_forward.2} parent=1 // pred_check_branch
      %218 = sbr.rel (0) target = $region97
    $region96: #{fedformer_forward.2} parent=1 // pred_region
      _
    $region97: #{fedformer_forward.2} parent=1 // pred_fallthru
      _
    // Predicated region
    $region98: #{fedformer_forward.2} parent=1 // pred_check
      _
    $region99: #{fedformer_forward.2} parent=1 // pred_check_branch
      %220 = sbr.rel (0) target = $region101
    $region100: #{fedformer_forward.2} parent=1 // pred_region
      %221 = dma.done [#allocation3], 6144
    $region101: #{fedformer_forward.2} parent=1 // pred_fallthru
      _
    // Predicated region
    $region102: #{fedformer_forward.2} parent=1 // pred_check
      _
    $region103: #{fedformer_forward.2} parent=1 // pred_check_branch
      %223 = sbr.rel (0) target = $region105
    $region104: #{fedformer_forward.2} parent=1 // pred_region
      %224 = dma.done [#allocation5], 6144
    $region105: #{fedformer_forward.2} parent=1 // pred_fallthru
      _
    // Predicated region
    $region106: #{fedformer_forward.2} parent=1 // pred_check
      _
    $region107: #{fedformer_forward.2} parent=1 // pred_check_branch
      %226 = sbr.rel (0) target = $region109
    $region108: #{fedformer_forward.2} parent=1 // pred_region
      %227 = dma.done [#allocation5], 8192
    $region109: #{fedformer_forward.2} parent=1 // pred_fallthru
      _
    // Predicated region
    $region110: #{fedformer_forward.2} parent=1 // pred_check
      _
    $region111: #{fedformer_forward.2} parent=1 // pred_check_branch
      %229 = sbr.rel (0) target = $region113
    $region112: #{fedformer_forward.2} parent=1 // pred_region
      %230 = dma.done [#allocation8], 8192
    $region113: #{fedformer_forward.2} parent=1 // pred_fallthru
      _
    // Predicated region
    $region114: #{fedformer_forward.2} parent=1 // pred_check
      _
    $region115: #{fedformer_forward.2} parent=1 // pred_check_branch
      %232 = sbr.rel (0) target = $region117
    $region116: #{fedformer_forward.2} parent=1 // pred_region
      %233 = dma.done [#allocation8], 8192
    $region117: #{fedformer_forward.2} parent=1 // pred_fallthru
      _
    // Predicated region
    $region118: #{fedformer_forward.2} parent=1 // pred_check
      _
    $region119: #{fedformer_forward.2} parent=1 // pred_check_branch
      %235 = sbr.rel (0) target = $region121
    $region120: #{fedformer_forward.2} parent=1 // pred_region
      %236 = dma.done [#allocation11], 16384
    $region121: #{fedformer_forward.2} parent=1 // pred_fallthru
      _
    // Predicated region
    $region122: #{fedformer_forward.2} parent=1 // pred_check
      _
    $region123: #{fedformer_forward.2} parent=1 // pred_check_branch
      %238 = sbr.rel (0) target = $region125
    $region124: #{fedformer_forward.2} parent=1 // pred_region
      %239 = dma.done [#allocation11], 16384
    $region125: #{fedformer_forward.2} parent=1 // pred_fallthru
      _
    // Predicated region
    $region126: #{fedformer_forward.2} parent=1 // pred_check
      _
    $region127: #{fedformer_forward.2} parent=1 // pred_check_branch
      %241 = sbr.rel (0) target = $region129
    $region128: #{fedformer_forward.2} parent=1 // pred_region
      %242 = dma.done [#allocation14], 8192
    $region129: #{fedformer_forward.2} parent=1 // pred_fallthru
      _
    // Predicated region
    $region130: #{fedformer_forward.2} parent=1 // pred_check
      _
    $region131: #{fedformer_forward.2} parent=1 // pred_check_branch
      %244 = sbr.rel (0) target = $region133
    $region132: #{fedformer_forward.2} parent=1 // pred_region
      %245 = dma.done [#allocation14], 16384
    $region133: #{fedformer_forward.2} parent=1 // pred_fallthru
      _
    // Predicated region
    $region134: #{fedformer_forward.2} parent=1 // pred_check
      _
    $region135: #{fedformer_forward.2} parent=1 // pred_check_branch
      %247 = sbr.rel (0) target = $region137
    $region136: #{fedformer_forward.2} parent=1 // pred_region
      %248 = dma.done [#allocation17], 16384
    $region137: #{fedformer_forward.2} parent=1 // pred_fallthru
      _
    // Predicated region
    $region138: #{fedformer_forward.2} parent=1 // pred_check
      _
    $region139: #{fedformer_forward.2} parent=1 // pred_check_branch
      %250 = sbr.rel (0) target = $region141
    $region140: #{fedformer_forward.2} parent=1 // pred_region
      %251 = dma.done [#allocation17], 8192
    $region141: #{fedformer_forward.2} parent=1 // pred_fallthru
      _
    // Predicated region
    $region142: #{fedformer_forward.2} parent=1 // pred_check
      _
    $region143: #{fedformer_forward.2} parent=1 // pred_check_branch
      %253 = sbr.rel (0) target = $region145
    $region144: #{fedformer_forward.2} parent=1 // pred_region
      %254 = dma.done [#allocation20], 4096
    $region145: #{fedformer_forward.2} parent=1 // pred_fallthru
      _
    // Predicated region
    $region146: #{fedformer_forward.2} parent=1 // pred_check
      _
    $region147: #{fedformer_forward.2} parent=1 // pred_check_branch
      %256 = sbr.rel (0) target = $region149
    $region148: #{fedformer_forward.2} parent=1 // pred_region
      %257 = dma.done [#allocation20], 4096
    $region149: #{fedformer_forward.2} parent=1 // pred_fallthru
      _
    %v258 = vld [vmem:[%s0] sm:$0xf]
    %v259 = vld [vmem:[%s1] sm:$0x3]
    %v260 = vld [vmem:[%s5] sm:$0xff]
    %v261 = vld [vmem:[%s5 + $0x8] sm:$0xff]
    %v262 = vld [vmem:[%s5 + $0x10] sm:$0xff]
    %v263 = vld [vmem:[%s5 + $0x18] sm:$0xff]
    %v264 = vld [vmem:[%s5 + $0x20] sm:$0xff]
    %v265 = vld [vmem:[%s5 + $0x28] sm:$0xff]
    %v266 = vld [vmem:[%s5 + $0x30] sm:$0xff]
    %v267 = vld [vmem:[%s5 + $0x38] sm:$0xff]
    %v268 = vld [vmem:[%s5 + $0x40] sm:$0xff]
    %v269 = vld [vmem:[%s5 + $0x48] sm:$0xff]
    %v270 = vld [vmem:[%s5 + $0x50] sm:$0xff]
    %v271 = vld [vmem:[%s5 + $0x58] sm:$0xff]
    %v272 = vld [vmem:[%s5 + $0x60] sm:$0xff]
    %v273 = vld [vmem:[%s5 + $0x68] sm:$0xff]
    %v274 = vld [vmem:[%s5 + $0x70] sm:$0xff]
    %v275 = vld [vmem:[%s5 + $0x78] sm:$0xff]
    %v276 = vld [vmem:[%s5 + $0x80] sm:$0xff]
    %v277 = vld [vmem:[%s5 + $0x88] sm:$0xff]
    %v278 = vld [vmem:[%s5 + $0x90] sm:$0xff]
    %v279 = vld [vmem:[%s5 + $0x98] sm:$0xff]
    %v280 = vld [vmem:[%s5 + $0xa0] sm:$0xff]
    %v281 = vld [vmem:[%s5 + $0xa8] sm:$0xff]
    %v282 = vld [vmem:[%s5 + $0xb0] sm:$0xff]
    %v283 = vld [vmem:[%s5 + $0xb8] sm:$0xff]
    %v284 = vld [vmem:[%s5 + $0xc0] sm:$0xff]
    %v285 = vld [vmem:[%s5 + $0xc8] sm:$0xff]
    %v286 = vld [vmem:[%s5 + $0xd0] sm:$0xff]
    %v287 = vld [vmem:[%s5 + $0xd8] sm:$0xff]
    %v288 = vld [vmem:[%s5 + $0xe0] sm:$0xff]
    %v289 = vld [vmem:[%s5 + $0xe8] sm:$0xff]
    %v290 = vld [vmem:[%s5 + $0xf0] sm:$0xff]
    %v291 = vld [vmem:[%s5 + $0xf8] sm:$0xff]
    %v292 = vld [vmem:[%s5 + $0x100] sm:$0xff]
    %v293 = vld [vmem:[%s5 + $0x108] sm:$0xff]
    %v294 = vld [vmem:[%s5 + $0x110] sm:$0xff]
    %v295 = vld [vmem:[%s5 + $0x118] sm:$0xff]
    %v296 = vld [vmem:[%s5 + $0x120] sm:$0xff]
    %v297 = vld [vmem:[%s5 + $0x128] sm:$0xff]
    %v298 = vld [vmem:[%s5 + $0x130] sm:$0xff]
    %v299 = vld [vmem:[%s5 + $0x138] sm:$0xff]
    %v300 = vld [vmem:[%s5 + $0x140] sm:$0xff]
    %v301 = vld [vmem:[%s5 + $0x148] sm:$0xff]
    %v302 = vld [vmem:[%s5 + $0x150] sm:$0xff]
    %v303 = vld [vmem:[%s5 + $0x158] sm:$0xff]
    %v304 = vld [vmem:[%s5 + $0x160] sm:$0xff]
    %v305 = vld [vmem:[%s5 + $0x168] sm:$0xff]
    %v306 = vld [vmem:[%s5 + $0x170] sm:$0xff]
    %v307 = vld [vmem:[%s5 + $0x178] sm:$0xff]
    %v308 = vld [vmem:[%s5 + $0x180] sm:$0xff]
    %v309 = vld [vmem:[%s5 + $0x188] sm:$0xff]
    %v310 = vld [vmem:[%s5 + $0x190] sm:$0xff]
    %v311 = vld [vmem:[%s5 + $0x198] sm:$0xff]
    %v312 = vld [vmem:[%s5 + $0x1a0] sm:$0xff]
    %v313 = vld [vmem:[%s5 + $0x1a8] sm:$0xff]
    %v314 = vld [vmem:[%s5 + $0x1b0] sm:$0xff]
    %v315 = vld [vmem:[%s5 + $0x1b8] sm:$0xff]
    %v316 = vld [vmem:[%s5 + $0x1c0] sm:$0xff]
    %v317 = vld [vmem:[%s5 + $0x1c8] sm:$0xff]
    %v318 = vld [vmem:[%s5 + $0x1d0] sm:$0xff]
    %v319 = vld [vmem:[%s5 + $0x1d8] sm:$0xff]
    %v320 = vld [vmem:[%s5 + $0x1e0] sm:$0xff]
    %v321 = vld [vmem:[%s5 + $0x1e8] sm:$0xff]
    %v322 = vld [vmem:[%s5 + $0x1f0] sm:$0xff]
    %v323 = vld [vmem:[%s5 + $0x1f8] sm:$0xff]
    %v324 = vld [vmem:[#allocation6] sm:$0xff]
    %v325 = vld [vmem:[#allocation6 + $0x8] sm:$0xff]
    %v326 = vld [vmem:[#allocation6 + $0x10] sm:$0xff]
    %v327 = vld [vmem:[#allocation6 + $0x18] sm:$0xff]
    %v328 = vld [vmem:[#allocation6 + $0x20] sm:$0xff]
    %v329 = vld [vmem:[#allocation6 + $0x28] sm:$0xff]
    %v330 = vld [vmem:[#allocation6 + $0x30] sm:$0xff]
    %v331 = vld [vmem:[#allocation6 + $0x38] sm:$0xff]
    %v332 = vld [vmem:[#allocation6 + $0x40] sm:$0xff]
    %v333 = vld [vmem:[#allocation6 + $0x48] sm:$0xff]
    %v334 = vld [vmem:[#allocation6 + $0x50] sm:$0xff]
    %v335 = vld [vmem:[#allocation6 + $0x58] sm:$0xff]
    %v336 = vld [vmem:[#allocation6 + $0x60] sm:$0xff]
    %v337 = vld [vmem:[#allocation6 + $0x68] sm:$0xff]
    %v338 = vld [vmem:[#allocation6 + $0x70] sm:$0xff]
    %v339 = vld [vmem:[#allocation6 + $0x78] sm:$0xff]
    %v340 = vld [vmem:[#allocation6 + $0x80] sm:$0xff]
    %v341 = vld [vmem:[#allocation6 + $0x88] sm:$0xff]
    %v342 = vld [vmem:[#allocation6 + $0x90] sm:$0xff]
    %v343 = vld [vmem:[#allocation6 + $0x98] sm:$0xff]
    %v344 = vld [vmem:[#allocation6 + $0xa0] sm:$0xff]
    %v345 = vld [vmem:[#allocation6 + $0xa8] sm:$0xff]
    %v346 = vld [vmem:[#allocation6 + $0xb0] sm:$0xff]
    %v347 = vld [vmem:[#allocation6 + $0xb8] sm:$0xff]
    %v348 = vld [vmem:[#allocation6 + $0xc0] sm:$0xff]
    %v349 = vld [vmem:[#allocation6 + $0xc8] sm:$0xff]
    %v350 = vld [vmem:[#allocation6 + $0xd0] sm:$0xff]
    %v351 = vld [vmem:[#allocation6 + $0xd8] sm:$0xff]
    %v352 = vld [vmem:[#allocation6 + $0xe0] sm:$0xff]
    %v353 = vld [vmem:[#allocation6 + $0xe8] sm:$0xff]
    %v354 = vld [vmem:[#allocation6 + $0xf0] sm:$0xff]
    %v355 = vld [vmem:[#allocation6 + $0xf8] sm:$0xff]
    %v356 = vld [vmem:[#allocation6 + $0x100] sm:$0xff]
    %v357 = vld [vmem:[#allocation6 + $0x108] sm:$0xff]
    %v358 = vld [vmem:[#allocation6 + $0x110] sm:$0xff]
    %v359 = vld [vmem:[#allocation6 + $0x118] sm:$0xff]
    %v360 = vld [vmem:[#allocation6 + $0x120] sm:$0xff]
    %v361 = vld [vmem:[#allocation6 + $0x128] sm:$0xff]
    %v362 = vld [vmem:[#allocation6 + $0x130] sm:$0xff]
    %v363 = vld [vmem:[#allocation6 + $0x138] sm:$0xff]
    %v364 = vld [vmem:[#allocation6 + $0x140] sm:$0xff]
    %v365 = vld [vmem:[#allocation6 + $0x148] sm:$0xff]
    %v366 = vld [vmem:[#allocation6 + $0x150] sm:$0xff]
    %v367 = vld [vmem:[#allocation6 + $0x158] sm:$0xff]
    %v368 = vld [vmem:[#allocation6 + $0x160] sm:$0xff]
    %v369 = vld [vmem:[#allocation6 + $0x168] sm:$0xff]
    %v370 = vld [vmem:[#allocation6 + $0x170] sm:$0xff]
    %v371 = vld [vmem:[#allocation6 + $0x178] sm:$0xff]
    %v372 = vld [vmem:[#allocation6 + $0x180] sm:$0xff]
    %v373 = vld [vmem:[#allocation6 + $0x188] sm:$0xff]
    %v374 = vld [vmem:[#allocation6 + $0x190] sm:$0xff]
    %v375 = vld [vmem:[#allocation6 + $0x198] sm:$0xff]
    %v376 = vld [vmem:[#allocation6 + $0x1a0] sm:$0xff]
    %v377 = vld [vmem:[#allocation6 + $0x1a8] sm:$0xff]
    %v378 = vld [vmem:[#allocation6 + $0x1b0] sm:$0xff]
    %v379 = vld [vmem:[#allocation6 + $0x1b8] sm:$0xff]
    %v380 = vld [vmem:[#allocation6 + $0x1c0] sm:$0xff]
    %v381 = vld [vmem:[#allocation6 + $0x1c8] sm:$0xff]
    %v382 = vld [vmem:[#allocation6 + $0x1d0] sm:$0xff]
    %v383 = vld [vmem:[#allocation6 + $0x1d8] sm:$0xff]
    %v384 = vld [vmem:[#allocation6 + $0x1e0] sm:$0xff]
    %v385 = vld [vmem:[#allocation6 + $0x1e8] sm:$0xff]
    %v386 = vld [vmem:[#allocation6 + $0x1f0] sm:$0xff]
    %v387 = vld [vmem:[#allocation6 + $0x1f8] sm:$0xff]
    %v388 = vld [vmem:[#allocation2] sm:$0xff]
    %v389 = vld [vmem:[#allocation2 + $0x8] sm:$0xff]
    %v390 = vld [vmem:[#allocation2 + $0x10] sm:$0xff]
    %v391 = vld [vmem:[#allocation2 + $0x18] sm:$0xff]
    %v392 = vld [vmem:[#allocation2 + $0x20] sm:$0xff]
    %v393 = vld [vmem:[#allocation2 + $0x28] sm:$0xff]
    %v394 = vld [vmem:[#allocation2 + $0x30] sm:$0xff]
    %v395 = vld [vmem:[#allocation2 + $0x38] sm:$0xff]
    %v396 = vld [vmem:[#allocation2 + $0x40] sm:$0xff]
    %v397 = vld [vmem:[#allocation2 + $0x48] sm:$0xff]
    %v398 = vld [vmem:[#allocation2 + $0x50] sm:$0xff]
    %v399 = vld [vmem:[#allocation2 + $0x58] sm:$0xff]
    %v400 = vld [vmem:[#allocation2 + $0x60] sm:$0xff]
    %v401 = vld [vmem:[#allocation2 + $0x68] sm:$0xff]
    %v402 = vld [vmem:[#allocation2 + $0x70] sm:$0xff]
    %v403 = vld [vmem:[#allocation2 + $0x78] sm:$0xff]
    %v404 = vld [vmem:[#allocation2 + $0x80] sm:$0xff]
    %v405 = vld [vmem:[#allocation2 + $0x88] sm:$0xff]
    %v406 = vld [vmem:[#allocation2 + $0x90] sm:$0xff]
    %v407 = vld [vmem:[#allocation2 + $0x98] sm:$0xff]
    %v408 = vld [vmem:[#allocation2 + $0xa0] sm:$0xff]
    %v409 = vld [vmem:[#allocation2 + $0xa8] sm:$0xff]
    %v410 = vld [vmem:[#allocation2 + $0xb0] sm:$0xff]
    %v411 = vld [vmem:[#allocation2 + $0xb8] sm:$0xff]
    %v412 = vld [vmem:[#allocation2 + $0xc0] sm:$0xff]
    %v413 = vld [vmem:[#allocation2 + $0xc8] sm:$0xff]
    %v414 = vld [vmem:[#allocation2 + $0xd0] sm:$0xff]
    %v415 = vld [vmem:[#allocation2 + $0xd8] sm:$0xff]
    %v416 = vld [vmem:[#allocation2 + $0xe0] sm:$0xff]
    %v417 = vld [vmem:[#allocation2 + $0xe8] sm:$0xff]
    %v418 = vld [vmem:[#allocation2 + $0xf0] sm:$0xff]
    %v419 = vld [vmem:[#allocation2 + $0xf8] sm:$0xff]
    %v420 = vld [vmem:[#allocation2 + $0x100] sm:$0xff]
    %v421 = vld [vmem:[#allocation2 + $0x108] sm:$0xff]
    %v422 = vld [vmem:[#allocation2 + $0x110] sm:$0xff]
    %v423 = vld [vmem:[#allocation2 + $0x118] sm:$0xff]
    %v424 = vld [vmem:[#allocation2 + $0x120] sm:$0xff]
    %v425 = vld [vmem:[#allocation2 + $0x128] sm:$0xff]
    %v426 = vld [vmem:[#allocation2 + $0x130] sm:$0xff]
    %v427 = vld [vmem:[#allocation2 + $0x138] sm:$0xff]
    %v428 = vld [vmem:[#allocation2 + $0x140] sm:$0xff]
    %v429 = vld [vmem:[#allocation2 + $0x148] sm:$0xff]
    %v430 = vld [vmem:[#allocation2 + $0x150] sm:$0xff]
    %v431 = vld [vmem:[#allocation2 + $0x158] sm:$0xff]
    %v432 = vld [vmem:[#allocation2 + $0x160] sm:$0xff]
    %v433 = vld [vmem:[#allocation2 + $0x168] sm:$0xff]
    %v434 = vld [vmem:[#allocation2 + $0x170] sm:$0xff]
    %v435 = vld [vmem:[#allocation2 + $0x178] sm:$0xff]
    %v437 = vlaneseq
    %v438 = vshrl.u32 %v437, 7
    %v439 = vsub.s32 0, %v438
    %v440 = vrot.slane %v259, %v439
    %v441 = vlaneseq
    %v442 = vshrl.u32 %v441, 7
    %v443 = vsub.s32 1, %v442
    %v444 = vrot.slane %v259, %v443
    %v449 = vunpack.c.l.s4 1983009808
    %v450 = vunpack.c.0.s8 %v449
    %v451 = vlaneseq
    %v452 = vshrl.u32 %v451, 7
    %v453 = vsub.s32 %v450, %v452
    %v454 = vrot.slane %v258, %v453
    %v455 = vcombine.high %v454, %v454
    %vm457 = vcmask 523264
    %v458 = vsel %vm457, %v455, 0
    %460 = vmatprep.subr.mxu0 %v389
    %461 = vmatpush1.msra.mxu0 %v388
    %462 = vmatprep.subr.mxu0 %v391
    %463 = vmatpush1.msra.mxu0 %v390
    %464 = vmatprep.subr.mxu0 %v393
    %465 = vmatpush1.msra.mxu0 %v392
    %466 = vmatprep.subr.mxu0 %v395
    %467 = vmatpush1.msra.mxu0 %v394
    %468 = vmatprep.subr.mxu0 %v397
    %469 = vmatpush1.msra.mxu0 %v396
    %470 = vmatprep.subr.mxu0 %v399
    %471 = vmatpush1.msra.mxu0 %v398
    %472 = vmatprep.subr.mxu0 %v401
    %473 = vmatpush1.msra.mxu0 %v400
    %474 = vmatprep.subr.mxu0 %v403
    %475 = vmatpush1.msra.mxu0 %v402
    %476 = vmatprep.subr.mxu0 %v405
    %477 = vmatpush1.msra.mxu0 %v404
    %478 = vmatprep.subr.mxu0 %v407
    %479 = vmatpush1.msra.mxu0 %v406
    %480 = vmatprep.subr.mxu0 %v409
    %481 = vmatpush1.msra.mxu0 %v408
    %482 = vmatprep.subr.mxu0 %v411
    %483 = vmatpush1.msra.mxu0 %v410
    %484 = vmatprep.subr.mxu0 %v413
    %485 = vmatpush1.msra.mxu0 %v412
    %486 = vmatprep.subr.mxu0 %v415
    %487 = vmatpush1.msra.mxu0 %v414
    %488 = vmatprep.subr.mxu0 %v417
    %489 = vmatpush1.msra.mxu0 %v416
    %490 = vmatprep.subr.mxu0 %v419
    %491 = vmatpush1.msra.mxu0 %v418
    %492 = vmatprep.subr.mxu0 %v421
    %493 = vmatpush1.msra.mxu0 %v420
    %494 = vmatprep.subr.mxu0 %v423
    %495 = vmatpush1.msra.mxu0 %v422
    %496 = vmatprep.subr.mxu0 %v425
    %497 = vmatpush1.msra.mxu0 %v424
    %498 = vmatprep.subr.mxu0 %v427
    %499 = vmatpush1.msra.mxu0 %v426
    %500 = vmatprep.subr.mxu0 %v429
    %501 = vmatpush1.msra.mxu0 %v428
    %502 = vmatprep.subr.mxu0 %v431
    %503 = vmatpush1.msra.mxu0 %v430
    %504 = vmatprep.subr.mxu0 %v433
    %505 = vmatpush1.msra.mxu0 %v432
    %506 = vmatprep.subr.mxu0 %v435
    %507 = vmatpush1.msra.mxu0 %v434
    %508 = vmatprep.subr.mxu0 0.0
    %509 = vmatpush1.msra.mxu0 0.0
    %510 = vmatprep.subr.mxu0 0.0
    %511 = vmatpush1.msra.mxu0 0.0
    %512 = vmatprep.subr.mxu0 0.0
    %513 = vmatpush1.msra.mxu0 0.0
    %514 = vmatprep.subr.mxu0 0.0
    %515 = vmatpush1.msra.mxu0 0.0
    %516 = vmatprep.subr.mxu0 0.0
    %517 = vmatpush1.msra.mxu0 0.0
    %518 = vmatprep.subr.mxu0 0.0
    %519 = vmatpush1.msra.mxu0 0.0
    %520 = vmatprep.subr.mxu0 0.0
    %521 = vmatpush1.msra.mxu0 0.0
    %522 = vmatprep.subr.mxu0 0.0
    %523 = vmatpush1.msra.mxu0 0.0
    %524 = vmatprep.mubr.f32.mxu0 %v458
    %525 = vmatmul.mubr.f32.gmra.mrb[0].mxu0 %v454
    %v526 = vpop.f32.mrb[0].mxu0
    %v527 = vadd.f32 %v440, %v526
    %v528 = vpop.f32.mrb[0].mxu0
    %v529 = vadd.f32 %v444, %v528
    %530 = vdwg.mxu0
    %v531 = vld [vmem:[#allocation9] sm:$0xff]
    %v532 = vld [vmem:[#allocation9 + $0x8] sm:$0xff]
    %v533 = vld [vmem:[#allocation9 + $0x10] sm:$0xff]
    %v534 = vld [vmem:[#allocation9 + $0x18] sm:$0xff]
    %v535 = vld [vmem:[#allocation9 + $0x20] sm:$0xff]
    %v536 = vld [vmem:[#allocation9 + $0x28] sm:$0xff]
    %v537 = vld [vmem:[#allocation9 + $0x30] sm:$0xff]
    %v538 = vld [vmem:[#allocation9 + $0x38] sm:$0xff]
    %v539 = vld [vmem:[#allocation9 + $0x40] sm:$0xff]
    %v540 = vld [vmem:[#allocation9 + $0x48] sm:$0xff]
    %v541 = vld [vmem:[#allocation9 + $0x50] sm:$0xff]
    %v542 = vld [vmem:[#allocation9 + $0x58] sm:$0xff]
    %v543 = vld [vmem:[#allocation9 + $0x60] sm:$0xff]
    %v544 = vld [vmem:[#allocation9 + $0x68] sm:$0xff]
    %v545 = vld [vmem:[#allocation9 + $0x70] sm:$0xff]
    %v546 = vld [vmem:[#allocation9 + $0x78] sm:$0xff]
    %v547 = vld [vmem:[#allocation9 + $0x80] sm:$0xff]
    %v548 = vld [vmem:[#allocation9 + $0x88] sm:$0xff]
    %v549 = vld [vmem:[#allocation9 + $0x90] sm:$0xff]
    %v550 = vld [vmem:[#allocation9 + $0x98] sm:$0xff]
    %v551 = vld [vmem:[#allocation9 + $0xa0] sm:$0xff]
    %v552 = vld [vmem:[#allocation9 + $0xa8] sm:$0xff]
    %v553 = vld [vmem:[#allocation9 + $0xb0] sm:$0xff]
    %v554 = vld [vmem:[#allocation9 + $0xb8] sm:$0xff]
    %v555 = vld [vmem:[#allocation9 + $0xc0] sm:$0xff]
    %v556 = vld [vmem:[#allocation9 + $0xc8] sm:$0xff]
    %v557 = vld [vmem:[#allocation9 + $0xd0] sm:$0xff]
    %v558 = vld [vmem:[#allocation9 + $0xd8] sm:$0xff]
    %v559 = vld [vmem:[#allocation9 + $0xe0] sm:$0xff]
    %v560 = vld [vmem:[#allocation9 + $0xe8] sm:$0xff]
    %v561 = vld [vmem:[#allocation9 + $0xf0] sm:$0xff]
    %v562 = vld [vmem:[#allocation9 + $0xf8] sm:$0xff]
    %v563 = vld [vmem:[#allocation9 + $0x100] sm:$0xff]
    %v564 = vld [vmem:[#allocation9 + $0x108] sm:$0xff]
    %v565 = vld [vmem:[#allocation9 + $0x110] sm:$0xff]
    %v566 = vld [vmem:[#allocation9 + $0x118] sm:$0xff]
    %v567 = vld [vmem:[#allocation9 + $0x120] sm:$0xff]
    %v568 = vld [vmem:[#allocation9 + $0x128] sm:$0xff]
    %v569 = vld [vmem:[#allocation9 + $0x130] sm:$0xff]
    %v570 = vld [vmem:[#allocation9 + $0x138] sm:$0xff]
    %v571 = vld [vmem:[#allocation9 + $0x140] sm:$0xff]
    %v572 = vld [vmem:[#allocation9 + $0x148] sm:$0xff]
    %v573 = vld [vmem:[#allocation9 + $0x150] sm:$0xff]
    %v574 = vld [vmem:[#allocation9 + $0x158] sm:$0xff]
    %v575 = vld [vmem:[#allocation9 + $0x160] sm:$0xff]
    %v576 = vld [vmem:[#allocation9 + $0x168] sm:$0xff]
    %v577 = vld [vmem:[#allocation9 + $0x170] sm:$0xff]
    %v578 = vld [vmem:[#allocation9 + $0x178] sm:$0xff]
    %v579 = vld [vmem:[#allocation9 + $0x180] sm:$0xff]
    %v580 = vld [vmem:[#allocation9 + $0x188] sm:$0xff]
    %v581 = vld [vmem:[#allocation9 + $0x190] sm:$0xff]
    %v582 = vld [vmem:[#allocation9 + $0x198] sm:$0xff]
    %v583 = vld [vmem:[#allocation9 + $0x1a0] sm:$0xff]
    %v584 = vld [vmem:[#allocation9 + $0x1a8] sm:$0xff]
    %v585 = vld [vmem:[#allocation9 + $0x1b0] sm:$0xff]
    %v586 = vld [vmem:[#allocation9 + $0x1b8] sm:$0xff]
    %v587 = vld [vmem:[#allocation9 + $0x1c0] sm:$0xff]
    %v588 = vld [vmem:[#allocation9 + $0x1c8] sm:$0xff]
    %v589 = vld [vmem:[#allocation9 + $0x1d0] sm:$0xff]
    %v590 = vld [vmem:[#allocation9 + $0x1d8] sm:$0xff]
    %v591 = vld [vmem:[#allocation9 + $0x1e0] sm:$0xff]
    %v592 = vld [vmem:[#allocation9 + $0x1e8] sm:$0xff]
    %v593 = vld [vmem:[#allocation9 + $0x1f0] sm:$0xff]
    %v594 = vld [vmem:[#allocation9 + $0x1f8] sm:$0xff]
    %v595 = vld [vmem:[%s11] sm:$0x3]
    %v596 = vld [vmem:[#allocation10] sm:$0xff]
    %v597 = vld [vmem:[#allocation10 + $0x8] sm:$0xff]
    %v598 = vld [vmem:[#allocation10 + $0x10] sm:$0xff]
    %v599 = vld [vmem:[#allocation10 + $0x18] sm:$0xff]
    %v600 = vld [vmem:[#allocation10 + $0x20] sm:$0xff]
    %v601 = vld [vmem:[#allocation10 + $0x28] sm:$0xff]
    %v602 = vld [vmem:[#allocation10 + $0x30] sm:$0xff]
    %v603 = vld [vmem:[#allocation10 + $0x38] sm:$0xff]
    %v604 = vld [vmem:[#allocation10 + $0x40] sm:$0xff]
    %v605 = vld [vmem:[#allocation10 + $0x48] sm:$0xff]
    %v606 = vld [vmem:[#allocation10 + $0x50] sm:$0xff]
    %v607 = vld [vmem:[#allocation10 + $0x58] sm:$0xff]
    %v608 = vld [vmem:[#allocation10 + $0x60] sm:$0xff]
    %v609 = vld [vmem:[#allocation10 + $0x68] sm:$0xff]
    %v610 = vld [vmem:[#allocation10 + $0x70] sm:$0xff]
    %v611 = vld [vmem:[#allocation10 + $0x78] sm:$0xff]
    %v612 = vld [vmem:[#allocation10 + $0x80] sm:$0xff]
    %v613 = vld [vmem:[#allocation10 + $0x88] sm:$0xff]
    %v614 = vld [vmem:[#allocation10 + $0x90] sm:$0xff]
    %v615 = vld [vmem:[#allocation10 + $0x98] sm:$0xff]
    %v616 = vld [vmem:[#allocation10 + $0xa0] sm:$0xff]
    %v617 = vld [vmem:[#allocation10 + $0xa8] sm:$0xff]
    %v618 = vld [vmem:[#allocation10 + $0xb0] sm:$0xff]
    %v619 = vld [vmem:[#allocation10 + $0xb8] sm:$0xff]
    %v620 = vld [vmem:[#allocation10 + $0xc0] sm:$0xff]
    %v621 = vld [vmem:[#allocation10 + $0xc8] sm:$0xff]
    %v622 = vld [vmem:[#allocation10 + $0xd0] sm:$0xff]
    %v623 = vld [vmem:[#allocation10 + $0xd8] sm:$0xff]
    %v624 = vld [vmem:[#allocation10 + $0xe0] sm:$0xff]
    %v625 = vld [vmem:[#allocation10 + $0xe8] sm:$0xff]
    %v626 = vld [vmem:[#allocation10 + $0xf0] sm:$0xff]
    %v627 = vld [vmem:[#allocation10 + $0xf8] sm:$0xff]
    %v628 = vld [vmem:[#allocation10 + $0x100] sm:$0xff]
    %v629 = vld [vmem:[#allocation10 + $0x108] sm:$0xff]
    %v630 = vld [vmem:[#allocation10 + $0x110] sm:$0xff]
    %v631 = vld [vmem:[#allocation10 + $0x118] sm:$0xff]
    %v632 = vld [vmem:[#allocation10 + $0x120] sm:$0xff]
    %v633 = vld [vmem:[#allocation10 + $0x128] sm:$0xff]
    %v634 = vld [vmem:[#allocation10 + $0x130] sm:$0xff]
    %v635 = vld [vmem:[#allocation10 + $0x138] sm:$0xff]
    %v636 = vld [vmem:[#allocation10 + $0x140] sm:$0xff]
    %v637 = vld [vmem:[#allocation10 + $0x148] sm:$0xff]
    %v638 = vld [vmem:[#allocation10 + $0x150] sm:$0xff]
    %v639 = vld [vmem:[#allocation10 + $0x158] sm:$0xff]
    %v640 = vld [vmem:[#allocation10 + $0x160] sm:$0xff]
    %v641 = vld [vmem:[#allocation10 + $0x168] sm:$0xff]
    %v642 = vld [vmem:[#allocation10 + $0x170] sm:$0xff]
    %v643 = vld [vmem:[#allocation10 + $0x178] sm:$0xff]
    %v644 = vld [vmem:[#allocation10 + $0x180] sm:$0xff]
    %v645 = vld [vmem:[#allocation10 + $0x188] sm:$0xff]
    %v646 = vld [vmem:[#allocation10 + $0x190] sm:$0xff]
    %v647 = vld [vmem:[#allocation10 + $0x198] sm:$0xff]
    %v648 = vld [vmem:[#allocation10 + $0x1a0] sm:$0xff]
    %v649 = vld [vmem:[#allocation10 + $0x1a8] sm:$0xff]
    %v650 = vld [vmem:[#allocation10 + $0x1b0] sm:$0xff]
    %v651 = vld [vmem:[#allocation10 + $0x1b8] sm:$0xff]
    %v652 = vld [vmem:[#allocation10 + $0x1c0] sm:$0xff]
    %v653 = vld [vmem:[#allocation10 + $0x1c8] sm:$0xff]
    %v654 = vld [vmem:[#allocation10 + $0x1d0] sm:$0xff]
    %v655 = vld [vmem:[#allocation10 + $0x1d8] sm:$0xff]
    %v656 = vld [vmem:[#allocation10 + $0x1e0] sm:$0xff]
    %v657 = vld [vmem:[#allocation10 + $0x1e8] sm:$0xff]
    %v658 = vld [vmem:[#allocation10 + $0x1f0] sm:$0xff]
    %v659 = vld [vmem:[#allocation10 + $0x1f8] sm:$0xff]
    %v660 = vld [vmem:[#allocation10 + $0x200] sm:$0xff]
    %v661 = vld [vmem:[#allocation10 + $0x208] sm:$0xff]
    %v662 = vld [vmem:[#allocation10 + $0x210] sm:$0xff]
    %v663 = vld [vmem:[#allocation10 + $0x218] sm:$0xff]
    %v664 = vld [vmem:[#allocation10 + $0x220] sm:$0xff]
    %v665 = vld [vmem:[#allocation10 + $0x228] sm:$0xff]
    %v666 = vld [vmem:[#allocation10 + $0x230] sm:$0xff]
    %v667 = vld [vmem:[#allocation10 + $0x238] sm:$0xff]
    %v668 = vld [vmem:[#allocation10 + $0x240] sm:$0xff]
    %v669 = vld [vmem:[#allocation10 + $0x248] sm:$0xff]
    %v670 = vld [vmem:[#allocation10 + $0x250] sm:$0xff]
    %v671 = vld [vmem:[#allocation10 + $0x258] sm:$0xff]
    %v672 = vld [vmem:[#allocation10 + $0x260] sm:$0xff]
    %v673 = vld [vmem:[#allocation10 + $0x268] sm:$0xff]
    %v674 = vld [vmem:[#allocation10 + $0x270] sm:$0xff]
    %v675 = vld [vmem:[#allocation10 + $0x278] sm:$0xff]
    %v676 = vld [vmem:[#allocation10 + $0x280] sm:$0xff]
    %v677 = vld [vmem:[#allocation10 + $0x288] sm:$0xff]
    %v678 = vld [vmem:[#allocation10 + $0x290] sm:$0xff]
    %v679 = vld [vmem:[#allocation10 + $0x298] sm:$0xff]
    %v680 = vld [vmem:[#allocation10 + $0x2a0] sm:$0xff]
    %v681 = vld [vmem:[#allocation10 + $0x2a8] sm:$0xff]
    %v682 = vld [vmem:[#allocation10 + $0x2b0] sm:$0xff]
    %v683 = vld [vmem:[#allocation10 + $0x2b8] sm:$0xff]
    %v684 = vld [vmem:[#allocation10 + $0x2c0] sm:$0xff]
    %v685 = vld [vmem:[#allocation10 + $0x2c8] sm:$0xff]
    %v686 = vld [vmem:[#allocation10 + $0x2d0] sm:$0xff]
    %v687 = vld [vmem:[#allocation10 + $0x2d8] sm:$0xff]
    %v688 = vld [vmem:[#allocation10 + $0x2e0] sm:$0xff]
    %v689 = vld [vmem:[#allocation10 + $0x2e8] sm:$0xff]
    %v690 = vld [vmem:[#allocation10 + $0x2f0] sm:$0xff]
    %v691 = vld [vmem:[#allocation10 + $0x2f8] sm:$0xff]
    %v692 = vld [vmem:[#allocation10 + $0x300] sm:$0xff]
    %v693 = vld [vmem:[#allocation10 + $0x308] sm:$0xff]
    %v694 = vld [vmem:[#allocation10 + $0x310] sm:$0xff]
    %v695 = vld [vmem:[#allocation10 + $0x318] sm:$0xff]
    %v696 = vld [vmem:[#allocation10 + $0x320] sm:$0xff]
    %v697 = vld [vmem:[#allocation10 + $0x328] sm:$0xff]
    %v698 = vld [vmem:[#allocation10 + $0x330] sm:$0xff]
    %v699 = vld [vmem:[#allocation10 + $0x338] sm:$0xff]
    %v700 = vld [vmem:[#allocation10 + $0x340] sm:$0xff]
    %v701 = vld [vmem:[#allocation10 + $0x348] sm:$0xff]
    %v702 = vld [vmem:[#allocation10 + $0x350] sm:$0xff]
    %v703 = vld [vmem:[#allocation10 + $0x358] sm:$0xff]
    %v704 = vld [vmem:[#allocation10 + $0x360] sm:$0xff]
    %v705 = vld [vmem:[#allocation10 + $0x368] sm:$0xff]
    %v706 = vld [vmem:[#allocation10 + $0x370] sm:$0xff]
    %v707 = vld [vmem:[#allocation10 + $0x378] sm:$0xff]
    %v708 = vld [vmem:[#allocation10 + $0x380] sm:$0xff]
    %v709 = vld [vmem:[#allocation10 + $0x388] sm:$0xff]
    %v710 = vld [vmem:[#allocation10 + $0x390] sm:$0xff]
    %v711 = vld [vmem:[#allocation10 + $0x398] sm:$0xff]
    %v712 = vld [vmem:[#allocation10 + $0x3a0] sm:$0xff]
    %v713 = vld [vmem:[#allocation10 + $0x3a8] sm:$0xff]
    %v714 = vld [vmem:[#allocation10 + $0x3b0] sm:$0xff]
    %v715 = vld [vmem:[#allocation10 + $0x3b8] sm:$0xff]
    %v716 = vld [vmem:[#allocation10 + $0x3c0] sm:$0xff]
    %v717 = vld [vmem:[#allocation10 + $0x3c8] sm:$0xff]
    %v718 = vld [vmem:[#allocation10 + $0x3d0] sm:$0xff]
    %v719 = vld [vmem:[#allocation10 + $0x3d8] sm:$0xff]
    %v720 = vld [vmem:[#allocation10 + $0x3e0] sm:$0xff]
    %v721 = vld [vmem:[#allocation10 + $0x3e8] sm:$0xff]
    %v722 = vld [vmem:[#allocation10 + $0x3f0] sm:$0xff]
    %v723 = vld [vmem:[#allocation10 + $0x3f8] sm:$0xff]
    %v724 = vld [vmem:[#allocation12] sm:$0xff]
    %v725 = vld [vmem:[#allocation12 + $0x8] sm:$0xff]
    %v726 = vld [vmem:[#allocation12 + $0x10] sm:$0xff]
    %v727 = vld [vmem:[#allocation12 + $0x18] sm:$0xff]
    %v728 = vld [vmem:[#allocation12 + $0x20] sm:$0xff]
    %v729 = vld [vmem:[#allocation12 + $0x28] sm:$0xff]
    %v730 = vld [vmem:[#allocation12 + $0x30] sm:$0xff]
    %v731 = vld [vmem:[#allocation12 + $0x38] sm:$0xff]
    %v732 = vld [vmem:[#allocation12 + $0x40] sm:$0xff]
    %v733 = vld [vmem:[#allocation12 + $0x48] sm:$0xff]
    %v734 = vld [vmem:[#allocation12 + $0x50] sm:$0xff]
    %v735 = vld [vmem:[#allocation12 + $0x58] sm:$0xff]
    %v736 = vld [vmem:[#allocation12 + $0x60] sm:$0xff]
    %v737 = vld [vmem:[#allocation12 + $0x68] sm:$0xff]
    %v738 = vld [vmem:[#allocation12 + $0x70] sm:$0xff]
    %v739 = vld [vmem:[#allocation12 + $0x78] sm:$0xff]
    %v740 = vld [vmem:[#allocation12 + $0x80] sm:$0xff]
    %v741 = vld [vmem:[#allocation12 + $0x88] sm:$0xff]
    %v742 = vld [vmem:[#allocation12 + $0x90] sm:$0xff]
    %v743 = vld [vmem:[#allocation12 + $0x98] sm:$0xff]
    %v744 = vld [vmem:[#allocation12 + $0xa0] sm:$0xff]
    %v745 = vld [vmem:[#allocation12 + $0xa8] sm:$0xff]
    %v746 = vld [vmem:[#allocation12 + $0xb0] sm:$0xff]
    %v747 = vld [vmem:[#allocation12 + $0xb8] sm:$0xff]
    %v748 = vld [vmem:[#allocation12 + $0xc0] sm:$0xff]
    %v749 = vld [vmem:[#allocation12 + $0xc8] sm:$0xff]
    %v750 = vld [vmem:[#allocation12 + $0xd0] sm:$0xff]
    %v751 = vld [vmem:[#allocation12 + $0xd8] sm:$0xff]
    %v752 = vld [vmem:[#allocation12 + $0xe0] sm:$0xff]
    %v753 = vld [vmem:[#allocation12 + $0xe8] sm:$0xff]
    %v754 = vld [vmem:[#allocation12 + $0xf0] sm:$0xff]
    %v755 = vld [vmem:[#allocation12 + $0xf8] sm:$0xff]
    %v756 = vld [vmem:[#allocation12 + $0x100] sm:$0xff]
    %v757 = vld [vmem:[#allocation12 + $0x108] sm:$0xff]
    %v758 = vld [vmem:[#allocation12 + $0x110] sm:$0xff]
    %v759 = vld [vmem:[#allocation12 + $0x118] sm:$0xff]
    %v760 = vld [vmem:[#allocation12 + $0x120] sm:$0xff]
    %v761 = vld [vmem:[#allocation12 + $0x128] sm:$0xff]
    %v762 = vld [vmem:[#allocation12 + $0x130] sm:$0xff]
    %v763 = vld [vmem:[#allocation12 + $0x138] sm:$0xff]
    %v764 = vld [vmem:[#allocation12 + $0x140] sm:$0xff]
    %v765 = vld [vmem:[#allocation12 + $0x148] sm:$0xff]
    %v766 = vld [vmem:[#allocation12 + $0x150] sm:$0xff]
    %v767 = vld [vmem:[#allocation12 + $0x158] sm:$0xff]
    %v768 = vld [vmem:[#allocation12 + $0x160] sm:$0xff]
    %v769 = vld [vmem:[#allocation12 + $0x168] sm:$0xff]
    %v770 = vld [vmem:[#allocation12 + $0x170] sm:$0xff]
    %v771 = vld [vmem:[#allocation12 + $0x178] sm:$0xff]
    %v772 = vld [vmem:[#allocation12 + $0x180] sm:$0xff]
    %v773 = vld [vmem:[#allocation12 + $0x188] sm:$0xff]
    %v774 = vld [vmem:[#allocation12 + $0x190] sm:$0xff]
    %v775 = vld [vmem:[#allocation12 + $0x198] sm:$0xff]
    %v776 = vld [vmem:[#allocation12 + $0x1a0] sm:$0xff]
    %v777 = vld [vmem:[#allocation12 + $0x1a8] sm:$0xff]
    %v778 = vld [vmem:[#allocation12 + $0x1b0] sm:$0xff]
    %v779 = vld [vmem:[#allocation12 + $0x1b8] sm:$0xff]
    %v780 = vld [vmem:[#allocation12 + $0x1c0] sm:$0xff]
    %v781 = vld [vmem:[#allocation12 + $0x1c8] sm:$0xff]
    %v782 = vld [vmem:[#allocation12 + $0x1d0] sm:$0xff]
    %v783 = vld [vmem:[#allocation12 + $0x1d8] sm:$0xff]
    %v784 = vld [vmem:[#allocation12 + $0x1e0] sm:$0xff]
    %v785 = vld [vmem:[#allocation12 + $0x1e8] sm:$0xff]
    %v786 = vld [vmem:[#allocation12 + $0x1f0] sm:$0xff]
    %v787 = vld [vmem:[#allocation12 + $0x1f8] sm:$0xff]
    %v788 = vld [vmem:[#allocation12 + $0x200] sm:$0xff]
    %v789 = vld [vmem:[#allocation12 + $0x208] sm:$0xff]
    %v790 = vld [vmem:[#allocation12 + $0x210] sm:$0xff]
    %v791 = vld [vmem:[#allocation12 + $0x218] sm:$0xff]
    %v792 = vld [vmem:[#allocation12 + $0x220] sm:$0xff]
    %v793 = vld [vmem:[#allocation12 + $0x228] sm:$0xff]
    %v794 = vld [vmem:[#allocation12 + $0x230] sm:$0xff]
    %v795 = vld [vmem:[#allocation12 + $0x238] sm:$0xff]
    %v796 = vld [vmem:[#allocation12 + $0x240] sm:$0xff]
    %v797 = vld [vmem:[#allocation12 + $0x248] sm:$0xff]
    %v798 = vld [vmem:[#allocation12 + $0x250] sm:$0xff]
    %v799 = vld [vmem:[#allocation12 + $0x258] sm:$0xff]
    %v800 = vld [vmem:[#allocation12 + $0x260] sm:$0xff]
    %v801 = vld [vmem:[#allocation12 + $0x268] sm:$0xff]
    %v802 = vld [vmem:[#allocation12 + $0x270] sm:$0xff]
    %v803 = vld [vmem:[#allocation12 + $0x278] sm:$0xff]
    %v804 = vld [vmem:[#allocation12 + $0x280] sm:$0xff]
    %v805 = vld [vmem:[#allocation12 + $0x288] sm:$0xff]
    %v806 = vld [vmem:[#allocation12 + $0x290] sm:$0xff]
    %v807 = vld [vmem:[#allocation12 + $0x298] sm:$0xff]
    %v808 = vld [vmem:[#allocation12 + $0x2a0] sm:$0xff]
    %v809 = vld [vmem:[#allocation12 + $0x2a8] sm:$0xff]
    %v810 = vld [vmem:[#allocation12 + $0x2b0] sm:$0xff]
    %v811 = vld [vmem:[#allocation12 + $0x2b8] sm:$0xff]
    %v812 = vld [vmem:[#allocation12 + $0x2c0] sm:$0xff]
    %v813 = vld [vmem:[#allocation12 + $0x2c8] sm:$0xff]
    %v814 = vld [vmem:[#allocation12 + $0x2d0] sm:$0xff]
    %v815 = vld [vmem:[#allocation12 + $0x2d8] sm:$0xff]
    %v816 = vld [vmem:[#allocation12 + $0x2e0] sm:$0xff]
    %v817 = vld [vmem:[#allocation12 + $0x2e8] sm:$0xff]
    %v818 = vld [vmem:[#allocation12 + $0x2f0] sm:$0xff]
    %v819 = vld [vmem:[#allocation12 + $0x2f8] sm:$0xff]
    %v820 = vld [vmem:[#allocation12 + $0x300] sm:$0xff]
    %v821 = vld [vmem:[#allocation12 + $0x308] sm:$0xff]
    %v822 = vld [vmem:[#allocation12 + $0x310] sm:$0xff]
    %v823 = vld [vmem:[#allocation12 + $0x318] sm:$0xff]
    %v824 = vld [vmem:[#allocation12 + $0x320] sm:$0xff]
    %v825 = vld [vmem:[#allocation12 + $0x328] sm:$0xff]
    %v826 = vld [vmem:[#allocation12 + $0x330] sm:$0xff]
    %v827 = vld [vmem:[#allocation12 + $0x338] sm:$0xff]
    %v828 = vld [vmem:[#allocation12 + $0x340] sm:$0xff]
    %v829 = vld [vmem:[#allocation12 + $0x348] sm:$0xff]
    %v830 = vld [vmem:[#allocation12 + $0x350] sm:$0xff]
    %v831 = vld [vmem:[#allocation12 + $0x358] sm:$0xff]
    %v832 = vld [vmem:[#allocation12 + $0x360] sm:$0xff]
    %v833 = vld [vmem:[#allocation12 + $0x368] sm:$0xff]
    %v834 = vld [vmem:[#allocation12 + $0x370] sm:$0xff]
    %v835 = vld [vmem:[#allocation12 + $0x378] sm:$0xff]
    %v836 = vld [vmem:[#allocation12 + $0x380] sm:$0xff]
    %v837 = vld [vmem:[#allocation12 + $0x388] sm:$0xff]
    %v838 = vld [vmem:[#allocation12 + $0x390] sm:$0xff]
    %v839 = vld [vmem:[#allocation12 + $0x398] sm:$0xff]
    %v840 = vld [vmem:[#allocation12 + $0x3a0] sm:$0xff]
    %v841 = vld [vmem:[#allocation12 + $0x3a8] sm:$0xff]
    %v842 = vld [vmem:[#allocation12 + $0x3b0] sm:$0xff]
    %v843 = vld [vmem:[#allocation12 + $0x3b8] sm:$0xff]
    %v844 = vld [vmem:[#allocation12 + $0x3c0] sm:$0xff]
    %v845 = vld [vmem:[#allocation12 + $0x3c8] sm:$0xff]
    %v846 = vld [vmem:[#allocation12 + $0x3d0] sm:$0xff]
    %v847 = vld [vmem:[#allocation12 + $0x3d8] sm:$0xff]
    %v848 = vld [vmem:[#allocation12 + $0x3e0] sm:$0xff]
    %v849 = vld [vmem:[#allocation12 + $0x3e8] sm:$0xff]
    %v850 = vld [vmem:[#allocation12 + $0x3f0] sm:$0xff]
    %v851 = vld [vmem:[#allocation12 + $0x3f8] sm:$0xff]
    %852 = vmatprep.subr.mxu0 %v532
    %853 = vmatpush1.msra.mxu0 %v531
    %854 = vmatprep.subr.mxu0 %v534
    %855 = vmatpush1.msra.mxu0 %v533
    %856 = vmatprep.subr.mxu0 %v536
    %857 = vmatpush1.msra.mxu0 %v535
    %858 = vmatprep.subr.mxu0 %v538
    %859 = vmatpush1.msra.mxu0 %v537
    %860 = vmatprep.subr.mxu0 %v540
    %861 = vmatpush1.msra.mxu0 %v539
    %862 = vmatprep.subr.mxu0 %v542
    %863 = vmatpush1.msra.mxu0 %v541
    %864 = vmatprep.subr.mxu0 %v544
    %865 = vmatpush1.msra.mxu0 %v543
    %866 = vmatprep.subr.mxu0 %v546
    %867 = vmatpush1.msra.mxu0 %v545
    %868 = vmatprep.subr.mxu0 %v548
    %869 = vmatpush1.msra.mxu0 %v547
    %870 = vmatprep.subr.mxu0 %v550
    %871 = vmatpush1.msra.mxu0 %v549
    %872 = vmatprep.subr.mxu0 %v552
    %873 = vmatpush1.msra.mxu0 %v551
    %874 = vmatprep.subr.mxu0 %v554
    %875 = vmatpush1.msra.mxu0 %v553
    %876 = vmatprep.subr.mxu0 %v556
    %877 = vmatpush1.msra.mxu0 %v555
    %878 = vmatprep.subr.mxu0 %v558
    %879 = vmatpush1.msra.mxu0 %v557
    %880 = vmatprep.subr.mxu0 %v560
    %881 = vmatpush1.msra.mxu0 %v559
    %882 = vmatprep.subr.mxu0 %v562
    %883 = vmatpush1.msra.mxu0 %v561
    %884 = vmatprep.subr.mxu0 %v564
    %885 = vmatpush1.msra.mxu0 %v563
    %886 = vmatprep.subr.mxu0 %v566
    %887 = vmatpush1.msra.mxu0 %v565
    %888 = vmatprep.subr.mxu0 %v568
    %889 = vmatpush1.msra.mxu0 %v567
    %890 = vmatprep.subr.mxu0 %v570
    %891 = vmatpush1.msra.mxu0 %v569
    %892 = vmatprep.subr.mxu0 %v572
    %893 = vmatpush1.msra.mxu0 %v571
    %894 = vmatprep.subr.mxu0 %v574
    %895 = vmatpush1.msra.mxu0 %v573
    %896 = vmatprep.subr.mxu0 %v576
    %897 = vmatpush1.msra.mxu0 %v575
    %898 = vmatprep.subr.mxu0 %v578
    %899 = vmatpush1.msra.mxu0 %v577
    %900 = vmatprep.subr.mxu0 %v580
    %901 = vmatpush1.msra.mxu0 %v579
    %902 = vmatprep.subr.mxu0 %v582
    %903 = vmatpush1.msra.mxu0 %v581
    %904 = vmatprep.subr.mxu0 %v584
    %905 = vmatpush1.msra.mxu0 %v583
    %906 = vmatprep.subr.mxu0 %v586
    %907 = vmatpush1.msra.mxu0 %v585
    %908 = vmatprep.subr.mxu0 %v588
    %909 = vmatpush1.msra.mxu0 %v587
    %910 = vmatprep.subr.mxu0 %v590
    %911 = vmatpush1.msra.mxu0 %v589
    %912 = vmatprep.subr.mxu0 %v592
    %913 = vmatpush1.msra.mxu0 %v591
    %914 = vmatprep.subr.mxu0 %v594
    %915 = vmatpush1.msra.mxu0 %v593
    %916 = vmatprep.mubr.f32.mxu0 %v529
    %917 = vmatmul.mubr.f32.gmra.mrb[0].mxu0 %v527
    %v918 = vpop.f32.mrb[0].mxu0
    %v919 = vadd.f32 0.0, %v918
    %v920 = vpop.f32.mrb[0].mxu0
    %v921 = vadd.f32 0.0, %v920
    %922 = vdwg.mxu0
    %v923 = vadd.f32 %v527, %v919
    %v924 = vadd.f32 %v529, %v921
    %v926 = vlaneseq
    %v927 = vshrl.u32 %v926, 7
    %v928 = vsub.s32 0, %v927
    %v929 = vrot.slane %v595, %v928
    %v930 = vlaneseq
    %v931 = vshrl.u32 %v930, 7
    %v932 = vsub.s32 1, %v931
    %v933 = vrot.slane %v595, %v932
    %v936 = vadd.f32 %v923, %v929
    %v937 = vadd.f32 %v924, %v933
    %938 = vmatprep.subr.mxu0 %v261
    %939 = vmatpush1.msra.mxu0 %v260
    %940 = vmatprep.subr.mxu0 %v263
    %941 = vmatpush1.msra.mxu0 %v262
    %942 = vmatprep.subr.mxu0 %v265
    %943 = vmatpush1.msra.mxu0 %v264
    %944 = vmatprep.subr.mxu0 %v267
    %945 = vmatpush1.msra.mxu0 %v266
    %946 = vmatprep.subr.mxu0 %v269
    %947 = vmatpush1.msra.mxu0 %v268
    %948 = vmatprep.subr.mxu0 %v271
    %949 = vmatpush1.msra.mxu0 %v270
    %950 = vmatprep.subr.mxu0 %v273
    %951 = vmatpush1.msra.mxu0 %v272
    %952 = vmatprep.subr.mxu0 %v275
    %953 = vmatpush1.msra.mxu0 %v274
    %954 = vmatprep.subr.mxu0 %v277
    %955 = vmatpush1.msra.mxu0 %v276
    %956 = vmatprep.subr.mxu0 %v279
    %957 = vmatpush1.msra.mxu0 %v278
    %958 = vmatprep.subr.mxu0 %v281
    %959 = vmatpush1.msra.mxu0 %v280
    %960 = vmatprep.subr.mxu0 %v283
    %961 = vmatpush1.msra.mxu0 %v282
    %962 = vmatprep.subr.mxu0 %v285
    %963 = vmatpush1.msra.mxu0 %v284
    %964 = vmatprep.subr.mxu0 %v287
    %965 = vmatpush1.msra.mxu0 %v286
    %966 = vmatprep.subr.mxu0 %v289
    %967 = vmatpush1.msra.mxu0 %v288
    %968 = vmatprep.subr.mxu0 %v291
    %969 = vmatpush1.msra.mxu0 %v290
    %970 = vmatprep.subr.mxu0 %v293
    %971 = vmatpush1.msra.mxu0 %v292
    %972 = vmatprep.subr.mxu0 %v295
    %973 = vmatpush1.msra.mxu0 %v294
    %974 = vmatprep.subr.mxu0 %v297
    %975 = vmatpush1.msra.mxu0 %v296
    %976 = vmatprep.subr.mxu0 %v299
    %977 = vmatpush1.msra.mxu0 %v298
    %978 = vmatprep.subr.mxu0 %v301
    %979 = vmatpush1.msra.mxu0 %v300
    %980 = vmatprep.subr.mxu0 %v303
    %981 = vmatpush1.msra.mxu0 %v302
    %982 = vmatprep.subr.mxu0 %v305
    %983 = vmatpush1.msra.mxu0 %v304
    %984 = vmatprep.subr.mxu0 %v307
    %985 = vmatpush1.msra.mxu0 %v306
    %986 = vmatprep.subr.mxu0 %v309
    %987 = vmatpush1.msra.mxu0 %v308
    %988 = vmatprep.subr.mxu0 %v311
    %989 = vmatpush1.msra.mxu0 %v310
    %990 = vmatprep.subr.mxu0 %v313
    %991 = vmatpush1.msra.mxu0 %v312
    %992 = vmatprep.subr.mxu0 %v315
    %993 = vmatpush1.msra.mxu0 %v314
    %994 = vmatprep.subr.mxu0 %v317
    %995 = vmatpush1.msra.mxu0 %v316
    %996 = vmatprep.subr.mxu0 %v319
    %997 = vmatpush1.msra.mxu0 %v318
    %998 = vmatprep.subr.mxu0 %v321
    %999 = vmatpush1.msra.mxu0 %v320
    %1000 = vmatprep.subr.mxu0 %v323
    %1001 = vmatpush1.msra.mxu0 %v322
    %1002 = vmatprep.mubr.f32.mxu0 %v937
    %1003 = vmatmul.mubr.f32.gmra.mrb[0].mxu0 %v936
    %v1004 = vpop.f32.mrb[0].mxu0
    %v1005 = vadd.f32 0.0, %v1004
    %v1006 = vpop.f32.mrb[0].mxu0
    %v1007 = vadd.f32 0.0, %v1006
    %1008 = vdwg.mxu0
    %v1009 = vsub.f32 %v936, %v1005
    %v1010 = vsub.f32 %v937, %v1007
    %1011 = vmatprep.subr.mxu0 %v597
    %1012 = vmatpush1.msra.mxu0 %v596
    %1013 = vmatprep.subr.mxu0 %v601
    %1014 = vmatpush1.msra.mxu0 %v600
    %1015 = vmatprep.subr.mxu0 %v605
    %1016 = vmatpush1.msra.mxu0 %v604
    %1017 = vmatprep.subr.mxu0 %v609
    %1018 = vmatpush1.msra.mxu0 %v608
    %1019 = vmatprep.subr.mxu0 %v613
    %1020 = vmatpush1.msra.mxu0 %v612
    %1021 = vmatprep.subr.mxu0 %v617
    %1022 = vmatpush1.msra.mxu0 %v616
    %1023 = vmatprep.subr.mxu0 %v621
    %1024 = vmatpush1.msra.mxu0 %v620
    %1025 = vmatprep.subr.mxu0 %v625
    %1026 = vmatpush1.msra.mxu0 %v624
    %1027 = vmatprep.subr.mxu0 %v629
    %1028 = vmatpush1.msra.mxu0 %v628
    %1029 = vmatprep.subr.mxu0 %v633
    %1030 = vmatpush1.msra.mxu0 %v632
    %1031 = vmatprep.subr.mxu0 %v637
    %1032 = vmatpush1.msra.mxu0 %v636
    %1033 = vmatprep.subr.mxu0 %v641
    %1034 = vmatpush1.msra.mxu0 %v640
    %1035 = vmatprep.subr.mxu0 %v645
    %1036 = vmatpush1.msra.mxu0 %v644
    %1037 = vmatprep.subr.mxu0 %v649
    %1038 = vmatpush1.msra.mxu0 %v648
    %1039 = vmatprep.subr.mxu0 %v653
    %1040 = vmatpush1.msra.mxu0 %v652
    %1041 = vmatprep.subr.mxu0 %v657
    %1042 = vmatpush1.msra.mxu0 %v656
    %1043 = vmatprep.subr.mxu0 %v661
    %1044 = vmatpush1.msra.mxu0 %v660
    %1045 = vmatprep.subr.mxu0 %v665
    %1046 = vmatpush1.msra.mxu0 %v664
    %1047 = vmatprep.subr.mxu0 %v669
    %1048 = vmatpush1.msra.mxu0 %v668
    %1049 = vmatprep.subr.mxu0 %v673
    %1050 = vmatpush1.msra.mxu0 %v672
    %1051 = vmatprep.subr.mxu0 %v677
    %1052 = vmatpush1.msra.mxu0 %v676
    %1053 = vmatprep.subr.mxu0 %v681
    %1054 = vmatpush1.msra.mxu0 %v680
    %1055 = vmatprep.subr.mxu0 %v685
    %1056 = vmatpush1.msra.mxu0 %v684
    %1057 = vmatprep.subr.mxu0 %v689
    %1058 = vmatpush1.msra.mxu0 %v688
    %1059 = vmatprep.subr.mxu0 %v693
    %1060 = vmatpush1.msra.mxu0 %v692
    %1061 = vmatprep.subr.mxu0 %v697
    %1062 = vmatpush1.msra.mxu0 %v696
    %1063 = vmatprep.subr.mxu0 %v701
    %1064 = vmatpush1.msra.mxu0 %v700
    %1065 = vmatprep.subr.mxu0 %v705
    %1066 = vmatpush1.msra.mxu0 %v704
    %1067 = vmatprep.subr.mxu0 %v709
    %1068 = vmatpush1.msra.mxu0 %v708
    %1069 = vmatprep.subr.mxu0 %v713
    %1070 = vmatpush1.msra.mxu0 %v712
    %1071 = vmatprep.subr.mxu0 %v717
    %1072 = vmatpush1.msra.mxu0 %v716
    %1073 = vmatprep.subr.mxu0 %v721
    %1074 = vmatpush1.msra.mxu0 %v720
    %1075 = vmatprep.mubr.f32.mxu0 %v1010
    %1076 = vmatmul.mubr.f32.gmra.mrb[0].mxu0 %v1009
    %v1077 = vpop.f32.mrb[0].mxu0
    %v1078 = vadd.f32 0.0, %v1077
    %v1079 = vpop.f32.mrb[0].mxu0
    %v1080 = vadd.f32 0.0, %v1079
    %1081 = vdwg.mxu0
    %1082 = vmatprep.subr.mxu0 %v599
    %1083 = vmatpush1.msra.mxu0 %v598
    %1084 = vmatprep.subr.mxu0 %v603
    %1085 = vmatpush1.msra.mxu0 %v602
    %1086 = vmatprep.subr.mxu0 %v607
    %1087 = vmatpush1.msra.mxu0 %v606
    %1088 = vmatprep.subr.mxu0 %v611
    %1089 = vmatpush1.msra.mxu0 %v610
    %1090 = vmatprep.subr.mxu0 %v615
    %1091 = vmatpush1.msra.mxu0 %v614
    %1092 = vmatprep.subr.mxu0 %v619
    %1093 = vmatpush1.msra.mxu0 %v618
    %1094 = vmatprep.subr.mxu0 %v623
    %1095 = vmatpush1.msra.mxu0 %v622
    %1096 = vmatprep.subr.mxu0 %v627
    %1097 = vmatpush1.msra.mxu0 %v626
    %1098 = vmatprep.subr.mxu0 %v631
    %1099 = vmatpush1.msra.mxu0 %v630
    %1100 = vmatprep.subr.mxu0 %v635
    %1101 = vmatpush1.msra.mxu0 %v634
    %1102 = vmatprep.subr.mxu0 %v639
    %1103 = vmatpush1.msra.mxu0 %v638
    %1104 = vmatprep.subr.mxu0 %v643
    %1105 = vmatpush1.msra.mxu0 %v642
    %1106 = vmatprep.subr.mxu0 %v647
    %1107 = vmatpush1.msra.mxu0 %v646
    %1108 = vmatprep.subr.mxu0 %v651
    %1109 = vmatpush1.msra.mxu0 %v650
    %1110 = vmatprep.subr.mxu0 %v655
    %1111 = vmatpush1.msra.mxu0 %v654
    %1112 = vmatprep.subr.mxu0 %v659
    %1113 = vmatpush1.msra.mxu0 %v658
    %1114 = vmatprep.subr.mxu0 %v663
    %1115 = vmatpush1.msra.mxu0 %v662
    %1116 = vmatprep.subr.mxu0 %v667
    %1117 = vmatpush1.msra.mxu0 %v666
    %1118 = vmatprep.subr.mxu0 %v671
    %1119 = vmatpush1.msra.mxu0 %v670
    %1120 = vmatprep.subr.mxu0 %v675
    %1121 = vmatpush1.msra.mxu0 %v674
    %1122 = vmatprep.subr.mxu0 %v679
    %1123 = vmatpush1.msra.mxu0 %v678
    %1124 = vmatprep.subr.mxu0 %v683
    %1125 = vmatpush1.msra.mxu0 %v682
    %1126 = vmatprep.subr.mxu0 %v687
    %1127 = vmatpush1.msra.mxu0 %v686
    %1128 = vmatprep.subr.mxu0 %v691
    %1129 = vmatpush1.msra.mxu0 %v690
    %1130 = vmatprep.subr.mxu0 %v695
    %1131 = vmatpush1.msra.mxu0 %v694
    %1132 = vmatprep.subr.mxu0 %v699
    %1133 = vmatpush1.msra.mxu0 %v698
    %1134 = vmatprep.subr.mxu0 %v703
    %1135 = vmatpush1.msra.mxu0 %v702
    %1136 = vmatprep.subr.mxu0 %v707
    %1137 = vmatpush1.msra.mxu0 %v706
    %1138 = vmatprep.subr.mxu0 %v711
    %1139 = vmatpush1.msra.mxu0 %v710
    %1140 = vmatprep.subr.mxu0 %v715
    %1141 = vmatpush1.msra.mxu0 %v714
    %1142 = vmatprep.subr.mxu0 %v719
    %1143 = vmatpush1.msra.mxu0 %v718
    %1144 = vmatprep.subr.mxu0 %v723
    %1145 = vmatpush1.msra.mxu0 %v722
    %1146 = vmatprep.mubr.f32.mxu0 %v1010
    %1147 = vmatmul.mubr.f32.gmra.mrb[0].mxu0 %v1009
    %v1148 = vpop.f32.mrb[0].mxu0
    %v1149 = vadd.f32 0.0, %v1148
    %v1150 = vpop.f32.mrb[0].mxu0
    %v1151 = vadd.f32 0.0, %v1150
    %1152 = vdwg.mxu0
    %v1153 = vmax.f32 %v1078, 0.0
    %v1154 = vmax.f32 %v1080, 0.0
    %v1155 = vmax.f32 %v1149, 0.0
    %v1156 = vmax.f32 %v1151, 0.0
    %1157 = vmatprep.subr.mxu0 %v725
    %1158 = vmatpush1.msra.mxu0 %v724
    %1159 = vmatprep.subr.mxu0 %v727
    %1160 = vmatpush1.msra.mxu0 %v726
    %1161 = vmatprep.subr.mxu0 %v729
    %1162 = vmatpush1.msra.mxu0 %v728
    %1163 = vmatprep.subr.mxu0 %v731
    %1164 = vmatpush1.msra.mxu0 %v730
    %1165 = vmatprep.subr.mxu0 %v733
    %1166 = vmatpush1.msra.mxu0 %v732
    %1167 = vmatprep.subr.mxu0 %v735
    %1168 = vmatpush1.msra.mxu0 %v734
    %1169 = vmatprep.subr.mxu0 %v737
    %1170 = vmatpush1.msra.mxu0 %v736
    %1171 = vmatprep.subr.mxu0 %v739
    %1172 = vmatpush1.msra.mxu0 %v738
    %1173 = vmatprep.subr.mxu0 %v741
    %1174 = vmatpush1.msra.mxu0 %v740
    %1175 = vmatprep.subr.mxu0 %v743
    %1176 = vmatpush1.msra.mxu0 %v742
    %1177 = vmatprep.subr.mxu0 %v745
    %1178 = vmatpush1.msra.mxu0 %v744
    %1179 = vmatprep.subr.mxu0 %v747
    %1180 = vmatpush1.msra.mxu0 %v746
    %1181 = vmatprep.subr.mxu0 %v749
    %1182 = vmatpush1.msra.mxu0 %v748
    %1183 = vmatprep.subr.mxu0 %v751
    %1184 = vmatpush1.msra.mxu0 %v750
    %1185 = vmatprep.subr.mxu0 %v753
    %1186 = vmatpush1.msra.mxu0 %v752
    %1187 = vmatprep.subr.mxu0 %v755
    %1188 = vmatpush1.msra.mxu0 %v754
    %1189 = vmatprep.subr.mxu0 %v757
    %1190 = vmatpush1.msra.mxu0 %v756
    %1191 = vmatprep.subr.mxu0 %v759
    %1192 = vmatpush1.msra.mxu0 %v758
    %1193 = vmatprep.subr.mxu0 %v761
    %1194 = vmatpush1.msra.mxu0 %v760
    %1195 = vmatprep.subr.mxu0 %v763
    %1196 = vmatpush1.msra.mxu0 %v762
    %1197 = vmatprep.subr.mxu0 %v765
    %1198 = vmatpush1.msra.mxu0 %v764
    %1199 = vmatprep.subr.mxu0 %v767
    %1200 = vmatpush1.msra.mxu0 %v766
    %1201 = vmatprep.subr.mxu0 %v769
    %1202 = vmatpush1.msra.mxu0 %v768
    %1203 = vmatprep.subr.mxu0 %v771
    %1204 = vmatpush1.msra.mxu0 %v770
    %1205 = vmatprep.subr.mxu0 %v773
    %1206 = vmatpush1.msra.mxu0 %v772
    %1207 = vmatprep.subr.mxu0 %v775
    %1208 = vmatpush1.msra.mxu0 %v774
    %1209 = vmatprep.subr.mxu0 %v777
    %1210 = vmatpush1.msra.mxu0 %v776
    %1211 = vmatprep.subr.mxu0 %v779
    %1212 = vmatpush1.msra.mxu0 %v778
    %1213 = vmatprep.subr.mxu0 %v781
    %1214 = vmatpush1.msra.mxu0 %v780
    %1215 = vmatprep.subr.mxu0 %v783
    %1216 = vmatpush1.msra.mxu0 %v782
    %1217 = vmatprep.subr.mxu0 %v785
    %1218 = vmatpush1.msra.mxu0 %v784
    %1219 = vmatprep.subr.mxu0 %v787
    %1220 = vmatpush1.msra.mxu0 %v786
    %1221 = vmatprep.mubr.f32.mxu0 %v1154
    %1222 = vmatmul.mubr.f32.gmra.mrb[0].mxu0 %v1153
    %v1223 = vpop.f32.mrb[0].mxu0
    %v1224 = vadd.f32 0.0, %v1223
    %v1225 = vpop.f32.mrb[0].mxu0
    %v1226 = vadd.f32 0.0, %v1225
    %1227 = vdwg.mxu0
    %1228 = vmatprep.subr.mxu0 %v789
    %1229 = vmatpush1.msra.mxu0 %v788
    %1230 = vmatprep.subr.mxu0 %v791
    %1231 = vmatpush1.msra.mxu0 %v790
    %1232 = vmatprep.subr.mxu0 %v793
    %1233 = vmatpush1.msra.mxu0 %v792
    %1234 = vmatprep.subr.mxu0 %v795
    %1235 = vmatpush1.msra.mxu0 %v794
    %1236 = vmatprep.subr.mxu0 %v797
    %1237 = vmatpush1.msra.mxu0 %v796
    %1238 = vmatprep.subr.mxu0 %v799
    %1239 = vmatpush1.msra.mxu0 %v798
    %1240 = vmatprep.subr.mxu0 %v801
    %1241 = vmatpush1.msra.mxu0 %v800
    %1242 = vmatprep.subr.mxu0 %v803
    %1243 = vmatpush1.msra.mxu0 %v802
    %1244 = vmatprep.subr.mxu0 %v805
    %1245 = vmatpush1.msra.mxu0 %v804
    %1246 = vmatprep.subr.mxu0 %v807
    %1247 = vmatpush1.msra.mxu0 %v806
    %1248 = vmatprep.subr.mxu0 %v809
    %1249 = vmatpush1.msra.mxu0 %v808
    %1250 = vmatprep.subr.mxu0 %v811
    %1251 = vmatpush1.msra.mxu0 %v810
    %1252 = vmatprep.subr.mxu0 %v813
    %1253 = vmatpush1.msra.mxu0 %v812
    %1254 = vmatprep.subr.mxu0 %v815
    %1255 = vmatpush1.msra.mxu0 %v814
    %1256 = vmatprep.subr.mxu0 %v817
    %1257 = vmatpush1.msra.mxu0 %v816
    %1258 = vmatprep.subr.mxu0 %v819
    %1259 = vmatpush1.msra.mxu0 %v818
    %1260 = vmatprep.subr.mxu0 %v821
    %1261 = vmatpush1.msra.mxu0 %v820
    %1262 = vmatprep.subr.mxu0 %v823
    %1263 = vmatpush1.msra.mxu0 %v822
    %1264 = vmatprep.subr.mxu0 %v825
    %1265 = vmatpush1.msra.mxu0 %v824
    %1266 = vmatprep.subr.mxu0 %v827
    %1267 = vmatpush1.msra.mxu0 %v826
    %1268 = vmatprep.subr.mxu0 %v829
    %1269 = vmatpush1.msra.mxu0 %v828
    %1270 = vmatprep.subr.mxu0 %v831
    %1271 = vmatpush1.msra.mxu0 %v830
    %1272 = vmatprep.subr.mxu0 %v833
    %1273 = vmatpush1.msra.mxu0 %v832
    %1274 = vmatprep.subr.mxu0 %v835
    %1275 = vmatpush1.msra.mxu0 %v834
    %1276 = vmatprep.subr.mxu0 %v837
    %1277 = vmatpush1.msra.mxu0 %v836
    %1278 = vmatprep.subr.mxu0 %v839
    %1279 = vmatpush1.msra.mxu0 %v838
    %1280 = vmatprep.subr.mxu0 %v841
    %1281 = vmatpush1.msra.mxu0 %v840
    %1282 = vmatprep.subr.mxu0 %v843
    %1283 = vmatpush1.msra.mxu0 %v842
    %1284 = vmatprep.subr.mxu0 %v845
    %1285 = vmatpush1.msra.mxu0 %v844
    %1286 = vmatprep.subr.mxu0 %v847
    %1287 = vmatpush1.msra.mxu0 %v846
    %1288 = vmatprep.subr.mxu0 %v849
    %1289 = vmatpush1.msra.mxu0 %v848
    %1290 = vmatprep.subr.mxu0 %v851
    %1291 = vmatpush1.msra.mxu0 %v850
    %1292 = vmatprep.mubr.f32.mxu0 %v1156
    %1293 = vmatmul.mubr.f32.gmra.mrb[0].mxu0 %v1155
    %v1294 = vpop.f32.mrb[0].mxu0
    %v1295 = vadd.f32 %v1224, %v1294
    %v1296 = vpop.f32.mrb[0].mxu0
    %v1297 = vadd.f32 %v1226, %v1296
    %1298 = vdwg.mxu0
    %v1299 = vadd.f32 %v1009, %v1295
    %v1300 = vadd.f32 %v1010, %v1297
    %1301 = vmatprep.subr.mxu0 %v261
    %1302 = vmatpush1.msra.mxu0 %v260
    %1303 = vmatprep.subr.mxu0 %v263
    %1304 = vmatpush1.msra.mxu0 %v262
    %1305 = vmatprep.subr.mxu0 %v265
    %1306 = vmatpush1.msra.mxu0 %v264
    %1307 = vmatprep.subr.mxu0 %v267
    %1308 = vmatpush1.msra.mxu0 %v266
    %1309 = vmatprep.subr.mxu0 %v269
    %1310 = vmatpush1.msra.mxu0 %v268
    %1311 = vmatprep.subr.mxu0 %v271
    %1312 = vmatpush1.msra.mxu0 %v270
    %1313 = vmatprep.subr.mxu0 %v273
    %1314 = vmatpush1.msra.mxu0 %v272
    %1315 = vmatprep.subr.mxu0 %v275
    %1316 = vmatpush1.msra.mxu0 %v274
    %1317 = vmatprep.subr.mxu0 %v277
    %1318 = vmatpush1.msra.mxu0 %v276
    %1319 = vmatprep.subr.mxu0 %v279
    %1320 = vmatpush1.msra.mxu0 %v278
    %1321 = vmatprep.subr.mxu0 %v281
    %1322 = vmatpush1.msra.mxu0 %v280
    %1323 = vmatprep.subr.mxu0 %v283
    %1324 = vmatpush1.msra.mxu0 %v282
    %1325 = vmatprep.subr.mxu0 %v285
    %1326 = vmatpush1.msra.mxu0 %v284
    %1327 = vmatprep.subr.mxu0 %v287
    %1328 = vmatpush1.msra.mxu0 %v286
    %1329 = vmatprep.subr.mxu0 %v289
    %1330 = vmatpush1.msra.mxu0 %v288
    %1331 = vmatprep.subr.mxu0 %v291
    %1332 = vmatpush1.msra.mxu0 %v290
    %1333 = vmatprep.subr.mxu0 %v293
    %1334 = vmatpush1.msra.mxu0 %v292
    %1335 = vmatprep.subr.mxu0 %v295
    %1336 = vmatpush1.msra.mxu0 %v294
    %1337 = vmatprep.subr.mxu0 %v297
    %1338 = vmatpush1.msra.mxu0 %v296
    %1339 = vmatprep.subr.mxu0 %v299
    %1340 = vmatpush1.msra.mxu0 %v298
    %1341 = vmatprep.subr.mxu0 %v301
    %1342 = vmatpush1.msra.mxu0 %v300
    %1343 = vmatprep.subr.mxu0 %v303
    %1344 = vmatpush1.msra.mxu0 %v302
    %1345 = vmatprep.subr.mxu0 %v305
    %1346 = vmatpush1.msra.mxu0 %v304
    %1347 = vmatprep.subr.mxu0 %v307
    %1348 = vmatpush1.msra.mxu0 %v306
    %1349 = vmatprep.subr.mxu0 %v309
    %1350 = vmatpush1.msra.mxu0 %v308
    %1351 = vmatprep.subr.mxu0 %v311
    %1352 = vmatpush1.msra.mxu0 %v310
    %1353 = vmatprep.subr.mxu0 %v313
    %1354 = vmatpush1.msra.mxu0 %v312
    %1355 = vmatprep.subr.mxu0 %v315
    %1356 = vmatpush1.msra.mxu0 %v314
    %1357 = vmatprep.subr.mxu0 %v317
    %1358 = vmatpush1.msra.mxu0 %v316
    %1359 = vmatprep.subr.mxu0 %v319
    %1360 = vmatpush1.msra.mxu0 %v318
    %1361 = vmatprep.subr.mxu0 %v321
    %1362 = vmatpush1.msra.mxu0 %v320
    %1363 = vmatprep.subr.mxu0 %v323
    %1364 = vmatpush1.msra.mxu0 %v322
    %1365 = vmatprep.mubr.f32.mxu0 %v1300
    %1366 = vmatmul.mubr.f32.gmra.mrb[0].mxu0 %v1299
    %v1367 = vpop.f32.mrb[0].mxu0
    %v1368 = vadd.f32 0.0, %v1367
    %v1369 = vpop.f32.mrb[0].mxu0
    %v1370 = vadd.f32 0.0, %v1369
    %1371 = vdwg.mxu0
    %v1372 = vsub.f32 %v1299, %v1368
    %v1373 = vsub.f32 %v1300, %v1370
    %v1374 = vld [vmem:[#allocation13] sm:$0xff]
    %v1375 = vld [vmem:[#allocation13 + $0x8] sm:$0xff]
    %v1376 = vld [vmem:[#allocation13 + $0x10] sm:$0xff]
    %v1377 = vld [vmem:[#allocation13 + $0x18] sm:$0xff]
    %v1378 = vld [vmem:[#allocation13 + $0x20] sm:$0xff]
    %v1379 = vld [vmem:[#allocation13 + $0x28] sm:$0xff]
    %v1380 = vld [vmem:[#allocation13 + $0x30] sm:$0xff]
    %v1381 = vld [vmem:[#allocation13 + $0x38] sm:$0xff]
    %v1382 = vld [vmem:[#allocation13 + $0x40] sm:$0xff]
    %v1383 = vld [vmem:[#allocation13 + $0x48] sm:$0xff]
    %v1384 = vld [vmem:[#allocation13 + $0x50] sm:$0xff]
    %v1385 = vld [vmem:[#allocation13 + $0x58] sm:$0xff]
    %v1386 = vld [vmem:[#allocation13 + $0x60] sm:$0xff]
    %v1387 = vld [vmem:[#allocation13 + $0x68] sm:$0xff]
    %v1388 = vld [vmem:[#allocation13 + $0x70] sm:$0xff]
    %v1389 = vld [vmem:[#allocation13 + $0x78] sm:$0xff]
    %v1390 = vld [vmem:[#allocation13 + $0x80] sm:$0xff]
    %v1391 = vld [vmem:[#allocation13 + $0x88] sm:$0xff]
    %v1392 = vld [vmem:[#allocation13 + $0x90] sm:$0xff]
    %v1393 = vld [vmem:[#allocation13 + $0x98] sm:$0xff]
    %v1394 = vld [vmem:[#allocation13 + $0xa0] sm:$0xff]
    %v1395 = vld [vmem:[#allocation13 + $0xa8] sm:$0xff]
    %v1396 = vld [vmem:[#allocation13 + $0xb0] sm:$0xff]
    %v1397 = vld [vmem:[#allocation13 + $0xb8] sm:$0xff]
    %v1398 = vld [vmem:[#allocation13 + $0xc0] sm:$0xff]
    %v1399 = vld [vmem:[#allocation13 + $0xc8] sm:$0xff]
    %v1400 = vld [vmem:[#allocation13 + $0xd0] sm:$0xff]
    %v1401 = vld [vmem:[#allocation13 + $0xd8] sm:$0xff]
    %v1402 = vld [vmem:[#allocation13 + $0xe0] sm:$0xff]
    %v1403 = vld [vmem:[#allocation13 + $0xe8] sm:$0xff]
    %v1404 = vld [vmem:[#allocation13 + $0xf0] sm:$0xff]
    %v1405 = vld [vmem:[#allocation13 + $0xf8] sm:$0xff]
    %v1406 = vld [vmem:[#allocation13 + $0x100] sm:$0xff]
    %v1407 = vld [vmem:[#allocation13 + $0x108] sm:$0xff]
    %v1408 = vld [vmem:[#allocation13 + $0x110] sm:$0xff]
    %v1409 = vld [vmem:[#allocation13 + $0x118] sm:$0xff]
    %v1410 = vld [vmem:[#allocation13 + $0x120] sm:$0xff]
    %v1411 = vld [vmem:[#allocation13 + $0x128] sm:$0xff]
    %v1412 = vld [vmem:[#allocation13 + $0x130] sm:$0xff]
    %v1413 = vld [vmem:[#allocation13 + $0x138] sm:$0xff]
    %v1414 = vld [vmem:[#allocation13 + $0x140] sm:$0xff]
    %v1415 = vld [vmem:[#allocation13 + $0x148] sm:$0xff]
    %v1416 = vld [vmem:[#allocation13 + $0x150] sm:$0xff]
    %v1417 = vld [vmem:[#allocation13 + $0x158] sm:$0xff]
    %v1418 = vld [vmem:[#allocation13 + $0x160] sm:$0xff]
    %v1419 = vld [vmem:[#allocation13 + $0x168] sm:$0xff]
    %v1420 = vld [vmem:[#allocation13 + $0x170] sm:$0xff]
    %v1421 = vld [vmem:[#allocation13 + $0x178] sm:$0xff]
    %v1422 = vld [vmem:[#allocation13 + $0x180] sm:$0xff]
    %v1423 = vld [vmem:[#allocation13 + $0x188] sm:$0xff]
    %v1424 = vld [vmem:[#allocation13 + $0x190] sm:$0xff]
    %v1425 = vld [vmem:[#allocation13 + $0x198] sm:$0xff]
    %v1426 = vld [vmem:[#allocation13 + $0x1a0] sm:$0xff]
    %v1427 = vld [vmem:[#allocation13 + $0x1a8] sm:$0xff]
    %v1428 = vld [vmem:[#allocation13 + $0x1b0] sm:$0xff]
    %v1429 = vld [vmem:[#allocation13 + $0x1b8] sm:$0xff]
    %v1430 = vld [vmem:[#allocation13 + $0x1c0] sm:$0xff]
    %v1431 = vld [vmem:[#allocation13 + $0x1c8] sm:$0xff]
    %v1432 = vld [vmem:[#allocation13 + $0x1d0] sm:$0xff]
    %v1433 = vld [vmem:[#allocation13 + $0x1d8] sm:$0xff]
    %v1434 = vld [vmem:[#allocation13 + $0x1e0] sm:$0xff]
    %v1435 = vld [vmem:[#allocation13 + $0x1e8] sm:$0xff]
    %v1436 = vld [vmem:[#allocation13 + $0x1f0] sm:$0xff]
    %v1437 = vld [vmem:[#allocation13 + $0x1f8] sm:$0xff]
    %v1438 = vld [vmem:[%s15] sm:$0x3]
    %v1439 = vld [vmem:[#allocation15] sm:$0xff]
    %v1440 = vld [vmem:[#allocation15 + $0x8] sm:$0xff]
    %v1441 = vld [vmem:[#allocation15 + $0x10] sm:$0xff]
    %v1442 = vld [vmem:[#allocation15 + $0x18] sm:$0xff]
    %v1443 = vld [vmem:[#allocation15 + $0x20] sm:$0xff]
    %v1444 = vld [vmem:[#allocation15 + $0x28] sm:$0xff]
    %v1445 = vld [vmem:[#allocation15 + $0x30] sm:$0xff]
    %v1446 = vld [vmem:[#allocation15 + $0x38] sm:$0xff]
    %v1447 = vld [vmem:[#allocation15 + $0x40] sm:$0xff]
    %v1448 = vld [vmem:[#allocation15 + $0x48] sm:$0xff]
    %v1449 = vld [vmem:[#allocation15 + $0x50] sm:$0xff]
    %v1450 = vld [vmem:[#allocation15 + $0x58] sm:$0xff]
    %v1451 = vld [vmem:[#allocation15 + $0x60] sm:$0xff]
    %v1452 = vld [vmem:[#allocation15 + $0x68] sm:$0xff]
    %v1453 = vld [vmem:[#allocation15 + $0x70] sm:$0xff]
    %v1454 = vld [vmem:[#allocation15 + $0x78] sm:$0xff]
    %v1455 = vld [vmem:[#allocation15 + $0x80] sm:$0xff]
    %v1456 = vld [vmem:[#allocation15 + $0x88] sm:$0xff]
    %v1457 = vld [vmem:[#allocation15 + $0x90] sm:$0xff]
    %v1458 = vld [vmem:[#allocation15 + $0x98] sm:$0xff]
    %v1459 = vld [vmem:[#allocation15 + $0xa0] sm:$0xff]
    %v1460 = vld [vmem:[#allocation15 + $0xa8] sm:$0xff]
    %v1461 = vld [vmem:[#allocation15 + $0xb0] sm:$0xff]
    %v1462 = vld [vmem:[#allocation15 + $0xb8] sm:$0xff]
    %v1463 = vld [vmem:[#allocation15 + $0xc0] sm:$0xff]
    %v1464 = vld [vmem:[#allocation15 + $0xc8] sm:$0xff]
    %v1465 = vld [vmem:[#allocation15 + $0xd0] sm:$0xff]
    %v1466 = vld [vmem:[#allocation15 + $0xd8] sm:$0xff]
    %v1467 = vld [vmem:[#allocation15 + $0xe0] sm:$0xff]
    %v1468 = vld [vmem:[#allocation15 + $0xe8] sm:$0xff]
    %v1469 = vld [vmem:[#allocation15 + $0xf0] sm:$0xff]
    %v1470 = vld [vmem:[#allocation15 + $0xf8] sm:$0xff]
    %v1471 = vld [vmem:[#allocation15 + $0x100] sm:$0xff]
    %v1472 = vld [vmem:[#allocation15 + $0x108] sm:$0xff]
    %v1473 = vld [vmem:[#allocation15 + $0x110] sm:$0xff]
    %v1474 = vld [vmem:[#allocation15 + $0x118] sm:$0xff]
    %v1475 = vld [vmem:[#allocation15 + $0x120] sm:$0xff]
    %v1476 = vld [vmem:[#allocation15 + $0x128] sm:$0xff]
    %v1477 = vld [vmem:[#allocation15 + $0x130] sm:$0xff]
    %v1478 = vld [vmem:[#allocation15 + $0x138] sm:$0xff]
    %v1479 = vld [vmem:[#allocation15 + $0x140] sm:$0xff]
    %v1480 = vld [vmem:[#allocation15 + $0x148] sm:$0xff]
    %v1481 = vld [vmem:[#allocation15 + $0x150] sm:$0xff]
    %v1482 = vld [vmem:[#allocation15 + $0x158] sm:$0xff]
    %v1483 = vld [vmem:[#allocation15 + $0x160] sm:$0xff]
    %v1484 = vld [vmem:[#allocation15 + $0x168] sm:$0xff]
    %v1485 = vld [vmem:[#allocation15 + $0x170] sm:$0xff]
    %v1486 = vld [vmem:[#allocation15 + $0x178] sm:$0xff]
    %v1487 = vld [vmem:[#allocation15 + $0x180] sm:$0xff]
    %v1488 = vld [vmem:[#allocation15 + $0x188] sm:$0xff]
    %v1489 = vld [vmem:[#allocation15 + $0x190] sm:$0xff]
    %v1490 = vld [vmem:[#allocation15 + $0x198] sm:$0xff]
    %v1491 = vld [vmem:[#allocation15 + $0x1a0] sm:$0xff]
    %v1492 = vld [vmem:[#allocation15 + $0x1a8] sm:$0xff]
    %v1493 = vld [vmem:[#allocation15 + $0x1b0] sm:$0xff]
    %v1494 = vld [vmem:[#allocation15 + $0x1b8] sm:$0xff]
    %v1495 = vld [vmem:[#allocation15 + $0x1c0] sm:$0xff]
    %v1496 = vld [vmem:[#allocation15 + $0x1c8] sm:$0xff]
    %v1497 = vld [vmem:[#allocation15 + $0x1d0] sm:$0xff]
    %v1498 = vld [vmem:[#allocation15 + $0x1d8] sm:$0xff]
    %v1499 = vld [vmem:[#allocation15 + $0x1e0] sm:$0xff]
    %v1500 = vld [vmem:[#allocation15 + $0x1e8] sm:$0xff]
    %v1501 = vld [vmem:[#allocation15 + $0x1f0] sm:$0xff]
    %v1502 = vld [vmem:[#allocation15 + $0x1f8] sm:$0xff]
    %v1503 = vld [vmem:[#allocation15 + $0x200] sm:$0xff]
    %v1504 = vld [vmem:[#allocation15 + $0x208] sm:$0xff]
    %v1505 = vld [vmem:[#allocation15 + $0x210] sm:$0xff]
    %v1506 = vld [vmem:[#allocation15 + $0x218] sm:$0xff]
    %v1507 = vld [vmem:[#allocation15 + $0x220] sm:$0xff]
    %v1508 = vld [vmem:[#allocation15 + $0x228] sm:$0xff]
    %v1509 = vld [vmem:[#allocation15 + $0x230] sm:$0xff]
    %v1510 = vld [vmem:[#allocation15 + $0x238] sm:$0xff]
    %v1511 = vld [vmem:[#allocation15 + $0x240] sm:$0xff]
    %v1512 = vld [vmem:[#allocation15 + $0x248] sm:$0xff]
    %v1513 = vld [vmem:[#allocation15 + $0x250] sm:$0xff]
    %v1514 = vld [vmem:[#allocation15 + $0x258] sm:$0xff]
    %v1515 = vld [vmem:[#allocation15 + $0x260] sm:$0xff]
    %v1516 = vld [vmem:[#allocation15 + $0x268] sm:$0xff]
    %v1517 = vld [vmem:[#allocation15 + $0x270] sm:$0xff]
    %v1518 = vld [vmem:[#allocation15 + $0x278] sm:$0xff]
    %v1519 = vld [vmem:[#allocation15 + $0x280] sm:$0xff]
    %v1520 = vld [vmem:[#allocation15 + $0x288] sm:$0xff]
    %v1521 = vld [vmem:[#allocation15 + $0x290] sm:$0xff]
    %v1522 = vld [vmem:[#allocation15 + $0x298] sm:$0xff]
    %v1523 = vld [vmem:[#allocation15 + $0x2a0] sm:$0xff]
    %v1524 = vld [vmem:[#allocation15 + $0x2a8] sm:$0xff]
    %v1525 = vld [vmem:[#allocation15 + $0x2b0] sm:$0xff]
    %v1526 = vld [vmem:[#allocation15 + $0x2b8] sm:$0xff]
    %v1527 = vld [vmem:[#allocation15 + $0x2c0] sm:$0xff]
    %v1528 = vld [vmem:[#allocation15 + $0x2c8] sm:$0xff]
    %v1529 = vld [vmem:[#allocation15 + $0x2d0] sm:$0xff]
    %v1530 = vld [vmem:[#allocation15 + $0x2d8] sm:$0xff]
    %v1531 = vld [vmem:[#allocation15 + $0x2e0] sm:$0xff]
    %v1532 = vld [vmem:[#allocation15 + $0x2e8] sm:$0xff]
    %v1533 = vld [vmem:[#allocation15 + $0x2f0] sm:$0xff]
    %v1534 = vld [vmem:[#allocation15 + $0x2f8] sm:$0xff]
    %v1535 = vld [vmem:[#allocation15 + $0x300] sm:$0xff]
    %v1536 = vld [vmem:[#allocation15 + $0x308] sm:$0xff]
    %v1537 = vld [vmem:[#allocation15 + $0x310] sm:$0xff]
    %v1538 = vld [vmem:[#allocation15 + $0x318] sm:$0xff]
    %v1539 = vld [vmem:[#allocation15 + $0x320] sm:$0xff]
    %v1540 = vld [vmem:[#allocation15 + $0x328] sm:$0xff]
    %v1541 = vld [vmem:[#allocation15 + $0x330] sm:$0xff]
    %v1542 = vld [vmem:[#allocation15 + $0x338] sm:$0xff]
    %v1543 = vld [vmem:[#allocation15 + $0x340] sm:$0xff]
    %v1544 = vld [vmem:[#allocation15 + $0x348] sm:$0xff]
    %v1545 = vld [vmem:[#allocation15 + $0x350] sm:$0xff]
    %v1546 = vld [vmem:[#allocation15 + $0x358] sm:$0xff]
    %v1547 = vld [vmem:[#allocation15 + $0x360] sm:$0xff]
    %v1548 = vld [vmem:[#allocation15 + $0x368] sm:$0xff]
    %v1549 = vld [vmem:[#allocation15 + $0x370] sm:$0xff]
    %v1550 = vld [vmem:[#allocation15 + $0x378] sm:$0xff]
    %v1551 = vld [vmem:[#allocation15 + $0x380] sm:$0xff]
    %v1552 = vld [vmem:[#allocation15 + $0x388] sm:$0xff]
    %v1553 = vld [vmem:[#allocation15 + $0x390] sm:$0xff]
    %v1554 = vld [vmem:[#allocation15 + $0x398] sm:$0xff]
    %v1555 = vld [vmem:[#allocation15 + $0x3a0] sm:$0xff]
    %v1556 = vld [vmem:[#allocation15 + $0x3a8] sm:$0xff]
    %v1557 = vld [vmem:[#allocation15 + $0x3b0] sm:$0xff]
    %v1558 = vld [vmem:[#allocation15 + $0x3b8] sm:$0xff]
    %v1559 = vld [vmem:[#allocation15 + $0x3c0] sm:$0xff]
    %v1560 = vld [vmem:[#allocation15 + $0x3c8] sm:$0xff]
    %v1561 = vld [vmem:[#allocation15 + $0x3d0] sm:$0xff]
    %v1562 = vld [vmem:[#allocation15 + $0x3d8] sm:$0xff]
    %v1563 = vld [vmem:[#allocation15 + $0x3e0] sm:$0xff]
    %v1564 = vld [vmem:[#allocation15 + $0x3e8] sm:$0xff]
    %v1565 = vld [vmem:[#allocation15 + $0x3f0] sm:$0xff]
    %v1566 = vld [vmem:[#allocation15 + $0x3f8] sm:$0xff]
    %v1567 = vld [vmem:[#allocation16] sm:$0xff]
    %v1568 = vld [vmem:[#allocation16 + $0x8] sm:$0xff]
    %v1569 = vld [vmem:[#allocation16 + $0x10] sm:$0xff]
    %v1570 = vld [vmem:[#allocation16 + $0x18] sm:$0xff]
    %v1571 = vld [vmem:[#allocation16 + $0x20] sm:$0xff]
    %v1572 = vld [vmem:[#allocation16 + $0x28] sm:$0xff]
    %v1573 = vld [vmem:[#allocation16 + $0x30] sm:$0xff]
    %v1574 = vld [vmem:[#allocation16 + $0x38] sm:$0xff]
    %v1575 = vld [vmem:[#allocation16 + $0x40] sm:$0xff]
    %v1576 = vld [vmem:[#allocation16 + $0x48] sm:$0xff]
    %v1577 = vld [vmem:[#allocation16 + $0x50] sm:$0xff]
    %v1578 = vld [vmem:[#allocation16 + $0x58] sm:$0xff]
    %v1579 = vld [vmem:[#allocation16 + $0x60] sm:$0xff]
    %v1580 = vld [vmem:[#allocation16 + $0x68] sm:$0xff]
    %v1581 = vld [vmem:[#allocation16 + $0x70] sm:$0xff]
    %v1582 = vld [vmem:[#allocation16 + $0x78] sm:$0xff]
    %v1583 = vld [vmem:[#allocation16 + $0x80] sm:$0xff]
    %v1584 = vld [vmem:[#allocation16 + $0x88] sm:$0xff]
    %v1585 = vld [vmem:[#allocation16 + $0x90] sm:$0xff]
    %v1586 = vld [vmem:[#allocation16 + $0x98] sm:$0xff]
    %v1587 = vld [vmem:[#allocation16 + $0xa0] sm:$0xff]
    %v1588 = vld [vmem:[#allocation16 + $0xa8] sm:$0xff]
    %v1589 = vld [vmem:[#allocation16 + $0xb0] sm:$0xff]
    %v1590 = vld [vmem:[#allocation16 + $0xb8] sm:$0xff]
    %v1591 = vld [vmem:[#allocation16 + $0xc0] sm:$0xff]
    %v1592 = vld [vmem:[#allocation16 + $0xc8] sm:$0xff]
    %v1593 = vld [vmem:[#allocation16 + $0xd0] sm:$0xff]
    %v1594 = vld [vmem:[#allocation16 + $0xd8] sm:$0xff]
    %v1595 = vld [vmem:[#allocation16 + $0xe0] sm:$0xff]
    %v1596 = vld [vmem:[#allocation16 + $0xe8] sm:$0xff]
    %v1597 = vld [vmem:[#allocation16 + $0xf0] sm:$0xff]
    %v1598 = vld [vmem:[#allocation16 + $0xf8] sm:$0xff]
    %v1599 = vld [vmem:[#allocation16 + $0x100] sm:$0xff]
    %v1600 = vld [vmem:[#allocation16 + $0x108] sm:$0xff]
    %v1601 = vld [vmem:[#allocation16 + $0x110] sm:$0xff]
    %v1602 = vld [vmem:[#allocation16 + $0x118] sm:$0xff]
    %v1603 = vld [vmem:[#allocation16 + $0x120] sm:$0xff]
    %v1604 = vld [vmem:[#allocation16 + $0x128] sm:$0xff]
    %v1605 = vld [vmem:[#allocation16 + $0x130] sm:$0xff]
    %v1606 = vld [vmem:[#allocation16 + $0x138] sm:$0xff]
    %v1607 = vld [vmem:[#allocation16 + $0x140] sm:$0xff]
    %v1608 = vld [vmem:[#allocation16 + $0x148] sm:$0xff]
    %v1609 = vld [vmem:[#allocation16 + $0x150] sm:$0xff]
    %v1610 = vld [vmem:[#allocation16 + $0x158] sm:$0xff]
    %v1611 = vld [vmem:[#allocation16 + $0x160] sm:$0xff]
    %v1612 = vld [vmem:[#allocation16 + $0x168] sm:$0xff]
    %v1613 = vld [vmem:[#allocation16 + $0x170] sm:$0xff]
    %v1614 = vld [vmem:[#allocation16 + $0x178] sm:$0xff]
    %v1615 = vld [vmem:[#allocation16 + $0x180] sm:$0xff]
    %v1616 = vld [vmem:[#allocation16 + $0x188] sm:$0xff]
    %v1617 = vld [vmem:[#allocation16 + $0x190] sm:$0xff]
    %v1618 = vld [vmem:[#allocation16 + $0x198] sm:$0xff]
    %v1619 = vld [vmem:[#allocation16 + $0x1a0] sm:$0xff]
    %v1620 = vld [vmem:[#allocation16 + $0x1a8] sm:$0xff]
    %v1621 = vld [vmem:[#allocation16 + $0x1b0] sm:$0xff]
    %v1622 = vld [vmem:[#allocation16 + $0x1b8] sm:$0xff]
    %v1623 = vld [vmem:[#allocation16 + $0x1c0] sm:$0xff]
    %v1624 = vld [vmem:[#allocation16 + $0x1c8] sm:$0xff]
    %v1625 = vld [vmem:[#allocation16 + $0x1d0] sm:$0xff]
    %v1626 = vld [vmem:[#allocation16 + $0x1d8] sm:$0xff]
    %v1627 = vld [vmem:[#allocation16 + $0x1e0] sm:$0xff]
    %v1628 = vld [vmem:[#allocation16 + $0x1e8] sm:$0xff]
    %v1629 = vld [vmem:[#allocation16 + $0x1f0] sm:$0xff]
    %v1630 = vld [vmem:[#allocation16 + $0x1f8] sm:$0xff]
    %v1631 = vld [vmem:[#allocation16 + $0x200] sm:$0xff]
    %v1632 = vld [vmem:[#allocation16 + $0x208] sm:$0xff]
    %v1633 = vld [vmem:[#allocation16 + $0x210] sm:$0xff]
    %v1634 = vld [vmem:[#allocation16 + $0x218] sm:$0xff]
    %v1635 = vld [vmem:[#allocation16 + $0x220] sm:$0xff]
    %v1636 = vld [vmem:[#allocation16 + $0x228] sm:$0xff]
    %v1637 = vld [vmem:[#allocation16 + $0x230] sm:$0xff]
    %v1638 = vld [vmem:[#allocation16 + $0x238] sm:$0xff]
    %v1639 = vld [vmem:[#allocation16 + $0x240] sm:$0xff]
    %v1640 = vld [vmem:[#allocation16 + $0x248] sm:$0xff]
    %v1641 = vld [vmem:[#allocation16 + $0x250] sm:$0xff]
    %v1642 = vld [vmem:[#allocation16 + $0x258] sm:$0xff]
    %v1643 = vld [vmem:[#allocation16 + $0x260] sm:$0xff]
    %v1644 = vld [vmem:[#allocation16 + $0x268] sm:$0xff]
    %v1645 = vld [vmem:[#allocation16 + $0x270] sm:$0xff]
    %v1646 = vld [vmem:[#allocation16 + $0x278] sm:$0xff]
    %v1647 = vld [vmem:[#allocation16 + $0x280] sm:$0xff]
    %v1648 = vld [vmem:[#allocation16 + $0x288] sm:$0xff]
    %v1649 = vld [vmem:[#allocation16 + $0x290] sm:$0xff]
    %v1650 = vld [vmem:[#allocation16 + $0x298] sm:$0xff]
    %v1651 = vld [vmem:[#allocation16 + $0x2a0] sm:$0xff]
    %v1652 = vld [vmem:[#allocation16 + $0x2a8] sm:$0xff]
    %v1653 = vld [vmem:[#allocation16 + $0x2b0] sm:$0xff]
    %v1654 = vld [vmem:[#allocation16 + $0x2b8] sm:$0xff]
    %v1655 = vld [vmem:[#allocation16 + $0x2c0] sm:$0xff]
    %v1656 = vld [vmem:[#allocation16 + $0x2c8] sm:$0xff]
    %v1657 = vld [vmem:[#allocation16 + $0x2d0] sm:$0xff]
    %v1658 = vld [vmem:[#allocation16 + $0x2d8] sm:$0xff]
    %v1659 = vld [vmem:[#allocation16 + $0x2e0] sm:$0xff]
    %v1660 = vld [vmem:[#allocation16 + $0x2e8] sm:$0xff]
    %v1661 = vld [vmem:[#allocation16 + $0x2f0] sm:$0xff]
    %v1662 = vld [vmem:[#allocation16 + $0x2f8] sm:$0xff]
    %v1663 = vld [vmem:[#allocation16 + $0x300] sm:$0xff]
    %v1664 = vld [vmem:[#allocation16 + $0x308] sm:$0xff]
    %v1665 = vld [vmem:[#allocation16 + $0x310] sm:$0xff]
    %v1666 = vld [vmem:[#allocation16 + $0x318] sm:$0xff]
    %v1667 = vld [vmem:[#allocation16 + $0x320] sm:$0xff]
    %v1668 = vld [vmem:[#allocation16 + $0x328] sm:$0xff]
    %v1669 = vld [vmem:[#allocation16 + $0x330] sm:$0xff]
    %v1670 = vld [vmem:[#allocation16 + $0x338] sm:$0xff]
    %v1671 = vld [vmem:[#allocation16 + $0x340] sm:$0xff]
    %v1672 = vld [vmem:[#allocation16 + $0x348] sm:$0xff]
    %v1673 = vld [vmem:[#allocation16 + $0x350] sm:$0xff]
    %v1674 = vld [vmem:[#allocation16 + $0x358] sm:$0xff]
    %v1675 = vld [vmem:[#allocation16 + $0x360] sm:$0xff]
    %v1676 = vld [vmem:[#allocation16 + $0x368] sm:$0xff]
    %v1677 = vld [vmem:[#allocation16 + $0x370] sm:$0xff]
    %v1678 = vld [vmem:[#allocation16 + $0x378] sm:$0xff]
    %v1679 = vld [vmem:[#allocation16 + $0x380] sm:$0xff]
    %v1680 = vld [vmem:[#allocation16 + $0x388] sm:$0xff]
    %v1681 = vld [vmem:[#allocation16 + $0x390] sm:$0xff]
    %v1682 = vld [vmem:[#allocation16 + $0x398] sm:$0xff]
    %v1683 = vld [vmem:[#allocation16 + $0x3a0] sm:$0xff]
    %v1684 = vld [vmem:[#allocation16 + $0x3a8] sm:$0xff]
    %v1685 = vld [vmem:[#allocation16 + $0x3b0] sm:$0xff]
    %v1686 = vld [vmem:[#allocation16 + $0x3b8] sm:$0xff]
    %v1687 = vld [vmem:[#allocation16 + $0x3c0] sm:$0xff]
    %v1688 = vld [vmem:[#allocation16 + $0x3c8] sm:$0xff]
    %v1689 = vld [vmem:[#allocation16 + $0x3d0] sm:$0xff]
    %v1690 = vld [vmem:[#allocation16 + $0x3d8] sm:$0xff]
    %v1691 = vld [vmem:[#allocation16 + $0x3e0] sm:$0xff]
    %v1692 = vld [vmem:[#allocation16 + $0x3e8] sm:$0xff]
    %v1693 = vld [vmem:[#allocation16 + $0x3f0] sm:$0xff]
    %v1694 = vld [vmem:[#allocation16 + $0x3f8] sm:$0xff]
    %1695 = vmatprep.subr.mxu0 %v1375
    %1696 = vmatpush1.msra.mxu0 %v1374
    %1697 = vmatprep.subr.mxu0 %v1377
    %1698 = vmatpush1.msra.mxu0 %v1376
    %1699 = vmatprep.subr.mxu0 %v1379
    %1700 = vmatpush1.msra.mxu0 %v1378
    %1701 = vmatprep.subr.mxu0 %v1381
    %1702 = vmatpush1.msra.mxu0 %v1380
    %1703 = vmatprep.subr.mxu0 %v1383
    %1704 = vmatpush1.msra.mxu0 %v1382
    %1705 = vmatprep.subr.mxu0 %v1385
    %1706 = vmatpush1.msra.mxu0 %v1384
    %1707 = vmatprep.subr.mxu0 %v1387
    %1708 = vmatpush1.msra.mxu0 %v1386
    %1709 = vmatprep.subr.mxu0 %v1389
    %1710 = vmatpush1.msra.mxu0 %v1388
    %1711 = vmatprep.subr.mxu0 %v1391
    %1712 = vmatpush1.msra.mxu0 %v1390
    %1713 = vmatprep.subr.mxu0 %v1393
    %1714 = vmatpush1.msra.mxu0 %v1392
    %1715 = vmatprep.subr.mxu0 %v1395
    %1716 = vmatpush1.msra.mxu0 %v1394
    %1717 = vmatprep.subr.mxu0 %v1397
    %1718 = vmatpush1.msra.mxu0 %v1396
    %1719 = vmatprep.subr.mxu0 %v1399
    %1720 = vmatpush1.msra.mxu0 %v1398
    %1721 = vmatprep.subr.mxu0 %v1401
    %1722 = vmatpush1.msra.mxu0 %v1400
    %1723 = vmatprep.subr.mxu0 %v1403
    %1724 = vmatpush1.msra.mxu0 %v1402
    %1725 = vmatprep.subr.mxu0 %v1405
    %1726 = vmatpush1.msra.mxu0 %v1404
    %1727 = vmatprep.subr.mxu0 %v1407
    %1728 = vmatpush1.msra.mxu0 %v1406
    %1729 = vmatprep.subr.mxu0 %v1409
    %1730 = vmatpush1.msra.mxu0 %v1408
    %1731 = vmatprep.subr.mxu0 %v1411
    %1732 = vmatpush1.msra.mxu0 %v1410
    %1733 = vmatprep.subr.mxu0 %v1413
    %1734 = vmatpush1.msra.mxu0 %v1412
    %1735 = vmatprep.subr.mxu0 %v1415
    %1736 = vmatpush1.msra.mxu0 %v1414
    %1737 = vmatprep.subr.mxu0 %v1417
    %1738 = vmatpush1.msra.mxu0 %v1416
    %1739 = vmatprep.subr.mxu0 %v1419
    %1740 = vmatpush1.msra.mxu0 %v1418
    %1741 = vmatprep.subr.mxu0 %v1421
    %1742 = vmatpush1.msra.mxu0 %v1420
    %1743 = vmatprep.subr.mxu0 %v1423
    %1744 = vmatpush1.msra.mxu0 %v1422
    %1745 = vmatprep.subr.mxu0 %v1425
    %1746 = vmatpush1.msra.mxu0 %v1424
    %1747 = vmatprep.subr.mxu0 %v1427
    %1748 = vmatpush1.msra.mxu0 %v1426
    %1749 = vmatprep.subr.mxu0 %v1429
    %1750 = vmatpush1.msra.mxu0 %v1428
    %1751 = vmatprep.subr.mxu0 %v1431
    %1752 = vmatpush1.msra.mxu0 %v1430
    %1753 = vmatprep.subr.mxu0 %v1433
    %1754 = vmatpush1.msra.mxu0 %v1432
    %1755 = vmatprep.subr.mxu0 %v1435
    %1756 = vmatpush1.msra.mxu0 %v1434
    %1757 = vmatprep.subr.mxu0 %v1437
    %1758 = vmatpush1.msra.mxu0 %v1436
    %1759 = vmatprep.mubr.f32.mxu0 %v1373
    %1760 = vmatmul.mubr.f32.gmra.mrb[0].mxu0 %v1372
    %v1761 = vpop.f32.mrb[0].mxu0
    %v1762 = vadd.f32 0.0, %v1761
    %v1763 = vpop.f32.mrb[0].mxu0
    %v1764 = vadd.f32 0.0, %v1763
    %1765 = vdwg.mxu0
    %v1766 = vadd.f32 %v1372, %v1762
    %v1767 = vadd.f32 %v1373, %v1764
    %v1769 = vlaneseq
    %v1770 = vshrl.u32 %v1769, 7
    %v1771 = vsub.s32 0, %v1770
    %v1772 = vrot.slane %v1438, %v1771
    %v1773 = vlaneseq
    %v1774 = vshrl.u32 %v1773, 7
    %v1775 = vsub.s32 1, %v1774
    %v1776 = vrot.slane %v1438, %v1775
    %v1779 = vadd.f32 %v1766, %v1772
    %v1780 = vadd.f32 %v1767, %v1776
    %1781 = vmatprep.subr.mxu0 %v261
    %1782 = vmatpush1.msra.mxu0 %v260
    %1783 = vmatprep.subr.mxu0 %v263
    %1784 = vmatpush1.msra.mxu0 %v262
    %1785 = vmatprep.subr.mxu0 %v265
    %1786 = vmatpush1.msra.mxu0 %v264
    %1787 = vmatprep.subr.mxu0 %v267
    %1788 = vmatpush1.msra.mxu0 %v266
    %1789 = vmatprep.subr.mxu0 %v269
    %1790 = vmatpush1.msra.mxu0 %v268
    %1791 = vmatprep.subr.mxu0 %v271
    %1792 = vmatpush1.msra.mxu0 %v270
    %1793 = vmatprep.subr.mxu0 %v273
    %1794 = vmatpush1.msra.mxu0 %v272
    %1795 = vmatprep.subr.mxu0 %v275
    %1796 = vmatpush1.msra.mxu0 %v274
    %1797 = vmatprep.subr.mxu0 %v277
    %1798 = vmatpush1.msra.mxu0 %v276
    %1799 = vmatprep.subr.mxu0 %v279
    %1800 = vmatpush1.msra.mxu0 %v278
    %1801 = vmatprep.subr.mxu0 %v281
    %1802 = vmatpush1.msra.mxu0 %v280
    %1803 = vmatprep.subr.mxu0 %v283
    %1804 = vmatpush1.msra.mxu0 %v282
    %1805 = vmatprep.subr.mxu0 %v285
    %1806 = vmatpush1.msra.mxu0 %v284
    %1807 = vmatprep.subr.mxu0 %v287
    %1808 = vmatpush1.msra.mxu0 %v286
    %1809 = vmatprep.subr.mxu0 %v289
    %1810 = vmatpush1.msra.mxu0 %v288
    %1811 = vmatprep.subr.mxu0 %v291
    %1812 = vmatpush1.msra.mxu0 %v290
    %1813 = vmatprep.subr.mxu0 %v293
    %1814 = vmatpush1.msra.mxu0 %v292
    %1815 = vmatprep.subr.mxu0 %v295
    %1816 = vmatpush1.msra.mxu0 %v294
    %1817 = vmatprep.subr.mxu0 %v297
    %1818 = vmatpush1.msra.mxu0 %v296
    %1819 = vmatprep.subr.mxu0 %v299
    %1820 = vmatpush1.msra.mxu0 %v298
    %1821 = vmatprep.subr.mxu0 %v301
    %1822 = vmatpush1.msra.mxu0 %v300
    %1823 = vmatprep.subr.mxu0 %v303
    %1824 = vmatpush1.msra.mxu0 %v302
    %1825 = vmatprep.subr.mxu0 %v305
    %1826 = vmatpush1.msra.mxu0 %v304
    %1827 = vmatprep.subr.mxu0 %v307
    %1828 = vmatpush1.msra.mxu0 %v306
    %1829 = vmatprep.subr.mxu0 %v309
    %1830 = vmatpush1.msra.mxu0 %v308
    %1831 = vmatprep.subr.mxu0 %v311
    %1832 = vmatpush1.msra.mxu0 %v310
    %1833 = vmatprep.subr.mxu0 %v313
    %1834 = vmatpush1.msra.mxu0 %v312
    %1835 = vmatprep.subr.mxu0 %v315
    %1836 = vmatpush1.msra.mxu0 %v314
    %1837 = vmatprep.subr.mxu0 %v317
    %1838 = vmatpush1.msra.mxu0 %v316
    %1839 = vmatprep.subr.mxu0 %v319
    %1840 = vmatpush1.msra.mxu0 %v318
    %1841 = vmatprep.subr.mxu0 %v321
    %1842 = vmatpush1.msra.mxu0 %v320
    %1843 = vmatprep.subr.mxu0 %v323
    %1844 = vmatpush1.msra.mxu0 %v322
    %1845 = vmatprep.mubr.f32.mxu0 %v1780
    %1846 = vmatmul.mubr.f32.gmra.mrb[0].mxu0 %v1779
    %v1847 = vpop.f32.mrb[0].mxu0
    %v1848 = vadd.f32 0.0, %v1847
    %v1849 = vpop.f32.mrb[0].mxu0
    %v1850 = vadd.f32 0.0, %v1849
    %1851 = vdwg.mxu0
    %v1852 = vsub.f32 %v1779, %v1848
    %v1853 = vsub.f32 %v1780, %v1850
    %1854 = vmatprep.subr.mxu0 %v1440
    %1855 = vmatpush1.msra.mxu0 %v1439
    %1856 = vmatprep.subr.mxu0 %v1444
    %1857 = vmatpush1.msra.mxu0 %v1443
    %1858 = vmatprep.subr.mxu0 %v1448
    %1859 = vmatpush1.msra.mxu0 %v1447
    %1860 = vmatprep.subr.mxu0 %v1452
    %1861 = vmatpush1.msra.mxu0 %v1451
    %1862 = vmatprep.subr.mxu0 %v1456
    %1863 = vmatpush1.msra.mxu0 %v1455
    %1864 = vmatprep.subr.mxu0 %v1460
    %1865 = vmatpush1.msra.mxu0 %v1459
    %1866 = vmatprep.subr.mxu0 %v1464
    %1867 = vmatpush1.msra.mxu0 %v1463
    %1868 = vmatprep.subr.mxu0 %v1468
    %1869 = vmatpush1.msra.mxu0 %v1467
    %1870 = vmatprep.subr.mxu0 %v1472
    %1871 = vmatpush1.msra.mxu0 %v1471
    %1872 = vmatprep.subr.mxu0 %v1476
    %1873 = vmatpush1.msra.mxu0 %v1475
    %1874 = vmatprep.subr.mxu0 %v1480
    %1875 = vmatpush1.msra.mxu0 %v1479
    %1876 = vmatprep.subr.mxu0 %v1484
    %1877 = vmatpush1.msra.mxu0 %v1483
    %1878 = vmatprep.subr.mxu0 %v1488
    %1879 = vmatpush1.msra.mxu0 %v1487
    %1880 = vmatprep.subr.mxu0 %v1492
    %1881 = vmatpush1.msra.mxu0 %v1491
    %1882 = vmatprep.subr.mxu0 %v1496
    %1883 = vmatpush1.msra.mxu0 %v1495
    %1884 = vmatprep.subr.mxu0 %v1500
    %1885 = vmatpush1.msra.mxu0 %v1499
    %1886 = vmatprep.subr.mxu0 %v1504
    %1887 = vmatpush1.msra.mxu0 %v1503
    %1888 = vmatprep.subr.mxu0 %v1508
    %1889 = vmatpush1.msra.mxu0 %v1507
    %1890 = vmatprep.subr.mxu0 %v1512
    %1891 = vmatpush1.msra.mxu0 %v1511
    %1892 = vmatprep.subr.mxu0 %v1516
    %1893 = vmatpush1.msra.mxu0 %v1515
    %1894 = vmatprep.subr.mxu0 %v1520
    %1895 = vmatpush1.msra.mxu0 %v1519
    %1896 = vmatprep.subr.mxu0 %v1524
    %1897 = vmatpush1.msra.mxu0 %v1523
    %1898 = vmatprep.subr.mxu0 %v1528
    %1899 = vmatpush1.msra.mxu0 %v1527
    %1900 = vmatprep.subr.mxu0 %v1532
    %1901 = vmatpush1.msra.mxu0 %v1531
    %1902 = vmatprep.subr.mxu0 %v1536
    %1903 = vmatpush1.msra.mxu0 %v1535
    %1904 = vmatprep.subr.mxu0 %v1540
    %1905 = vmatpush1.msra.mxu0 %v1539
    %1906 = vmatprep.subr.mxu0 %v1544
    %1907 = vmatpush1.msra.mxu0 %v1543
    %1908 = vmatprep.subr.mxu0 %v1548
    %1909 = vmatpush1.msra.mxu0 %v1547
    %1910 = vmatprep.subr.mxu0 %v1552
    %1911 = vmatpush1.msra.mxu0 %v1551
    %1912 = vmatprep.subr.mxu0 %v1556
    %1913 = vmatpush1.msra.mxu0 %v1555
    %1914 = vmatprep.subr.mxu0 %v1560
    %1915 = vmatpush1.msra.mxu0 %v1559
    %1916 = vmatprep.subr.mxu0 %v1564
    %1917 = vmatpush1.msra.mxu0 %v1563
    %1918 = vmatprep.mubr.f32.mxu0 %v1853
    %1919 = vmatmul.mubr.f32.gmra.mrb[0].mxu0 %v1852
    %v1920 = vpop.f32.mrb[0].mxu0
    %v1921 = vadd.f32 0.0, %v1920
    %v1922 = vpop.f32.mrb[0].mxu0
    %v1923 = vadd.f32 0.0, %v1922
    %1924 = vdwg.mxu0
    %1925 = vmatprep.subr.mxu0 %v1442
    %1926 = vmatpush1.msra.mxu0 %v1441
    %1927 = vmatprep.subr.mxu0 %v1446
    %1928 = vmatpush1.msra.mxu0 %v1445
    %1929 = vmatprep.subr.mxu0 %v1450
    %1930 = vmatpush1.msra.mxu0 %v1449
    %1931 = vmatprep.subr.mxu0 %v1454
    %1932 = vmatpush1.msra.mxu0 %v1453
    %1933 = vmatprep.subr.mxu0 %v1458
    %1934 = vmatpush1.msra.mxu0 %v1457
    %1935 = vmatprep.subr.mxu0 %v1462
    %1936 = vmatpush1.msra.mxu0 %v1461
    %1937 = vmatprep.subr.mxu0 %v1466
    %1938 = vmatpush1.msra.mxu0 %v1465
    %1939 = vmatprep.subr.mxu0 %v1470
    %1940 = vmatpush1.msra.mxu0 %v1469
    %1941 = vmatprep.subr.mxu0 %v1474
    %1942 = vmatpush1.msra.mxu0 %v1473
    %1943 = vmatprep.subr.mxu0 %v1478
    %1944 = vmatpush1.msra.mxu0 %v1477
    %1945 = vmatprep.subr.mxu0 %v1482
    %1946 = vmatpush1.msra.mxu0 %v1481
    %1947 = vmatprep.subr.mxu0 %v1486
    %1948 = vmatpush1.msra.mxu0 %v1485
    %1949 = vmatprep.subr.mxu0 %v1490
    %1950 = vmatpush1.msra.mxu0 %v1489
    %1951 = vmatprep.subr.mxu0 %v1494
    %1952 = vmatpush1.msra.mxu0 %v1493
    %1953 = vmatprep.subr.mxu0 %v1498
    %1954 = vmatpush1.msra.mxu0 %v1497
    %1955 = vmatprep.subr.mxu0 %v1502
    %1956 = vmatpush1.msra.mxu0 %v1501
    %1957 = vmatprep.subr.mxu0 %v1506
    %1958 = vmatpush1.msra.mxu0 %v1505
    %1959 = vmatprep.subr.mxu0 %v1510
    %1960 = vmatpush1.msra.mxu0 %v1509
    %1961 = vmatprep.subr.mxu0 %v1514
    %1962 = vmatpush1.msra.mxu0 %v1513
    %1963 = vmatprep.subr.mxu0 %v1518
    %1964 = vmatpush1.msra.mxu0 %v1517
    %1965 = vmatprep.subr.mxu0 %v1522
    %1966 = vmatpush1.msra.mxu0 %v1521
    %1967 = vmatprep.subr.mxu0 %v1526
    %1968 = vmatpush1.msra.mxu0 %v1525
    %1969 = vmatprep.subr.mxu0 %v1530
    %1970 = vmatpush1.msra.mxu0 %v1529
    %1971 = vmatprep.subr.mxu0 %v1534
    %1972 = vmatpush1.msra.mxu0 %v1533
    %1973 = vmatprep.subr.mxu0 %v1538
    %1974 = vmatpush1.msra.mxu0 %v1537
    %1975 = vmatprep.subr.mxu0 %v1542
    %1976 = vmatpush1.msra.mxu0 %v1541
    %1977 = vmatprep.subr.mxu0 %v1546
    %1978 = vmatpush1.msra.mxu0 %v1545
    %1979 = vmatprep.subr.mxu0 %v1550
    %1980 = vmatpush1.msra.mxu0 %v1549
    %1981 = vmatprep.subr.mxu0 %v1554
    %1982 = vmatpush1.msra.mxu0 %v1553
    %1983 = vmatprep.subr.mxu0 %v1558
    %1984 = vmatpush1.msra.mxu0 %v1557
    %1985 = vmatprep.subr.mxu0 %v1562
    %1986 = vmatpush1.msra.mxu0 %v1561
    %1987 = vmatprep.subr.mxu0 %v1566
    %1988 = vmatpush1.msra.mxu0 %v1565
    %1989 = vmatprep.mubr.f32.mxu0 %v1853
    %1990 = vmatmul.mubr.f32.gmra.mrb[0].mxu0 %v1852
    %v1991 = vpop.f32.mrb[0].mxu0
    %v1992 = vadd.f32 0.0, %v1991
    %v1993 = vpop.f32.mrb[0].mxu0
    %v1994 = vadd.f32 0.0, %v1993
    %1995 = vdwg.mxu0
    %v1996 = vmax.f32 %v1921, 0.0
    %v1997 = vmax.f32 %v1923, 0.0
    %v1998 = vmax.f32 %v1992, 0.0
    %v1999 = vmax.f32 %v1994, 0.0
    %2000 = vmatprep.subr.mxu0 %v1568
    %2001 = vmatpush1.msra.mxu0 %v1567
    %2002 = vmatprep.subr.mxu0 %v1570
    %2003 = vmatpush1.msra.mxu0 %v1569
    %2004 = vmatprep.subr.mxu0 %v1572
    %2005 = vmatpush1.msra.mxu0 %v1571
    %2006 = vmatprep.subr.mxu0 %v1574
    %2007 = vmatpush1.msra.mxu0 %v1573
    %2008 = vmatprep.subr.mxu0 %v1576
    %2009 = vmatpush1.msra.mxu0 %v1575
    %2010 = vmatprep.subr.mxu0 %v1578
    %2011 = vmatpush1.msra.mxu0 %v1577
    %2012 = vmatprep.subr.mxu0 %v1580
    %2013 = vmatpush1.msra.mxu0 %v1579
    %2014 = vmatprep.subr.mxu0 %v1582
    %2015 = vmatpush1.msra.mxu0 %v1581
    %2016 = vmatprep.subr.mxu0 %v1584
    %2017 = vmatpush1.msra.mxu0 %v1583
    %2018 = vmatprep.subr.mxu0 %v1586
    %2019 = vmatpush1.msra.mxu0 %v1585
    %2020 = vmatprep.subr.mxu0 %v1588
    %2021 = vmatpush1.msra.mxu0 %v1587
    %2022 = vmatprep.subr.mxu0 %v1590
    %2023 = vmatpush1.msra.mxu0 %v1589
    %2024 = vmatprep.subr.mxu0 %v1592
    %2025 = vmatpush1.msra.mxu0 %v1591
    %2026 = vmatprep.subr.mxu0 %v1594
    %2027 = vmatpush1.msra.mxu0 %v1593
    %2028 = vmatprep.subr.mxu0 %v1596
    %2029 = vmatpush1.msra.mxu0 %v1595
    %2030 = vmatprep.subr.mxu0 %v1598
    %2031 = vmatpush1.msra.mxu0 %v1597
    %2032 = vmatprep.subr.mxu0 %v1600
    %2033 = vmatpush1.msra.mxu0 %v1599
    %2034 = vmatprep.subr.mxu0 %v1602
    %2035 = vmatpush1.msra.mxu0 %v1601
    %2036 = vmatprep.subr.mxu0 %v1604
    %2037 = vmatpush1.msra.mxu0 %v1603
    %2038 = vmatprep.subr.mxu0 %v1606
    %2039 = vmatpush1.msra.mxu0 %v1605
    %2040 = vmatprep.subr.mxu0 %v1608
    %2041 = vmatpush1.msra.mxu0 %v1607
    %2042 = vmatprep.subr.mxu0 %v1610
    %2043 = vmatpush1.msra.mxu0 %v1609
    %2044 = vmatprep.subr.mxu0 %v1612
    %2045 = vmatpush1.msra.mxu0 %v1611
    %2046 = vmatprep.subr.mxu0 %v1614
    %2047 = vmatpush1.msra.mxu0 %v1613
    %2048 = vmatprep.subr.mxu0 %v1616
    %2049 = vmatpush1.msra.mxu0 %v1615
    %2050 = vmatprep.subr.mxu0 %v1618
    %2051 = vmatpush1.msra.mxu0 %v1617
    %2052 = vmatprep.subr.mxu0 %v1620
    %2053 = vmatpush1.msra.mxu0 %v1619
    %2054 = vmatprep.subr.mxu0 %v1622
    %2055 = vmatpush1.msra.mxu0 %v1621
    %2056 = vmatprep.subr.mxu0 %v1624
    %2057 = vmatpush1.msra.mxu0 %v1623
    %2058 = vmatprep.subr.mxu0 %v1626
    %2059 = vmatpush1.msra.mxu0 %v1625
    %2060 = vmatprep.subr.mxu0 %v1628
    %2061 = vmatpush1.msra.mxu0 %v1627
    %2062 = vmatprep.subr.mxu0 %v1630
    %2063 = vmatpush1.msra.mxu0 %v1629
    %2064 = vmatprep.mubr.f32.mxu0 %v1997
    %2065 = vmatmul.mubr.f32.gmra.mrb[0].mxu0 %v1996
    %v2066 = vpop.f32.mrb[0].mxu0
    %v2067 = vadd.f32 0.0, %v2066
    %v2068 = vpop.f32.mrb[0].mxu0
    %v2069 = vadd.f32 0.0, %v2068
    %2070 = vdwg.mxu0
    %2071 = vmatprep.subr.mxu0 %v1632
    %2072 = vmatpush1.msra.mxu0 %v1631
    %2073 = vmatprep.subr.mxu0 %v1634
    %2074 = vmatpush1.msra.mxu0 %v1633
    %2075 = vmatprep.subr.mxu0 %v1636
    %2076 = vmatpush1.msra.mxu0 %v1635
    %2077 = vmatprep.subr.mxu0 %v1638
    %2078 = vmatpush1.msra.mxu0 %v1637
    %2079 = vmatprep.subr.mxu0 %v1640
    %2080 = vmatpush1.msra.mxu0 %v1639
    %2081 = vmatprep.subr.mxu0 %v1642
    %2082 = vmatpush1.msra.mxu0 %v1641
    %2083 = vmatprep.subr.mxu0 %v1644
    %2084 = vmatpush1.msra.mxu0 %v1643
    %2085 = vmatprep.subr.mxu0 %v1646
    %2086 = vmatpush1.msra.mxu0 %v1645
    %2087 = vmatprep.subr.mxu0 %v1648
    %2088 = vmatpush1.msra.mxu0 %v1647
    %2089 = vmatprep.subr.mxu0 %v1650
    %2090 = vmatpush1.msra.mxu0 %v1649
    %2091 = vmatprep.subr.mxu0 %v1652
    %2092 = vmatpush1.msra.mxu0 %v1651
    %2093 = vmatprep.subr.mxu0 %v1654
    %2094 = vmatpush1.msra.mxu0 %v1653
    %2095 = vmatprep.subr.mxu0 %v1656
    %2096 = vmatpush1.msra.mxu0 %v1655
    %2097 = vmatprep.subr.mxu0 %v1658
    %2098 = vmatpush1.msra.mxu0 %v1657
    %2099 = vmatprep.subr.mxu0 %v1660
    %2100 = vmatpush1.msra.mxu0 %v1659
    %2101 = vmatprep.subr.mxu0 %v1662
    %2102 = vmatpush1.msra.mxu0 %v1661
    %2103 = vmatprep.subr.mxu0 %v1664
    %2104 = vmatpush1.msra.mxu0 %v1663
    %2105 = vmatprep.subr.mxu0 %v1666
    %2106 = vmatpush1.msra.mxu0 %v1665
    %2107 = vmatprep.subr.mxu0 %v1668
    %2108 = vmatpush1.msra.mxu0 %v1667
    %2109 = vmatprep.subr.mxu0 %v1670
    %2110 = vmatpush1.msra.mxu0 %v1669
    %2111 = vmatprep.subr.mxu0 %v1672
    %2112 = vmatpush1.msra.mxu0 %v1671
    %2113 = vmatprep.subr.mxu0 %v1674
    %2114 = vmatpush1.msra.mxu0 %v1673
    %2115 = vmatprep.subr.mxu0 %v1676
    %2116 = vmatpush1.msra.mxu0 %v1675
    %2117 = vmatprep.subr.mxu0 %v1678
    %2118 = vmatpush1.msra.mxu0 %v1677
    %2119 = vmatprep.subr.mxu0 %v1680
    %2120 = vmatpush1.msra.mxu0 %v1679
    %2121 = vmatprep.subr.mxu0 %v1682
    %2122 = vmatpush1.msra.mxu0 %v1681
    %2123 = vmatprep.subr.mxu0 %v1684
    %2124 = vmatpush1.msra.mxu0 %v1683
    %2125 = vmatprep.subr.mxu0 %v1686
    %2126 = vmatpush1.msra.mxu0 %v1685
    %2127 = vmatprep.subr.mxu0 %v1688
    %2128 = vmatpush1.msra.mxu0 %v1687
    %2129 = vmatprep.subr.mxu0 %v1690
    %2130 = vmatpush1.msra.mxu0 %v1689
    %2131 = vmatprep.subr.mxu0 %v1692
    %2132 = vmatpush1.msra.mxu0 %v1691
    %2133 = vmatprep.subr.mxu0 %v1694
    %2134 = vmatpush1.msra.mxu0 %v1693
    %2135 = vmatprep.mubr.f32.mxu0 %v1999
    %2136 = vmatmul.mubr.f32.gmra.mrb[0].mxu0 %v1998
    %v2137 = vpop.f32.mrb[0].mxu0
    %v2138 = vadd.f32 %v2067, %v2137
    %v2139 = vpop.f32.mrb[0].mxu0
    %v2140 = vadd.f32 %v2069, %v2139
    %2141 = vdwg.mxu0
    %v2142 = vadd.f32 %v1852, %v2138
    %v2143 = vadd.f32 %v1853, %v2140
    %2144 = vmatprep.subr.mxu0 %v261
    %2145 = vmatpush1.msra.mxu0 %v260
    %2146 = vmatprep.subr.mxu0 %v263
    %2147 = vmatpush1.msra.mxu0 %v262
    %2148 = vmatprep.subr.mxu0 %v265
    %2149 = vmatpush1.msra.mxu0 %v264
    %2150 = vmatprep.subr.mxu0 %v267
    %2151 = vmatpush1.msra.mxu0 %v266
    %2152 = vmatprep.subr.mxu0 %v269
    %2153 = vmatpush1.msra.mxu0 %v268
    %2154 = vmatprep.subr.mxu0 %v271
    %2155 = vmatpush1.msra.mxu0 %v270
    %2156 = vmatprep.subr.mxu0 %v273
    %2157 = vmatpush1.msra.mxu0 %v272
    %2158 = vmatprep.subr.mxu0 %v275
    %2159 = vmatpush1.msra.mxu0 %v274
    %2160 = vmatprep.subr.mxu0 %v277
    %2161 = vmatpush1.msra.mxu0 %v276
    %2162 = vmatprep.subr.mxu0 %v279
    %2163 = vmatpush1.msra.mxu0 %v278
    %2164 = vmatprep.subr.mxu0 %v281
    %2165 = vmatpush1.msra.mxu0 %v280
    %2166 = vmatprep.subr.mxu0 %v283
    %2167 = vmatpush1.msra.mxu0 %v282
    %2168 = vmatprep.subr.mxu0 %v285
    %2169 = vmatpush1.msra.mxu0 %v284
    %2170 = vmatprep.subr.mxu0 %v287
    %2171 = vmatpush1.msra.mxu0 %v286
    %2172 = vmatprep.subr.mxu0 %v289
    %2173 = vmatpush1.msra.mxu0 %v288
    %2174 = vmatprep.subr.mxu0 %v291
    %2175 = vmatpush1.msra.mxu0 %v290
    %2176 = vmatprep.subr.mxu0 %v293
    %2177 = vmatpush1.msra.mxu0 %v292
    %2178 = vmatprep.subr.mxu0 %v295
    %2179 = vmatpush1.msra.mxu0 %v294
    %2180 = vmatprep.subr.mxu0 %v297
    %2181 = vmatpush1.msra.mxu0 %v296
    %2182 = vmatprep.subr.mxu0 %v299
    %2183 = vmatpush1.msra.mxu0 %v298
    %2184 = vmatprep.subr.mxu0 %v301
    %2185 = vmatpush1.msra.mxu0 %v300
    %2186 = vmatprep.subr.mxu0 %v303
    %2187 = vmatpush1.msra.mxu0 %v302
    %2188 = vmatprep.subr.mxu0 %v305
    %2189 = vmatpush1.msra.mxu0 %v304
    %2190 = vmatprep.subr.mxu0 %v307
    %2191 = vmatpush1.msra.mxu0 %v306
    %2192 = vmatprep.subr.mxu0 %v309
    %2193 = vmatpush1.msra.mxu0 %v308
    %2194 = vmatprep.subr.mxu0 %v311
    %2195 = vmatpush1.msra.mxu0 %v310
    %2196 = vmatprep.subr.mxu0 %v313
    %2197 = vmatpush1.msra.mxu0 %v312
    %2198 = vmatprep.subr.mxu0 %v315
    %2199 = vmatpush1.msra.mxu0 %v314
    %2200 = vmatprep.subr.mxu0 %v317
    %2201 = vmatpush1.msra.mxu0 %v316
    %2202 = vmatprep.subr.mxu0 %v319
    %2203 = vmatpush1.msra.mxu0 %v318
    %2204 = vmatprep.subr.mxu0 %v321
    %2205 = vmatpush1.msra.mxu0 %v320
    %2206 = vmatprep.subr.mxu0 %v323
    %2207 = vmatpush1.msra.mxu0 %v322
    %2208 = vmatprep.mubr.f32.mxu0 %v2143
    %2209 = vmatmul.mubr.f32.gmra.mrb[0].mxu0 %v2142
    %v2210 = vpop.f32.mrb[0].mxu0
    %v2211 = vadd.f32 0.0, %v2210
    %v2212 = vpop.f32.mrb[0].mxu0
    %v2213 = vadd.f32 0.0, %v2212
    %2214 = vdwg.mxu0
    %v2215 = vsub.f32 %v2142, %v2211
    %v2216 = vsub.f32 %v2143, %v2213
    %2217 = vmatprep.subr.mxu0 %v325
    %2218 = vmatpush1.msra.mxu0 %v324
    %2219 = vmatprep.subr.mxu0 %v327
    %2220 = vmatpush1.msra.mxu0 %v326
    %2221 = vmatprep.subr.mxu0 %v329
    %2222 = vmatpush1.msra.mxu0 %v328
    %2223 = vmatprep.subr.mxu0 %v331
    %2224 = vmatpush1.msra.mxu0 %v330
    %2225 = vmatprep.subr.mxu0 %v333
    %2226 = vmatpush1.msra.mxu0 %v332
    %2227 = vmatprep.subr.mxu0 %v335
    %2228 = vmatpush1.msra.mxu0 %v334
    %2229 = vmatprep.subr.mxu0 %v337
    %2230 = vmatpush1.msra.mxu0 %v336
    %2231 = vmatprep.subr.mxu0 %v339
    %2232 = vmatpush1.msra.mxu0 %v338
    %2233 = vmatprep.subr.mxu0 %v341
    %2234 = vmatpush1.msra.mxu0 %v340
    %2235 = vmatprep.subr.mxu0 %v343
    %2236 = vmatpush1.msra.mxu0 %v342
    %2237 = vmatprep.subr.mxu0 %v345
    %2238 = vmatpush1.msra.mxu0 %v344
    %2239 = vmatprep.subr.mxu0 %v347
    %2240 = vmatpush1.msra.mxu0 %v346
    %2241 = vmatprep.subr.mxu0 %v349
    %2242 = vmatpush1.msra.mxu0 %v348
    %2243 = vmatprep.subr.mxu0 %v351
    %2244 = vmatpush1.msra.mxu0 %v350
    %2245 = vmatprep.subr.mxu0 %v353
    %2246 = vmatpush1.msra.mxu0 %v352
    %2247 = vmatprep.subr.mxu0 %v355
    %2248 = vmatpush1.msra.mxu0 %v354
    %2249 = vmatprep.subr.mxu0 %v357
    %2250 = vmatpush1.msra.mxu0 %v356
    %2251 = vmatprep.subr.mxu0 %v359
    %2252 = vmatpush1.msra.mxu0 %v358
    %2253 = vmatprep.subr.mxu0 %v361
    %2254 = vmatpush1.msra.mxu0 %v360
    %2255 = vmatprep.subr.mxu0 %v363
    %2256 = vmatpush1.msra.mxu0 %v362
    %2257 = vmatprep.subr.mxu0 %v365
    %2258 = vmatpush1.msra.mxu0 %v364
    %2259 = vmatprep.subr.mxu0 %v367
    %2260 = vmatpush1.msra.mxu0 %v366
    %2261 = vmatprep.subr.mxu0 %v369
    %2262 = vmatpush1.msra.mxu0 %v368
    %2263 = vmatprep.subr.mxu0 %v371
    %2264 = vmatpush1.msra.mxu0 %v370
    %2265 = vmatprep.subr.mxu0 %v373
    %2266 = vmatpush1.msra.mxu0 %v372
    %2267 = vmatprep.subr.mxu0 %v375
    %2268 = vmatpush1.msra.mxu0 %v374
    %2269 = vmatprep.subr.mxu0 %v377
    %2270 = vmatpush1.msra.mxu0 %v376
    %2271 = vmatprep.subr.mxu0 %v379
    %2272 = vmatpush1.msra.mxu0 %v378
    %2273 = vmatprep.subr.mxu0 %v381
    %2274 = vmatpush1.msra.mxu0 %v380
    %2275 = vmatprep.subr.mxu0 %v383
    %2276 = vmatpush1.msra.mxu0 %v382
    %2277 = vmatprep.subr.mxu0 %v385
    %2278 = vmatpush1.msra.mxu0 %v384
    %2279 = vmatprep.subr.mxu0 %v387
    %2280 = vmatpush1.msra.mxu0 %v386
    %2281 = vmatprep.mubr.f32.mxu0 %v2216
    %2282 = vmatmul.mubr.f32.gmra.mrb[0].mxu0 %v2215
    %v2283 = vpop.f32.mrb[0].mxu0
    %v2284 = vadd.f32 0.0, %v2283
    %v2285 = vpop.f32.mrb[0].mxu0
    %v2286 = vadd.f32 0.0, %v2285
    %2287 = vdwg.mxu0
    %v2288 = vsub.f32 %v2215, %v2284
    %v2289 = vsub.f32 %v2216, %v2286
    %v2290 = vmul.f32 %v2288, %v2288
    %v2291 = vmul.f32 %v2289, %v2289
    %2292 = vmatprep.subr.mxu0 %v325
    %2293 = vmatpush1.msra.mxu0 %v324
    %2294 = vmatprep.subr.mxu0 %v327
    %2295 = vmatpush1.msra.mxu0 %v326
    %2296 = vmatprep.subr.mxu0 %v329
    %2297 = vmatpush1.msra.mxu0 %v328
    %2298 = vmatprep.subr.mxu0 %v331
    %2299 = vmatpush1.msra.mxu0 %v330
    %2300 = vmatprep.subr.mxu0 %v333
    %2301 = vmatpush1.msra.mxu0 %v332
    %2302 = vmatprep.subr.mxu0 %v335
    %2303 = vmatpush1.msra.mxu0 %v334
    %2304 = vmatprep.subr.mxu0 %v337
    %2305 = vmatpush1.msra.mxu0 %v336
    %2306 = vmatprep.subr.mxu0 %v339
    %2307 = vmatpush1.msra.mxu0 %v338
    %2308 = vmatprep.subr.mxu0 %v341
    %2309 = vmatpush1.msra.mxu0 %v340
    %2310 = vmatprep.subr.mxu0 %v343
    %2311 = vmatpush1.msra.mxu0 %v342
    %2312 = vmatprep.subr.mxu0 %v345
    %2313 = vmatpush1.msra.mxu0 %v344
    %2314 = vmatprep.subr.mxu0 %v347
    %2315 = vmatpush1.msra.mxu0 %v346
    %2316 = vmatprep.subr.mxu0 %v349
    %2317 = vmatpush1.msra.mxu0 %v348
    %2318 = vmatprep.subr.mxu0 %v351
    %2319 = vmatpush1.msra.mxu0 %v350
    %2320 = vmatprep.subr.mxu0 %v353
    %2321 = vmatpush1.msra.mxu0 %v352
    %2322 = vmatprep.subr.mxu0 %v355
    %2323 = vmatpush1.msra.mxu0 %v354
    %2324 = vmatprep.subr.mxu0 %v357
    %2325 = vmatpush1.msra.mxu0 %v356
    %2326 = vmatprep.subr.mxu0 %v359
    %2327 = vmatpush1.msra.mxu0 %v358
    %2328 = vmatprep.subr.mxu0 %v361
    %2329 = vmatpush1.msra.mxu0 %v360
    %2330 = vmatprep.subr.mxu0 %v363
    %2331 = vmatpush1.msra.mxu0 %v362
    %2332 = vmatprep.subr.mxu0 %v365
    %2333 = vmatpush1.msra.mxu0 %v364
    %2334 = vmatprep.subr.mxu0 %v367
    %2335 = vmatpush1.msra.mxu0 %v366
    %2336 = vmatprep.subr.mxu0 %v369
    %2337 = vmatpush1.msra.mxu0 %v368
    %2338 = vmatprep.subr.mxu0 %v371
    %2339 = vmatpush1.msra.mxu0 %v370
    %2340 = vmatprep.subr.mxu0 %v373
    %2341 = vmatpush1.msra.mxu0 %v372
    %2342 = vmatprep.subr.mxu0 %v375
    %2343 = vmatpush1.msra.mxu0 %v374
    %2344 = vmatprep.subr.mxu0 %v377
    %2345 = vmatpush1.msra.mxu0 %v376
    %2346 = vmatprep.subr.mxu0 %v379
    %2347 = vmatpush1.msra.mxu0 %v378
    %2348 = vmatprep.subr.mxu0 %v381
    %2349 = vmatpush1.msra.mxu0 %v380
    %2350 = vmatprep.subr.mxu0 %v383
    %2351 = vmatpush1.msra.mxu0 %v382
    %2352 = vmatprep.subr.mxu0 %v385
    %2353 = vmatpush1.msra.mxu0 %v384
    %2354 = vmatprep.subr.mxu0 %v387
    %2355 = vmatpush1.msra.mxu0 %v386
    %2356 = vmatprep.mubr.f32.mxu0 %v2291
    %2357 = vmatmul.mubr.f32.gmra.mrb[0].mxu0 %v2290
    %v2358 = vpop.f32.mrb[0].mxu0
    %v2359 = vadd.f32 1e-05, %v2358
    %v2360 = vpop.f32.mrb[0].mxu0
    %v2361 = vadd.f32 1e-05, %v2360
    %2362 = vdwg.mxu0
    %v2363 = vrsqrt.pop %v2359
    %v2364 = vrsqrt.pop %v2361
    %v2365 = vmul.f32 %v2288, %v2363
    %v2366 = vmul.f32 %v2289, %v2364
    %v2367 = vld [vmem:[%s8] sm:$0x3]
    %v2369 = vlaneseq
    %v2370 = vshrl.u32 %v2369, 7
    %v2371 = vsub.s32 0, %v2370
    %v2372 = vrot.slane %v2367, %v2371
    %v2373 = vlaneseq
    %v2374 = vshrl.u32 %v2373, 7
    %v2375 = vsub.s32 1, %v2374
    %v2376 = vrot.slane %v2367, %v2375
    %v2379 = vmul.f32 %v2365, %v2372
    %v2380 = vmul.f32 %v2366, %v2376
    %v2381 = vld [vmem:[%s9] sm:$0x3]
    %v2383 = vlaneseq
    %v2384 = vshrl.u32 %v2383, 7
    %v2385 = vsub.s32 0, %v2384
    %v2386 = vrot.slane %v2381, %v2385
    %v2387 = vlaneseq
    %v2388 = vshrl.u32 %v2387, 7
    %v2389 = vsub.s32 1, %v2388
    %v2390 = vrot.slane %v2381, %v2389
    %v2393 = vadd.f32 %v2379, %v2386
    %v2394 = vadd.f32 %v2380, %v2390
    %v2395 = vld [vmem:[#allocation7] sm:$0xff]
    %v2396 = vld [vmem:[#allocation7 + $0x8] sm:$0xff]
    %v2397 = vld [vmem:[#allocation7 + $0x10] sm:$0xff]
    %v2398 = vld [vmem:[#allocation7 + $0x18] sm:$0xff]
    %v2399 = vld [vmem:[#allocation7 + $0x20] sm:$0xff]
    %v2400 = vld [vmem:[#allocation7 + $0x28] sm:$0xff]
    %v2401 = vld [vmem:[#allocation7 + $0x30] sm:$0xff]
    %v2402 = vld [vmem:[#allocation7 + $0x38] sm:$0xff]
    %v2403 = vld [vmem:[#allocation7 + $0x40] sm:$0xff]
    %v2404 = vld [vmem:[#allocation7 + $0x48] sm:$0xff]
    %v2405 = vld [vmem:[#allocation7 + $0x50] sm:$0xff]
    %v2406 = vld [vmem:[#allocation7 + $0x58] sm:$0xff]
    %v2407 = vld [vmem:[#allocation7 + $0x60] sm:$0xff]
    %v2408 = vld [vmem:[#allocation7 + $0x68] sm:$0xff]
    %v2409 = vld [vmem:[#allocation7 + $0x70] sm:$0xff]
    %v2410 = vld [vmem:[#allocation7 + $0x78] sm:$0xff]
    %v2411 = vld [vmem:[#allocation7 + $0x80] sm:$0xff]
    %v2412 = vld [vmem:[#allocation7 + $0x88] sm:$0xff]
    %v2413 = vld [vmem:[#allocation7 + $0x90] sm:$0xff]
    %v2414 = vld [vmem:[#allocation7 + $0x98] sm:$0xff]
    %v2415 = vld [vmem:[#allocation7 + $0xa0] sm:$0xff]
    %v2416 = vld [vmem:[#allocation7 + $0xa8] sm:$0xff]
    %v2417 = vld [vmem:[#allocation7 + $0xb0] sm:$0xff]
    %v2418 = vld [vmem:[#allocation7 + $0xb8] sm:$0xff]
    %v2419 = vld [vmem:[#allocation7 + $0xc0] sm:$0xff]
    %v2420 = vld [vmem:[#allocation7 + $0xc8] sm:$0xff]
    %v2421 = vld [vmem:[#allocation7 + $0xd0] sm:$0xff]
    %v2422 = vld [vmem:[#allocation7 + $0xd8] sm:$0xff]
    %v2423 = vld [vmem:[#allocation7 + $0xe0] sm:$0xff]
    %v2424 = vld [vmem:[#allocation7 + $0xe8] sm:$0xff]
    %v2425 = vld [vmem:[#allocation7 + $0xf0] sm:$0xff]
    %v2426 = vld [vmem:[#allocation7 + $0xf8] sm:$0xff]
    %v2427 = vld [vmem:[#allocation7 + $0x100] sm:$0xff]
    %v2428 = vld [vmem:[#allocation7 + $0x108] sm:$0xff]
    %v2429 = vld [vmem:[#allocation7 + $0x110] sm:$0xff]
    %v2430 = vld [vmem:[#allocation7 + $0x118] sm:$0xff]
    %v2431 = vld [vmem:[#allocation7 + $0x120] sm:$0xff]
    %v2432 = vld [vmem:[#allocation7 + $0x128] sm:$0xff]
    %v2433 = vld [vmem:[#allocation7 + $0x130] sm:$0xff]
    %v2434 = vld [vmem:[#allocation7 + $0x138] sm:$0xff]
    %v2435 = vld [vmem:[#allocation7 + $0x140] sm:$0xff]
    %v2436 = vld [vmem:[#allocation7 + $0x148] sm:$0xff]
    %v2437 = vld [vmem:[#allocation7 + $0x150] sm:$0xff]
    %v2438 = vld [vmem:[#allocation7 + $0x158] sm:$0xff]
    %v2439 = vld [vmem:[#allocation7 + $0x160] sm:$0xff]
    %v2440 = vld [vmem:[#allocation7 + $0x168] sm:$0xff]
    %v2441 = vld [vmem:[#allocation7 + $0x170] sm:$0xff]
    %v2442 = vld [vmem:[#allocation7 + $0x178] sm:$0xff]
    %v2443 = vld [vmem:[#allocation7 + $0x180] sm:$0xff]
    %v2444 = vld [vmem:[#allocation7 + $0x188] sm:$0xff]
    %v2445 = vld [vmem:[#allocation7 + $0x190] sm:$0xff]
    %v2446 = vld [vmem:[#allocation7 + $0x198] sm:$0xff]
    %v2447 = vld [vmem:[#allocation7 + $0x1a0] sm:$0xff]
    %v2448 = vld [vmem:[#allocation7 + $0x1a8] sm:$0xff]
    %v2449 = vld [vmem:[#allocation7 + $0x1b0] sm:$0xff]
    %v2450 = vld [vmem:[#allocation7 + $0x1b8] sm:$0xff]
    %v2451 = vld [vmem:[#allocation7 + $0x1c0] sm:$0xff]
    %v2452 = vld [vmem:[#allocation7 + $0x1c8] sm:$0xff]
    %v2453 = vld [vmem:[#allocation7 + $0x1d0] sm:$0xff]
    %v2454 = vld [vmem:[#allocation7 + $0x1d8] sm:$0xff]
    %v2455 = vld [vmem:[#allocation7 + $0x1e0] sm:$0xff]
    %v2456 = vld [vmem:[#allocation7 + $0x1e8] sm:$0xff]
    %v2457 = vld [vmem:[#allocation7 + $0x1f0] sm:$0xff]
    %v2458 = vld [vmem:[#allocation7 + $0x1f8] sm:$0xff]
    %2459 = vmatprep.subr.mxu0 %v2396
    %2460 = vmatpush1.msra.mxu0 %v2395
    %2461 = vmatprep.subr.mxu0 %v2398
    %2462 = vmatpush1.msra.mxu0 %v2397
    %2463 = vmatprep.subr.mxu0 %v2400
    %2464 = vmatpush1.msra.mxu0 %v2399
    %2465 = vmatprep.subr.mxu0 %v2402
    %2466 = vmatpush1.msra.mxu0 %v2401
    %2467 = vmatprep.subr.mxu0 %v2404
    %2468 = vmatpush1.msra.mxu0 %v2403
    %2469 = vmatprep.subr.mxu0 %v2406
    %2470 = vmatpush1.msra.mxu0 %v2405
    %2471 = vmatprep.subr.mxu0 %v2408
    %2472 = vmatpush1.msra.mxu0 %v2407
    %2473 = vmatprep.subr.mxu0 %v2410
    %2474 = vmatpush1.msra.mxu0 %v2409
    %2475 = vmatprep.subr.mxu0 %v2412
    %2476 = vmatpush1.msra.mxu0 %v2411
    %2477 = vmatprep.subr.mxu0 %v2414
    %2478 = vmatpush1.msra.mxu0 %v2413
    %2479 = vmatprep.subr.mxu0 %v2416
    %2480 = vmatpush1.msra.mxu0 %v2415
    %2481 = vmatprep.subr.mxu0 %v2418
    %2482 = vmatpush1.msra.mxu0 %v2417
    %2483 = vmatprep.subr.mxu0 %v2420
    %2484 = vmatpush1.msra.mxu0 %v2419
    %2485 = vmatprep.subr.mxu0 %v2422
    %2486 = vmatpush1.msra.mxu0 %v2421
    %2487 = vmatprep.subr.mxu0 %v2424
    %2488 = vmatpush1.msra.mxu0 %v2423
    %2489 = vmatprep.subr.mxu0 %v2426
    %2490 = vmatpush1.msra.mxu0 %v2425
    %2491 = vmatprep.subr.mxu0 %v2428
    %2492 = vmatpush1.msra.mxu0 %v2427
    %2493 = vmatprep.subr.mxu0 %v2430
    %2494 = vmatpush1.msra.mxu0 %v2429
    %2495 = vmatprep.subr.mxu0 %v2432
    %2496 = vmatpush1.msra.mxu0 %v2431
    %2497 = vmatprep.subr.mxu0 %v2434
    %2498 = vmatpush1.msra.mxu0 %v2433
    %2499 = vmatprep.subr.mxu0 %v2436
    %2500 = vmatpush1.msra.mxu0 %v2435
    %2501 = vmatprep.subr.mxu0 %v2438
    %2502 = vmatpush1.msra.mxu0 %v2437
    %2503 = vmatprep.subr.mxu0 %v2440
    %2504 = vmatpush1.msra.mxu0 %v2439
    %2505 = vmatprep.subr.mxu0 %v2442
    %2506 = vmatpush1.msra.mxu0 %v2441
    %2507 = vmatprep.subr.mxu0 %v2444
    %2508 = vmatpush1.msra.mxu0 %v2443
    %2509 = vmatprep.subr.mxu0 %v2446
    %2510 = vmatpush1.msra.mxu0 %v2445
    %2511 = vmatprep.subr.mxu0 %v2448
    %2512 = vmatpush1.msra.mxu0 %v2447
    %2513 = vmatprep.subr.mxu0 %v2450
    %2514 = vmatpush1.msra.mxu0 %v2449
    %2515 = vmatprep.subr.mxu0 %v2452
    %2516 = vmatpush1.msra.mxu0 %v2451
    %2517 = vmatprep.subr.mxu0 %v2454
    %2518 = vmatpush1.msra.mxu0 %v2453
    %2519 = vmatprep.subr.mxu0 %v2456
    %2520 = vmatpush1.msra.mxu0 %v2455
    %2521 = vmatprep.subr.mxu0 %v2458
    %2522 = vmatpush1.msra.mxu0 %v2457
    %2523 = vmatprep.mubr.f32.mxu0 %v2394
    %2524 = vmatmul.mubr.f32.gmra.mrb[0].mxu0 %v2393
    %v2525 = vpop.f32.mrb[0].mxu0
    %v2526 = vadd.f32 0.0, %v2525
    %v2527 = vpop.f32.mrb[0].mxu0
    %v2528 = vadd.f32 0.0, %v2527
    %2529 = vdwg.mxu0
    %v2530 = vsub.f32 %v2393, %v2526
    %v2531 = vsub.f32 %v2394, %v2528
    %v2532 = vld [vmem:[#allocation4] sm:$0xff]
    %v2533 = vld [vmem:[#allocation4 + $0x8] sm:$0xff]
    %v2534 = vld [vmem:[#allocation4 + $0x10] sm:$0xff]
    %v2535 = vld [vmem:[#allocation4 + $0x18] sm:$0xff]
    %v2536 = vld [vmem:[#allocation4 + $0x20] sm:$0xff]
    %v2537 = vld [vmem:[#allocation4 + $0x28] sm:$0xff]
    %v2538 = vld [vmem:[#allocation4 + $0x30] sm:$0xff]
    %v2539 = vld [vmem:[#allocation4 + $0x38] sm:$0xff]
    %v2540 = vld [vmem:[#allocation4 + $0x40] sm:$0xff]
    %v2541 = vld [vmem:[#allocation4 + $0x48] sm:$0xff]
    %v2542 = vld [vmem:[#allocation4 + $0x50] sm:$0xff]
    %v2543 = vld [vmem:[#allocation4 + $0x58] sm:$0xff]
    %v2544 = vld [vmem:[#allocation4 + $0x60] sm:$0xff]
    %v2545 = vld [vmem:[#allocation4 + $0x68] sm:$0xff]
    %v2546 = vld [vmem:[#allocation4 + $0x70] sm:$0xff]
    %v2547 = vld [vmem:[#allocation4 + $0x78] sm:$0xff]
    %v2548 = vld [vmem:[#allocation4 + $0x80] sm:$0xff]
    %v2549 = vld [vmem:[#allocation4 + $0x88] sm:$0xff]
    %v2550 = vld [vmem:[#allocation4 + $0x90] sm:$0xff]
    %v2551 = vld [vmem:[#allocation4 + $0x98] sm:$0xff]
    %v2552 = vld [vmem:[#allocation4 + $0xa0] sm:$0xff]
    %v2553 = vld [vmem:[#allocation4 + $0xa8] sm:$0xff]
    %v2554 = vld [vmem:[#allocation4 + $0xb0] sm:$0xff]
    %v2555 = vld [vmem:[#allocation4 + $0xb8] sm:$0xff]
    %v2556 = vld [vmem:[#allocation4 + $0xc0] sm:$0xff]
    %v2557 = vld [vmem:[#allocation4 + $0xc8] sm:$0xff]
    %v2558 = vld [vmem:[#allocation4 + $0xd0] sm:$0xff]
    %v2559 = vld [vmem:[#allocation4 + $0xd8] sm:$0xff]
    %v2560 = vld [vmem:[#allocation4 + $0xe0] sm:$0xff]
    %v2561 = vld [vmem:[#allocation4 + $0xe8] sm:$0xff]
    %v2562 = vld [vmem:[#allocation4 + $0xf0] sm:$0xff]
    %v2563 = vld [vmem:[#allocation4 + $0xf8] sm:$0xff]
    %v2564 = vld [vmem:[#allocation4 + $0x100] sm:$0xff]
    %v2565 = vld [vmem:[#allocation4 + $0x108] sm:$0xff]
    %v2566 = vld [vmem:[#allocation4 + $0x110] sm:$0xff]
    %v2567 = vld [vmem:[#allocation4 + $0x118] sm:$0xff]
    %v2568 = vld [vmem:[#allocation4 + $0x120] sm:$0xff]
    %v2569 = vld [vmem:[#allocation4 + $0x128] sm:$0xff]
    %v2570 = vld [vmem:[#allocation4 + $0x130] sm:$0xff]
    %v2571 = vld [vmem:[#allocation4 + $0x138] sm:$0xff]
    %v2572 = vld [vmem:[#allocation4 + $0x140] sm:$0xff]
    %v2573 = vld [vmem:[#allocation4 + $0x148] sm:$0xff]
    %v2574 = vld [vmem:[#allocation4 + $0x150] sm:$0xff]
    %v2575 = vld [vmem:[#allocation4 + $0x158] sm:$0xff]
    %v2576 = vld [vmem:[#allocation4 + $0x160] sm:$0xff]
    %v2577 = vld [vmem:[#allocation4 + $0x168] sm:$0xff]
    %v2578 = vld [vmem:[#allocation4 + $0x170] sm:$0xff]
    %v2579 = vld [vmem:[#allocation4 + $0x178] sm:$0xff]
    %2580 = vmatprep.subr.mxu0 %v2533
    %2581 = vmatpush1.msra.mxu0 %v2532
    %2582 = vmatprep.subr.mxu0 %v2535
    %2583 = vmatpush1.msra.mxu0 %v2534
    %2584 = vmatprep.subr.mxu0 %v2537
    %2585 = vmatpush1.msra.mxu0 %v2536
    %2586 = vmatprep.subr.mxu0 %v2539
    %2587 = vmatpush1.msra.mxu0 %v2538
    %2588 = vmatprep.subr.mxu0 %v2541
    %2589 = vmatpush1.msra.mxu0 %v2540
    %2590 = vmatprep.subr.mxu0 %v2543
    %2591 = vmatpush1.msra.mxu0 %v2542
    %2592 = vmatprep.subr.mxu0 %v2545
    %2593 = vmatpush1.msra.mxu0 %v2544
    %2594 = vmatprep.subr.mxu0 %v2547
    %2595 = vmatpush1.msra.mxu0 %v2546
    %2596 = vmatprep.subr.mxu0 %v2549
    %2597 = vmatpush1.msra.mxu0 %v2548
    %2598 = vmatprep.subr.mxu0 %v2551
    %2599 = vmatpush1.msra.mxu0 %v2550
    %2600 = vmatprep.subr.mxu0 %v2553
    %2601 = vmatpush1.msra.mxu0 %v2552
    %2602 = vmatprep.subr.mxu0 %v2555
    %2603 = vmatpush1.msra.mxu0 %v2554
    %2604 = vmatprep.subr.mxu0 %v2557
    %2605 = vmatpush1.msra.mxu0 %v2556
    %2606 = vmatprep.subr.mxu0 %v2559
    %2607 = vmatpush1.msra.mxu0 %v2558
    %2608 = vmatprep.subr.mxu0 %v2561
    %2609 = vmatpush1.msra.mxu0 %v2560
    %2610 = vmatprep.subr.mxu0 %v2563
    %2611 = vmatpush1.msra.mxu0 %v2562
    %2612 = vmatprep.subr.mxu0 %v2565
    %2613 = vmatpush1.msra.mxu0 %v2564
    %2614 = vmatprep.subr.mxu0 %v2567
    %2615 = vmatpush1.msra.mxu0 %v2566
    %2616 = vmatprep.subr.mxu0 %v2569
    %2617 = vmatpush1.msra.mxu0 %v2568
    %2618 = vmatprep.subr.mxu0 %v2571
    %2619 = vmatpush1.msra.mxu0 %v2570
    %2620 = vmatprep.subr.mxu0 %v2573
    %2621 = vmatpush1.msra.mxu0 %v2572
    %2622 = vmatprep.subr.mxu0 %v2575
    %2623 = vmatpush1.msra.mxu0 %v2574
    %2624 = vmatprep.subr.mxu0 %v2577
    %2625 = vmatpush1.msra.mxu0 %v2576
    %2626 = vmatprep.subr.mxu0 %v2579
    %2627 = vmatpush1.msra.mxu0 %v2578
    %2628 = vmatprep.subr.mxu0 0.0
    %2629 = vmatpush1.msra.mxu0 0.0
    %2630 = vmatprep.subr.mxu0 0.0
    %2631 = vmatpush1.msra.mxu0 0.0
    %2632 = vmatprep.subr.mxu0 0.0
    %2633 = vmatpush1.msra.mxu0 0.0
    %2634 = vmatprep.subr.mxu0 0.0
    %2635 = vmatpush1.msra.mxu0 0.0
    %2636 = vmatprep.subr.mxu0 0.0
    %2637 = vmatpush1.msra.mxu0 0.0
    %2638 = vmatprep.subr.mxu0 0.0
    %2639 = vmatpush1.msra.mxu0 0.0
    %2640 = vmatprep.subr.mxu0 0.0
    %2641 = vmatpush1.msra.mxu0 0.0
    %2642 = vmatprep.subr.mxu0 0.0
    %2643 = vmatpush1.msra.mxu0 0.0
    %2644 = vmatprep.mubr.f32.mxu0 %v458
    %2645 = vmatmul.mubr.f32.gmra.mrb[0].mxu0 %v454
    %v2646 = vpop.f32.mrb[0].mxu0
    %v2647 = vadd.f32 %v440, %v2646
    %v2648 = vpop.f32.mrb[0].mxu0
    %v2649 = vadd.f32 %v444, %v2648
    %2650 = vdwg.mxu0
    %v2651 = vld [vmem:[#allocation18] sm:$0xff]
    %v2652 = vld [vmem:[#allocation18 + $0x8] sm:$0xff]
    %v2653 = vld [vmem:[#allocation18 + $0x10] sm:$0xff]
    %v2654 = vld [vmem:[#allocation18 + $0x18] sm:$0xff]
    %v2655 = vld [vmem:[#allocation18 + $0x20] sm:$0xff]
    %v2656 = vld [vmem:[#allocation18 + $0x28] sm:$0xff]
    %v2657 = vld [vmem:[#allocation18 + $0x30] sm:$0xff]
    %v2658 = vld [vmem:[#allocation18 + $0x38] sm:$0xff]
    %v2659 = vld [vmem:[#allocation18 + $0x40] sm:$0xff]
    %v2660 = vld [vmem:[#allocation18 + $0x48] sm:$0xff]
    %v2661 = vld [vmem:[#allocation18 + $0x50] sm:$0xff]
    %v2662 = vld [vmem:[#allocation18 + $0x58] sm:$0xff]
    %v2663 = vld [vmem:[#allocation18 + $0x60] sm:$0xff]
    %v2664 = vld [vmem:[#allocation18 + $0x68] sm:$0xff]
    %v2665 = vld [vmem:[#allocation18 + $0x70] sm:$0xff]
    %v2666 = vld [vmem:[#allocation18 + $0x78] sm:$0xff]
    %v2667 = vld [vmem:[#allocation18 + $0x80] sm:$0xff]
    %v2668 = vld [vmem:[#allocation18 + $0x88] sm:$0xff]
    %v2669 = vld [vmem:[#allocation18 + $0x90] sm:$0xff]
    %v2670 = vld [vmem:[#allocation18 + $0x98] sm:$0xff]
    %v2671 = vld [vmem:[#allocation18 + $0xa0] sm:$0xff]
    %v2672 = vld [vmem:[#allocation18 + $0xa8] sm:$0xff]
    %v2673 = vld [vmem:[#allocation18 + $0xb0] sm:$0xff]
    %v2674 = vld [vmem:[#allocation18 + $0xb8] sm:$0xff]
    %v2675 = vld [vmem:[#allocation18 + $0xc0] sm:$0xff]
    %v2676 = vld [vmem:[#allocation18 + $0xc8] sm:$0xff]
    %v2677 = vld [vmem:[#allocation18 + $0xd0] sm:$0xff]
    %v2678 = vld [vmem:[#allocation18 + $0xd8] sm:$0xff]
    %v2679 = vld [vmem:[#allocation18 + $0xe0] sm:$0xff]
    %v2680 = vld [vmem:[#allocation18 + $0xe8] sm:$0xff]
    %v2681 = vld [vmem:[#allocation18 + $0xf0] sm:$0xff]
    %v2682 = vld [vmem:[#allocation18 + $0xf8] sm:$0xff]
    %v2683 = vld [vmem:[#allocation18 + $0x100] sm:$0xff]
    %v2684 = vld [vmem:[#allocation18 + $0x108] sm:$0xff]
    %v2685 = vld [vmem:[#allocation18 + $0x110] sm:$0xff]
    %v2686 = vld [vmem:[#allocation18 + $0x118] sm:$0xff]
    %v2687 = vld [vmem:[#allocation18 + $0x120] sm:$0xff]
    %v2688 = vld [vmem:[#allocation18 + $0x128] sm:$0xff]
    %v2689 = vld [vmem:[#allocation18 + $0x130] sm:$0xff]
    %v2690 = vld [vmem:[#allocation18 + $0x138] sm:$0xff]
    %v2691 = vld [vmem:[#allocation18 + $0x140] sm:$0xff]
    %v2692 = vld [vmem:[#allocation18 + $0x148] sm:$0xff]
    %v2693 = vld [vmem:[#allocation18 + $0x150] sm:$0xff]
    %v2694 = vld [vmem:[#allocation18 + $0x158] sm:$0xff]
    %v2695 = vld [vmem:[#allocation18 + $0x160] sm:$0xff]
    %v2696 = vld [vmem:[#allocation18 + $0x168] sm:$0xff]
    %v2697 = vld [vmem:[#allocation18 + $0x170] sm:$0xff]
    %v2698 = vld [vmem:[#allocation18 + $0x178] sm:$0xff]
    %v2699 = vld [vmem:[#allocation18 + $0x180] sm:$0xff]
    %v2700 = vld [vmem:[#allocation18 + $0x188] sm:$0xff]
    %v2701 = vld [vmem:[#allocation18 + $0x190] sm:$0xff]
    %v2702 = vld [vmem:[#allocation18 + $0x198] sm:$0xff]
    %v2703 = vld [vmem:[#allocation18 + $0x1a0] sm:$0xff]
    %v2704 = vld [vmem:[#allocation18 + $0x1a8] sm:$0xff]
    %v2705 = vld [vmem:[#allocation18 + $0x1b0] sm:$0xff]
    %v2706 = vld [vmem:[#allocation18 + $0x1b8] sm:$0xff]
    %v2707 = vld [vmem:[#allocation18 + $0x1c0] sm:$0xff]
    %v2708 = vld [vmem:[#allocation18 + $0x1c8] sm:$0xff]
    %v2709 = vld [vmem:[#allocation18 + $0x1d0] sm:$0xff]
    %v2710 = vld [vmem:[#allocation18 + $0x1d8] sm:$0xff]
    %v2711 = vld [vmem:[#allocation18 + $0x1e0] sm:$0xff]
    %v2712 = vld [vmem:[#allocation18 + $0x1e8] sm:$0xff]
    %v2713 = vld [vmem:[#allocation18 + $0x1f0] sm:$0xff]
    %v2714 = vld [vmem:[#allocation18 + $0x1f8] sm:$0xff]
    %2715 = vmatprep.subr.mxu0 %v2652
    %2716 = vmatpush1.msra.mxu0 %v2651
    %2717 = vmatprep.subr.mxu0 %v2654
    %2718 = vmatpush1.msra.mxu0 %v2653
    %2719 = vmatprep.subr.mxu0 %v2656
    %2720 = vmatpush1.msra.mxu0 %v2655
    %2721 = vmatprep.subr.mxu0 %v2658
    %2722 = vmatpush1.msra.mxu0 %v2657
    %2723 = vmatprep.subr.mxu0 %v2660
    %2724 = vmatpush1.msra.mxu0 %v2659
    %2725 = vmatprep.subr.mxu0 %v2662
    %2726 = vmatpush1.msra.mxu0 %v2661
    %2727 = vmatprep.subr.mxu0 %v2664
    %2728 = vmatpush1.msra.mxu0 %v2663
    %2729 = vmatprep.subr.mxu0 %v2666
    %2730 = vmatpush1.msra.mxu0 %v2665
    %2731 = vmatprep.subr.mxu0 %v2668
    %2732 = vmatpush1.msra.mxu0 %v2667
    %2733 = vmatprep.subr.mxu0 %v2670
    %2734 = vmatpush1.msra.mxu0 %v2669
    %2735 = vmatprep.subr.mxu0 %v2672
    %2736 = vmatpush1.msra.mxu0 %v2671
    %2737 = vmatprep.subr.mxu0 %v2674
    %2738 = vmatpush1.msra.mxu0 %v2673
    %2739 = vmatprep.subr.mxu0 %v2676
    %2740 = vmatpush1.msra.mxu0 %v2675
    %2741 = vmatprep.subr.mxu0 %v2678
    %2742 = vmatpush1.msra.mxu0 %v2677
    %2743 = vmatprep.subr.mxu0 %v2680
    %2744 = vmatpush1.msra.mxu0 %v2679
    %2745 = vmatprep.subr.mxu0 %v2682
    %2746 = vmatpush1.msra.mxu0 %v2681
    %2747 = vmatprep.subr.mxu0 %v2684
    %2748 = vmatpush1.msra.mxu0 %v2683
    %2749 = vmatprep.subr.mxu0 %v2686
    %2750 = vmatpush1.msra.mxu0 %v2685
    %2751 = vmatprep.subr.mxu0 %v2688
    %2752 = vmatpush1.msra.mxu0 %v2687
    %2753 = vmatprep.subr.mxu0 %v2690
    %2754 = vmatpush1.msra.mxu0 %v2689
    %2755 = vmatprep.subr.mxu0 %v2692
    %2756 = vmatpush1.msra.mxu0 %v2691
    %2757 = vmatprep.subr.mxu0 %v2694
    %2758 = vmatpush1.msra.mxu0 %v2693
    %2759 = vmatprep.subr.mxu0 %v2696
    %2760 = vmatpush1.msra.mxu0 %v2695
    %2761 = vmatprep.subr.mxu0 %v2698
    %2762 = vmatpush1.msra.mxu0 %v2697
    %2763 = vmatprep.subr.mxu0 %v2700
    %2764 = vmatpush1.msra.mxu0 %v2699
    %2765 = vmatprep.subr.mxu0 %v2702
    %2766 = vmatpush1.msra.mxu0 %v2701
    %2767 = vmatprep.subr.mxu0 %v2704
    %2768 = vmatpush1.msra.mxu0 %v2703
    %2769 = vmatprep.subr.mxu0 %v2706
    %2770 = vmatpush1.msra.mxu0 %v2705
    %2771 = vmatprep.subr.mxu0 %v2708
    %2772 = vmatpush1.msra.mxu0 %v2707
    %2773 = vmatprep.subr.mxu0 %v2710
    %2774 = vmatpush1.msra.mxu0 %v2709
    %2775 = vmatprep.subr.mxu0 %v2712
    %2776 = vmatpush1.msra.mxu0 %v2711
    %2777 = vmatprep.subr.mxu0 %v2714
    %2778 = vmatpush1.msra.mxu0 %v2713
    %2779 = vmatprep.mubr.f32.mxu0 %v2649
    %2780 = vmatmul.mubr.f32.gmra.mrb[0].mxu0 %v2647
    %v2781 = vpop.f32.mrb[0].mxu0
    %v2782 = vadd.f32 0.0, %v2781
    %v2783 = vpop.f32.mrb[0].mxu0
    %v2784 = vadd.f32 0.0, %v2783
    %2785 = vdwg.mxu0
    %v2786 = vadd.f32 %v2647, %v2782
    %v2787 = vadd.f32 %v2649, %v2784
    %v2788 = vld [vmem:[%s19] sm:$0x3]
    %v2790 = vlaneseq
    %v2791 = vshrl.u32 %v2790, 7
    %v2792 = vsub.s32 0, %v2791
    %v2793 = vrot.slane %v2788, %v2792
    %v2794 = vlaneseq
    %v2795 = vshrl.u32 %v2794, 7
    %v2796 = vsub.s32 1, %v2795
    %v2797 = vrot.slane %v2788, %v2796
    %v2800 = vadd.f32 %v2786, %v2793
    %v2801 = vadd.f32 %v2787, %v2797
    %2802 = vmatprep.subr.mxu0 %v261
    %2803 = vmatpush1.msra.mxu0 %v260
    %2804 = vmatprep.subr.mxu0 %v263
    %2805 = vmatpush1.msra.mxu0 %v262
    %2806 = vmatprep.subr.mxu0 %v265
    %2807 = vmatpush1.msra.mxu0 %v264
    %2808 = vmatprep.subr.mxu0 %v267
    %2809 = vmatpush1.msra.mxu0 %v266
    %2810 = vmatprep.subr.mxu0 %v269
    %2811 = vmatpush1.msra.mxu0 %v268
    %2812 = vmatprep.subr.mxu0 %v271
    %2813 = vmatpush1.msra.mxu0 %v270
    %2814 = vmatprep.subr.mxu0 %v273
    %2815 = vmatpush1.msra.mxu0 %v272
    %2816 = vmatprep.subr.mxu0 %v275
    %2817 = vmatpush1.msra.mxu0 %v274
    %2818 = vmatprep.subr.mxu0 %v277
    %2819 = vmatpush1.msra.mxu0 %v276
    %2820 = vmatprep.subr.mxu0 %v279
    %2821 = vmatpush1.msra.mxu0 %v278
    %2822 = vmatprep.subr.mxu0 %v281
    %2823 = vmatpush1.msra.mxu0 %v280
    %2824 = vmatprep.subr.mxu0 %v283
    %2825 = vmatpush1.msra.mxu0 %v282
    %2826 = vmatprep.subr.mxu0 %v285
    %2827 = vmatpush1.msra.mxu0 %v284
    %2828 = vmatprep.subr.mxu0 %v287
    %2829 = vmatpush1.msra.mxu0 %v286
    %2830 = vmatprep.subr.mxu0 %v289
    %2831 = vmatpush1.msra.mxu0 %v288
    %2832 = vmatprep.subr.mxu0 %v291
    %2833 = vmatpush1.msra.mxu0 %v290
    %2834 = vmatprep.subr.mxu0 %v293
    %2835 = vmatpush1.msra.mxu0 %v292
    %2836 = vmatprep.subr.mxu0 %v295
    %2837 = vmatpush1.msra.mxu0 %v294
    %2838 = vmatprep.subr.mxu0 %v297
    %2839 = vmatpush1.msra.mxu0 %v296
    %2840 = vmatprep.subr.mxu0 %v299
    %2841 = vmatpush1.msra.mxu0 %v298
    %2842 = vmatprep.subr.mxu0 %v301
    %2843 = vmatpush1.msra.mxu0 %v300
    %2844 = vmatprep.subr.mxu0 %v303
    %2845 = vmatpush1.msra.mxu0 %v302
    %2846 = vmatprep.subr.mxu0 %v305
    %2847 = vmatpush1.msra.mxu0 %v304
    %2848 = vmatprep.subr.mxu0 %v307
    %2849 = vmatpush1.msra.mxu0 %v306
    %2850 = vmatprep.subr.mxu0 %v309
    %2851 = vmatpush1.msra.mxu0 %v308
    %2852 = vmatprep.subr.mxu0 %v311
    %2853 = vmatpush1.msra.mxu0 %v310
    %2854 = vmatprep.subr.mxu0 %v313
    %2855 = vmatpush1.msra.mxu0 %v312
    %2856 = vmatprep.subr.mxu0 %v315
    %2857 = vmatpush1.msra.mxu0 %v314
    %2858 = vmatprep.subr.mxu0 %v317
    %2859 = vmatpush1.msra.mxu0 %v316
    %2860 = vmatprep.subr.mxu0 %v319
    %2861 = vmatpush1.msra.mxu0 %v318
    %2862 = vmatprep.subr.mxu0 %v321
    %2863 = vmatpush1.msra.mxu0 %v320
    %2864 = vmatprep.subr.mxu0 %v323
    %2865 = vmatpush1.msra.mxu0 %v322
    %2866 = vmatprep.mubr.f32.mxu0 %v2801
    %2867 = vmatmul.mubr.f32.gmra.mrb[0].mxu0 %v2800
    %v2868 = vpop.f32.mrb[0].mxu0
    %v2869 = vadd.f32 0.0, %v2868
    %v2870 = vpop.f32.mrb[0].mxu0
    %v2871 = vadd.f32 0.0, %v2870
    %2872 = vdwg.mxu0
    %v2873 = vsub.f32 %v2800, %v2869
    %v2874 = vsub.f32 %v2801, %v2871
    %v2875 = vld [vmem:[#allocation19] sm:$0xff]
    %v2876 = vld [vmem:[#allocation19 + $0x8] sm:$0xff]
    %v2877 = vld [vmem:[#allocation19 + $0x10] sm:$0xff]
    %v2878 = vld [vmem:[#allocation19 + $0x18] sm:$0xff]
    %v2879 = vld [vmem:[#allocation19 + $0x20] sm:$0xff]
    %v2880 = vld [vmem:[#allocation19 + $0x28] sm:$0xff]
    %v2881 = vld [vmem:[#allocation19 + $0x30] sm:$0xff]
    %v2882 = vld [vmem:[#allocation19 + $0x38] sm:$0xff]
    %v2883 = vld [vmem:[#allocation19 + $0x40] sm:$0xff]
    %v2884 = vld [vmem:[#allocation19 + $0x48] sm:$0xff]
    %v2885 = vld [vmem:[#allocation19 + $0x50] sm:$0xff]
    %v2886 = vld [vmem:[#allocation19 + $0x58] sm:$0xff]
    %v2887 = vld [vmem:[#allocation19 + $0x60] sm:$0xff]
    %v2888 = vld [vmem:[#allocation19 + $0x68] sm:$0xff]
    %v2889 = vld [vmem:[#allocation19 + $0x70] sm:$0xff]
    %v2890 = vld [vmem:[#allocation19 + $0x78] sm:$0xff]
    %v2891 = vld [vmem:[#allocation19 + $0x80] sm:$0xff]
    %v2892 = vld [vmem:[#allocation19 + $0x88] sm:$0xff]
    %v2893 = vld [vmem:[#allocation19 + $0x90] sm:$0xff]
    %v2894 = vld [vmem:[#allocation19 + $0x98] sm:$0xff]
    %v2895 = vld [vmem:[#allocation19 + $0xa0] sm:$0xff]
    %v2896 = vld [vmem:[#allocation19 + $0xa8] sm:$0xff]
    %v2897 = vld [vmem:[#allocation19 + $0xb0] sm:$0xff]
    %v2898 = vld [vmem:[#allocation19 + $0xb8] sm:$0xff]
    %v2899 = vld [vmem:[#allocation19 + $0xc0] sm:$0xff]
    %v2900 = vld [vmem:[#allocation19 + $0xc8] sm:$0xff]
    %v2901 = vld [vmem:[#allocation19 + $0xd0] sm:$0xff]
    %v2902 = vld [vmem:[#allocation19 + $0xd8] sm:$0xff]
    %v2903 = vld [vmem:[#allocation19 + $0xe0] sm:$0xff]
    %v2904 = vld [vmem:[#allocation19 + $0xe8] sm:$0xff]
    %v2905 = vld [vmem:[#allocation19 + $0xf0] sm:$0xff]
    %v2906 = vld [vmem:[#allocation19 + $0xf8] sm:$0xff]
    %v2907 = vld [vmem:[%s21] sm:$0x1]
    %v2909 = vlaneseq
    %v2910 = vshrl.u32 %v2909, 7
    %v2911 = vsub.s32 0, %v2910
    %v2912 = vrot.slane %v2907, %v2911
    %2914 = vmatprep.subr.mxu0 0.0
    %2915 = vmatpush1.msra.mxu0 %v2875
    %2916 = vmatprep.subr.mxu0 0.0
    %2917 = vmatpush1.msra.mxu0 %v2876
    %2918 = vmatprep.subr.mxu0 0.0
    %2919 = vmatpush1.msra.mxu0 %v2877
    %2920 = vmatprep.subr.mxu0 0.0
    %2921 = vmatpush1.msra.mxu0 %v2878
    %2922 = vmatprep.subr.mxu0 0.0
    %2923 = vmatpush1.msra.mxu0 %v2879
    %2924 = vmatprep.subr.mxu0 0.0
    %2925 = vmatpush1.msra.mxu0 %v2880
    %2926 = vmatprep.subr.mxu0 0.0
    %2927 = vmatpush1.msra.mxu0 %v2881
    %2928 = vmatprep.subr.mxu0 0.0
    %2929 = vmatpush1.msra.mxu0 %v2882
    %2930 = vmatprep.subr.mxu0 0.0
    %2931 = vmatpush1.msra.mxu0 %v2883
    %2932 = vmatprep.subr.mxu0 0.0
    %2933 = vmatpush1.msra.mxu0 %v2884
    %2934 = vmatprep.subr.mxu0 0.0
    %2935 = vmatpush1.msra.mxu0 %v2885
    %2936 = vmatprep.subr.mxu0 0.0
    %2937 = vmatpush1.msra.mxu0 %v2886
    %2938 = vmatprep.subr.mxu0 0.0
    %2939 = vmatpush1.msra.mxu0 %v2887
    %2940 = vmatprep.subr.mxu0 0.0
    %2941 = vmatpush1.msra.mxu0 %v2888
    %2942 = vmatprep.subr.mxu0 0.0
    %2943 = vmatpush1.msra.mxu0 %v2889
    %2944 = vmatprep.subr.mxu0 0.0
    %2945 = vmatpush1.msra.mxu0 %v2890
    %2946 = vmatprep.subr.mxu0 0.0
    %2947 = vmatpush1.msra.mxu0 %v2891
    %2948 = vmatprep.subr.mxu0 0.0
    %2949 = vmatpush1.msra.mxu0 %v2892
    %2950 = vmatprep.subr.mxu0 0.0
    %2951 = vmatpush1.msra.mxu0 %v2893
    %2952 = vmatprep.subr.mxu0 0.0
    %2953 = vmatpush1.msra.mxu0 %v2894
    %2954 = vmatprep.subr.mxu0 0.0
    %2955 = vmatpush1.msra.mxu0 %v2895
    %2956 = vmatprep.subr.mxu0 0.0
    %2957 = vmatpush1.msra.mxu0 %v2896
    %2958 = vmatprep.subr.mxu0 0.0
    %2959 = vmatpush1.msra.mxu0 %v2897
    %2960 = vmatprep.subr.mxu0 0.0
    %2961 = vmatpush1.msra.mxu0 %v2898
    %2962 = vmatprep.subr.mxu0 0.0
    %2963 = vmatpush1.msra.mxu0 %v2899
    %2964 = vmatprep.subr.mxu0 0.0
    %2965 = vmatpush1.msra.mxu0 %v2900
    %2966 = vmatprep.subr.mxu0 0.0
    %2967 = vmatpush1.msra.mxu0 %v2901
    %2968 = vmatprep.subr.mxu0 0.0
    %2969 = vmatpush1.msra.mxu0 %v2902
    %2970 = vmatprep.subr.mxu0 0.0
    %2971 = vmatpush1.msra.mxu0 %v2903
    %2972 = vmatprep.subr.mxu0 0.0
    %2973 = vmatpush1.msra.mxu0 %v2904
    %2974 = vmatprep.subr.mxu0 0.0
    %2975 = vmatpush1.msra.mxu0 %v2905
    %2976 = vmatprep.subr.mxu0 0.0
    %2977 = vmatpush1.msra.mxu0 %v2906
    %2978 = vmatprep.mubr.f32.mxu0 %v2874
    %2979 = vmatmul.mubr.f32.gmra.mrb[0].mxu0 %v2873
    %v2980 = vpop.f32.mrb[0].mxu0
    %v2981 = vadd.f32 %v2912, %v2980
    %v2982 = vpop.f32.mrb[0].mxu0
    %2983 = vdwg.mxu0
    %2984 = vst [vmem:[%s24] sm:$0x3] %v2981
    %v2985 = vld [vmem:[#allocation21] sm:$0xff]
    %v2986 = vld [vmem:[#allocation21 + $0x8] sm:$0xff]
    %v2987 = vld [vmem:[#allocation21 + $0x10] sm:$0xff]
    %v2988 = vld [vmem:[#allocation21 + $0x18] sm:$0xff]
    %v2989 = vld [vmem:[#allocation21 + $0x20] sm:$0xff]
    %v2990 = vld [vmem:[#allocation21 + $0x28] sm:$0xff]
    %v2991 = vld [vmem:[#allocation21 + $0x30] sm:$0xff]
    %v2992 = vld [vmem:[#allocation21 + $0x38] sm:$0xff]
    %v2993 = vld [vmem:[#allocation21 + $0x40] sm:$0xff]
    %v2994 = vld [vmem:[#allocation21 + $0x48] sm:$0xff]
    %v2995 = vld [vmem:[#allocation21 + $0x50] sm:$0xff]
    %v2996 = vld [vmem:[#allocation21 + $0x58] sm:$0xff]
    %v2997 = vld [vmem:[#allocation21 + $0x60] sm:$0xff]
    %v2998 = vld [vmem:[#allocation21 + $0x68] sm:$0xff]
    %v2999 = vld [vmem:[#allocation21 + $0x70] sm:$0xff]
    %v3000 = vld [vmem:[#allocation21 + $0x78] sm:$0xff]
    %v3001 = vld [vmem:[#allocation21 + $0x80] sm:$0xff]
    %v3002 = vld [vmem:[#allocation21 + $0x88] sm:$0xff]
    %v3003 = vld [vmem:[#allocation21 + $0x90] sm:$0xff]
    %v3004 = vld [vmem:[#allocation21 + $0x98] sm:$0xff]
    %v3005 = vld [vmem:[#allocation21 + $0xa0] sm:$0xff]
    %v3006 = vld [vmem:[#allocation21 + $0xa8] sm:$0xff]
    %v3007 = vld [vmem:[#allocation21 + $0xb0] sm:$0xff]
    %v3008 = vld [vmem:[#allocation21 + $0xb8] sm:$0xff]
    %v3009 = vld [vmem:[#allocation21 + $0xc0] sm:$0xff]
    %v3010 = vld [vmem:[#allocation21 + $0xc8] sm:$0xff]
    %v3011 = vld [vmem:[#allocation21 + $0xd0] sm:$0xff]
    %v3012 = vld [vmem:[#allocation21 + $0xd8] sm:$0xff]
    %v3013 = vld [vmem:[#allocation21 + $0xe0] sm:$0xff]
    %v3014 = vld [vmem:[#allocation21 + $0xe8] sm:$0xff]
    %v3015 = vld [vmem:[#allocation21 + $0xf0] sm:$0xff]
    %v3016 = vld [vmem:[#allocation21 + $0xf8] sm:$0xff]
    %v3017 = vld [vmem:[%s23] sm:$0x1]
    %v3019 = vlaneseq
    %v3020 = vshrl.u32 %v3019, 7
    %v3021 = vsub.s32 0, %v3020
    %v3022 = vrot.slane %v3017, %v3021
    %3024 = vmatprep.subr.mxu0 0.0
    %3025 = vmatpush1.msra.mxu0 %v2985
    %3026 = vmatprep.subr.mxu0 0.0
    %3027 = vmatpush1.msra.mxu0 %v2986
    %3028 = vmatprep.subr.mxu0 0.0
    %3029 = vmatpush1.msra.mxu0 %v2987
    %3030 = vmatprep.subr.mxu0 0.0
    %3031 = vmatpush1.msra.mxu0 %v2988
    %3032 = vmatprep.subr.mxu0 0.0
    %3033 = vmatpush1.msra.mxu0 %v2989
    %3034 = vmatprep.subr.mxu0 0.0
    %3035 = vmatpush1.msra.mxu0 %v2990
    %3036 = vmatprep.subr.mxu0 0.0
    %3037 = vmatpush1.msra.mxu0 %v2991
    %3038 = vmatprep.subr.mxu0 0.0
    %3039 = vmatpush1.msra.mxu0 %v2992
    %3040 = vmatprep.subr.mxu0 0.0
    %3041 = vmatpush1.msra.mxu0 %v2993
    %3042 = vmatprep.subr.mxu0 0.0
    %3043 = vmatpush1.msra.mxu0 %v2994
    %3044 = vmatprep.subr.mxu0 0.0
    %3045 = vmatpush1.msra.mxu0 %v2995
    %3046 = vmatprep.subr.mxu0 0.0
    %3047 = vmatpush1.msra.mxu0 %v2996
    %3048 = vmatprep.subr.mxu0 0.0
    %3049 = vmatpush1.msra.mxu0 %v2997
    %3050 = vmatprep.subr.mxu0 0.0
    %3051 = vmatpush1.msra.mxu0 %v2998
    %3052 = vmatprep.subr.mxu0 0.0
    %3053 = vmatpush1.msra.mxu0 %v2999
    %3054 = vmatprep.subr.mxu0 0.0
    %3055 = vmatpush1.msra.mxu0 %v3000
    %3056 = vmatprep.subr.mxu0 0.0
    %3057 = vmatpush1.msra.mxu0 %v3001
    %3058 = vmatprep.subr.mxu0 0.0
    %3059 = vmatpush1.msra.mxu0 %v3002
    %3060 = vmatprep.subr.mxu0 0.0
    %3061 = vmatpush1.msra.mxu0 %v3003
    %3062 = vmatprep.subr.mxu0 0.0
    %3063 = vmatpush1.msra.mxu0 %v3004
    %3064 = vmatprep.subr.mxu0 0.0
    %3065 = vmatpush1.msra.mxu0 %v3005
    %3066 = vmatprep.subr.mxu0 0.0
    %3067 = vmatpush1.msra.mxu0 %v3006
    %3068 = vmatprep.subr.mxu0 0.0
    %3069 = vmatpush1.msra.mxu0 %v3007
    %3070 = vmatprep.subr.mxu0 0.0
    %3071 = vmatpush1.msra.mxu0 %v3008
    %3072 = vmatprep.subr.mxu0 0.0
    %3073 = vmatpush1.msra.mxu0 %v3009
    %3074 = vmatprep.subr.mxu0 0.0
    %3075 = vmatpush1.msra.mxu0 %v3010
    %3076 = vmatprep.subr.mxu0 0.0
    %3077 = vmatpush1.msra.mxu0 %v3011
    %3078 = vmatprep.subr.mxu0 0.0
    %3079 = vmatpush1.msra.mxu0 %v3012
    %3080 = vmatprep.subr.mxu0 0.0
    %3081 = vmatpush1.msra.mxu0 %v3013
    %3082 = vmatprep.subr.mxu0 0.0
    %3083 = vmatpush1.msra.mxu0 %v3014
    %3084 = vmatprep.subr.mxu0 0.0
    %3085 = vmatpush1.msra.mxu0 %v3015
    %3086 = vmatprep.subr.mxu0 0.0
    %3087 = vmatpush1.msra.mxu0 %v3016
    %3088 = vmatprep.mubr.f32.mxu0 %v2531
    %3089 = vmatmul.mubr.f32.gmra.mrb[0].mxu0 %v2530
    %v3090 = vpop.f32.mrb[0].mxu0
    %v3091 = vadd.f32 %v3022, %v3090
    %v3092 = vpop.f32.mrb[0].mxu0
    %3093 = vdwg.mxu0
    %3094 = vst [vmem:[%s25] sm:$0x3] %v3091
    %v3097 = vcombine.low %v2873, %v2874
    %v3099 = vunpack.c.l.s4 1983009808
    %v3100 = vunpack.c.0.s8 %v3099
    %v3101 = vlaneseq
    %v3102 = vshrl.u32 %v3101, 7
    %v3103 = vsub.s32 %v3100, %v3102
    %v3104 = vrot.slane %v3097, %v3103
    %3106 = vst [vmem:[%s26] sm:$0xf] %v3104
    %v3109 = vcombine.low %v2869, %v2871
    %v3111 = vunpack.c.l.s4 1983009808
    %v3112 = vunpack.c.0.s8 %v3111
    %v3113 = vlaneseq
    %v3114 = vshrl.u32 %v3113, 7
    %v3115 = vsub.s32 %v3112, %v3114
    %v3116 = vrot.slane %v3109, %v3115
    %3118 = vst [vmem:[%s27] sm:$0xf] %v3116
    %v3119 = vld [vmem:[%s4] sm:$0xff]
    %v3120 = vld [vmem:[%s4 + $0x8] sm:$0xff]
    %v3121 = vld [vmem:[%s4 + $0x10] sm:$0xff]
    %v3122 = vld [vmem:[%s4 + $0x18] sm:$0xff]
    %v3123 = vld [vmem:[%s4 + $0x20] sm:$0xff]
    %v3124 = vld [vmem:[%s4 + $0x28] sm:$0xff]
    %v3125 = vld [vmem:[%s4 + $0x30] sm:$0xff]
    %v3126 = vld [vmem:[%s4 + $0x38] sm:$0xff]
    %v3127 = vld [vmem:[%s4 + $0x40] sm:$0xff]
    %v3128 = vld [vmem:[%s4 + $0x48] sm:$0xff]
    %v3129 = vld [vmem:[%s4 + $0x50] sm:$0xff]
    %v3130 = vld [vmem:[%s4 + $0x58] sm:$0xff]
    %v3131 = vld [vmem:[%s4 + $0x60] sm:$0xff]
    %v3132 = vld [vmem:[%s4 + $0x68] sm:$0xff]
    %v3133 = vld [vmem:[%s4 + $0x70] sm:$0xff]
    %v3134 = vld [vmem:[%s4 + $0x78] sm:$0xff]
    %v3135 = vld [vmem:[%s4 + $0x80] sm:$0xff]
    %v3136 = vld [vmem:[%s4 + $0x88] sm:$0xff]
    %v3137 = vld [vmem:[%s4 + $0x90] sm:$0xff]
    %v3138 = vld [vmem:[%s4 + $0x98] sm:$0xff]
    %v3139 = vld [vmem:[%s4 + $0xa0] sm:$0xff]
    %v3140 = vld [vmem:[%s4 + $0xa8] sm:$0xff]
    %v3141 = vld [vmem:[%s4 + $0xb0] sm:$0xff]
    %v3142 = vld [vmem:[%s4 + $0xb8] sm:$0xff]
    %3143 = vmatprep.subr.mxu0 0.0
    %3144 = vmatpush1.msra.mxu0 %v3119
    %3145 = vmatprep.subr.mxu0 0.0
    %3146 = vmatpush1.msra.mxu0 %v3120
    %3147 = vmatprep.subr.mxu0 0.0
    %3148 = vmatpush1.msra.mxu0 %v3121
    %3149 = vmatprep.subr.mxu0 0.0
    %3150 = vmatpush1.msra.mxu0 %v3122
    %3151 = vmatprep.subr.mxu0 0.0
    %3152 = vmatpush1.msra.mxu0 %v3123
    %3153 = vmatprep.subr.mxu0 0.0
    %3154 = vmatpush1.msra.mxu0 %v3124
    %3155 = vmatprep.subr.mxu0 0.0
    %3156 = vmatpush1.msra.mxu0 %v3125
    %3157 = vmatprep.subr.mxu0 0.0
    %3158 = vmatpush1.msra.mxu0 %v3126
    %3159 = vmatprep.subr.mxu0 0.0
    %3160 = vmatpush1.msra.mxu0 %v3127
    %3161 = vmatprep.subr.mxu0 0.0
    %3162 = vmatpush1.msra.mxu0 %v3128
    %3163 = vmatprep.subr.mxu0 0.0
    %3164 = vmatpush1.msra.mxu0 %v3129
    %3165 = vmatprep.subr.mxu0 0.0
    %3166 = vmatpush1.msra.mxu0 %v3130
    %3167 = vmatprep.subr.mxu0 0.0
    %3168 = vmatpush1.msra.mxu0 %v3131
    %3169 = vmatprep.subr.mxu0 0.0
    %3170 = vmatpush1.msra.mxu0 %v3132
    %3171 = vmatprep.subr.mxu0 0.0
    %3172 = vmatpush1.msra.mxu0 %v3133
    %3173 = vmatprep.subr.mxu0 0.0
    %3174 = vmatpush1.msra.mxu0 %v3134
    %3175 = vmatprep.subr.mxu0 0.0
    %3176 = vmatpush1.msra.mxu0 %v3135
    %3177 = vmatprep.subr.mxu0 0.0
    %3178 = vmatpush1.msra.mxu0 %v3136
    %3179 = vmatprep.subr.mxu0 0.0
    %3180 = vmatpush1.msra.mxu0 %v3137
    %3181 = vmatprep.subr.mxu0 0.0
    %3182 = vmatpush1.msra.mxu0 %v3138
    %3183 = vmatprep.subr.mxu0 0.0
    %3184 = vmatpush1.msra.mxu0 %v3139
    %3185 = vmatprep.subr.mxu0 0.0
    %3186 = vmatpush1.msra.mxu0 %v3140
    %3187 = vmatprep.subr.mxu0 0.0
    %3188 = vmatpush1.msra.mxu0 %v3141
    %3189 = vmatprep.subr.mxu0 0.0
    %3190 = vmatpush1.msra.mxu0 %v3142
    %3191 = vmatprep.subr.mxu0 0.0
    %3192 = vmatpush1.msra.mxu0 0.0
    %3193 = vmatprep.subr.mxu0 0.0
    %3194 = vmatpush1.msra.mxu0 0.0
    %3195 = vmatprep.subr.mxu0 0.0
    %3196 = vmatpush1.msra.mxu0 0.0
    %3197 = vmatprep.subr.mxu0 0.0
    %3198 = vmatpush1.msra.mxu0 0.0
    %3199 = vmatprep.subr.mxu0 0.0
    %3200 = vmatpush1.msra.mxu0 0.0
    %3201 = vmatprep.subr.mxu0 0.0
    %3202 = vmatpush1.msra.mxu0 0.0
    %3203 = vmatprep.subr.mxu0 0.0
    %3204 = vmatpush1.msra.mxu0 0.0
    %3205 = vmatprep.subr.mxu0 0.0
    %3206 = vmatpush1.msra.mxu0 0.0
    %3207 = vmatprep.mubr.f32.mxu0 %v458
    %3208 = vmatmul.mubr.f32.gmra.mrb[0].mxu0 %v454
    %v3209 = vpop.f32.mrb[0].mxu0
    %v3210 = vadd.f32 0.0, %v3209
    %v3211 = vpop.f32.mrb[0].mxu0
    %3212 = vdwg.mxu0
    %vm3213 = vcmask 517120
    %3214 = vst.msk [vmem:[%s28] sm:$0x3] %vm3213, %v3210
    // Predicated region
    $region150: #{fedformer_forward.2} parent=1 // pred_check
      _
    $region151: #{fedformer_forward.2} parent=1 // pred_check_branch
      %3216 = sbr.rel (0) target = $region153
    $region152: #{fedformer_forward.2} parent=1 // pred_region
      _
    $region153: #{fedformer_forward.2} parent=1 // pred_fallthru
      _
    // Predicated region
    $region154: #{fedformer_forward.2} parent=1 // pred_check
      _
    $region155: #{fedformer_forward.2} parent=1 // pred_check_branch
      %3218 = sbr.rel (0) target = $region157
    $region156: #{fedformer_forward.2} parent=1 // pred_region
      _
    $region157: #{fedformer_forward.2} parent=1 // pred_fallthru
      _
    // Predicated region
    $region158: #{fedformer_forward.2} parent=1 // pred_check
      _
    $region159: #{fedformer_forward.2} parent=1 // pred_check_branch
      %3220 = sbr.rel (0) target = $region161
    $region160: #{fedformer_forward.2} parent=1 // pred_region
      _
    $region161: #{fedformer_forward.2} parent=1 // pred_fallthru
      _
    // Predicated region
    $region162: #{fedformer_forward.2} parent=1 // pred_check
      _
    $region163: #{fedformer_forward.2} parent=1 // pred_check_branch
      %3222 = sbr.rel (0) target = $region165
    $region164: #{fedformer_forward.2} parent=1 // pred_region
      _
    $region165: #{fedformer_forward.2} parent=1 // pred_fallthru
      _
    // Predicated region
    $region166: #{fedformer_forward.2} parent=1 // pred_check
      _
    $region167: #{fedformer_forward.2} parent=1 // pred_check_branch
      %3224 = sbr.rel (0) target = $region169
    $region168: #{fedformer_forward.2} parent=1 // pred_region
      _
    $region169: #{fedformer_forward.2} parent=1 // pred_fallthru
      _
    // Predicated region
    $region170: #{fedformer_forward.2} parent=1 // pred_check
      _
    $region171: #{fedformer_forward.2} parent=1 // pred_check_branch
      %3226 = sbr.rel (0) target = $region173
    $region172: #{fedformer_forward.2} parent=1 // pred_region
      _
    $region173: #{fedformer_forward.2} parent=1 // pred_fallthru
      _
    // Predicated region
    $region174: #{fedformer_forward.2} parent=1 // pred_check
      _
    $region175: #{fedformer_forward.2} parent=1 // pred_check_branch
      %3228 = sbr.rel (0) target = $region177
    $region176: #{fedformer_forward.2} parent=1 // pred_region
      _
    $region177: #{fedformer_forward.2} parent=1 // pred_fallthru
      _
    // Predicated region
    $region178: #{fedformer_forward.2} parent=1 // pred_check
      _
    $region179: #{fedformer_forward.2} parent=1 // pred_check_branch
      %3230 = sbr.rel (0) target = $region181
    $region180: #{fedformer_forward.2} parent=1 // pred_region
      _
    $region181: #{fedformer_forward.2} parent=1 // pred_fallthru
      _
    // Predicated region
    $region182: #{fedformer_forward.2} parent=1 // pred_check
      _
    $region183: #{fedformer_forward.2} parent=1 // pred_check_branch
      %3232 = sbr.rel (0) target = $region185
    $region184: #{fedformer_forward.2} parent=1 // pred_region
      _
    $region185: #{fedformer_forward.2} parent=1 // pred_fallthru
      _
    // Predicated region
    $region186: #{fedformer_forward.2} parent=1 // pred_check
      _
    $region187: #{fedformer_forward.2} parent=1 // pred_check_branch
      %3234 = sbr.rel (0) target = $region189
    $region188: #{fedformer_forward.2} parent=1 // pred_region
      _
    $region189: #{fedformer_forward.2} parent=1 // pred_fallthru
      _
    %3235 = vsyncpa [#allocation3], 1
    %3236 = vsyncpa [#allocation5], 1
    %3237 = vsyncpa [#allocation8], 1
    %3238 = vsyncpa [#allocation11], 1
    %3239 = vsyncpa [#allocation14], 1
    %3240 = vsyncpa [#allocation17], 1
    %3241 = vsyncpa [#allocation20], 1

</llo_original>
